<compile_context>
chip_gen: v7x
topology: tpu7x:2x2x1
jax: 0.10.0
libtpu: 0.0.40
codegen_flags: <defaults>
</compile_context>

<pallas_src>
import functools

import numpy as np
import jax
import jax.numpy as jnp
from jax.experimental import pallas as pl
from jax.experimental.pallas import tpu as pltpu


# ----------------------------------------------------------------------------
# Walker alias sampler (host side, deterministic) -- produces the negative
# sample token ids, mirroring the reference implementation.
# ----------------------------------------------------------------------------
class WalkerAlias:
    def __init__(self, probs):
        prob = np.array(probs, np.float32)
        prob /= np.sum(prob)
        threshold = np.ndarray(len(probs), np.float32)
        values = np.ndarray(len(probs) * 2, np.int32)
        il, ir = 0, 0
        pairs = sorted(zip(prob.tolist(), range(len(probs))))
        for p_, i in pairs:
            p = p_ * len(probs)
            while p > 1 and ir < il:
                values[ir * 2 + 1] = i
                p -= 1.0 - threshold[ir]
                ir += 1
            threshold[il] = p
            values[il * 2] = i
            il += 1
        for i in range(ir, len(probs)):
            values[i * 2 + 1] = 0
        self.threshold = threshold
        self.values = values

    def sample(self, shape, rng):
        ps = rng.uniform(0.0, 1.0, shape)
        pb = ps * len(self.threshold)
        index = pb.astype(np.int32)
        left_right = (self.threshold[index] < pb - index).astype(np.int32)
        return self.values[index * 2 + left_right]


# ----------------------------------------------------------------------------
# Fused Context2vec kernel: BiLSTM(2 layers) + context + MLP + NS loss
# ----------------------------------------------------------------------------
def context2vec_kernel(x_ref, wih0_ref, whh0_ref, b0_ref,
                       wih1_ref, whh1_ref, b1_ref,
                       w1_ref, bm1_ref, w2_ref, bm2_ref,
                       wns_ref, ids_ref, o_ref,
                       xg_ref, y0_ref, y1_ref, ctx_ref,
                       *, L, Bp, H, P, K):
    """Shapes (toy sizes in parentheses):
      x_ref   : (L*Bp, Hp)     time-major [l2r_emb | r2l_emb | 0]   (56, 128)
      wih*    : (Hp, 4*Hp)     padded block-diagonal input->gate weights
      whh*    : (Hp, 4*Hp)     padded block-diagonal hidden->gate weights
      b*      : (1, 4*Hp)      combined (b_ih + b_hh) bias, pad cols = 0
      w1/w2   : (Hp, Hp)       zero-padded MLP weights, bm1/bm2 (1, Hp)
      wns_ref : (Hp, Vp)       zero-padded W_ns.T (output embedding table)
      ids_ref : (Np, K+1) i32  col 0 = positive id, 1..K = negative ids,
                               -1 entries = padding (contribute exactly 0)
      o_ref   : (1, 1)         scalar loss
      xg_ref  : (L*Bp, 4*Hp)   scratch: hoisted per-timestep input gates
      y0/y1   : (L*Bp, Hp)     scratch: layer-0 / layer-1 hidden states
      ctx_ref : (Np, Hp)       scratch: MLP input (bidir context, flip folded)
    """
    Hp = y0_ref.shape[1]
    Np = ctx_ref.shape[0]
    Vp = wns_ref.shape[1]

    def run_layer(in_ref, wih_ref, whh_ref, b_ref, res_ref):
        wih = wih_ref[...]
        whh = whh_ref[...]            # loaded once: loop-invariant MXU RHS
        b = b_ref[...]
        # Hoisted input projection for ALL timesteps: one MXU matmul.
        xg_ref[...] = jnp.dot(in_ref[...], wih,
                              preferred_element_type=jnp.float32) + b
        h = jnp.zeros((Bp, Hp), jnp.float32)
        c = jnp.zeros((Bp, Hp), jnp.float32)
        # TODO(synk): at production L switch to lax.fori_loop(..., unroll=k)
        #             with pl.ds/pl.multiple_of slices to bound live ranges,
        #             and drive whh weight-stationary via
        #             pltpu.matmul_push_rhs / matmul_acc_lhs / matmul_pop.
        # TODO(synk): at production H use a direction-batched contraction
        #             instead of the block-diagonal (50% zero) combined
        #             weights, and cast matmul operands to bf16 on v6e/v7x.
        for t in range(L):
            g = xg_ref[t * Bp:(t + 1) * Bp, :] + jnp.dot(
                h, whh, preferred_element_type=jnp.float32)      # (Bp, 4Hp)
            # Gate layout [i | f | o | g]: one sigmoid over a contiguous 3*Hp
            # slab, one tanh over the trailing Hp slab (both directions).
            sg = jax.nn.sigmoid(g[:, :3 * Hp])
            gg = jnp.tanh(g[:, 3 * Hp:])
            c = sg[:, Hp:2 * Hp] * c + sg[:, :Hp] * gg
            h = sg[:, 2 * Hp:3 * Hp] * jnp.tanh(c)
            res_ref[t * Bp:(t + 1) * Bp, :] = h    # full (8,128) unmasked vst

    run_layer(x_ref, wih0_ref, whh0_ref, b0_ref, y0_ref)      # layer 0
    run_layer(y0_ref, wih1_ref, whh1_ref, b1_ref, y1_ref)     # layer 1

    # Context assembly: position p = [l2r hidden at t=p | r2l hidden at
    # t=P-1-p | 0].  The r2l time flip is folded here with a lane select so
    # every store stays a full (8, 128) tile (no XLA flip/concat outside).
    lane = jax.lax.broadcasted_iota(jnp.int32, (Bp, Hp), 1)
    take_fwd = lane < H
    for p in range(P):
        fwd = y1_ref[p * Bp:(p + 1) * Bp, :]
        bwd = y1_ref[(P - 1 - p) * Bp:(P - p) * Bp, :]
        ctx_ref[p * Bp:(p + 1) * Bp, :] = jnp.where(take_fwd, fwd, bwd)

    # MLP: Linear -> ReLU -> Linear (zero-padded weights keep pad lanes 0).
    # TODO(synk): dropout treated as identity (eval-mode semantics).
    ctx = ctx_ref[...]
    h1 = jnp.maximum(
        jnp.dot(ctx, w1_ref[...], preferred_element_type=jnp.float32)
        + bm1_ref[...], 0.0)
    cv = jnp.dot(h1, w2_ref[...],
                 preferred_element_type=jnp.float32) + bm2_ref[...]  # (Np, Hp)

    # Negative-sampling loss: proj[n, v] = ctx_vec[n] . W_ns[v] for every
    # vocab column via one MXU matmul (W_ns resident in VMEM); pos/neg terms
    # are selected with in-kernel one-hot / count masks built from the ids
    # (-1 id entries never match -> padded rows / slots contribute 0).
    # TODO(synk): at production vocab replace the all-vocab projection with a
    #             scalar-prefetch row gather of W_ns + 'nkh,nh->nk' einsum.
    proj = jnp.dot(cv, wns_ref[...],
                   preferred_element_type=jnp.float32)               # (Np, Vp)
    ids = ids_ref[...]                                               # (Np, K+1)
    vlane = jax.lax.broadcasted_iota(jnp.int32, (Np, Vp), 1)
    pos_mask = (vlane == ids[:, 0:1]).astype(jnp.float32)
    neg_cnt = (vlane == ids[:, 1:2]).astype(jnp.float32)
    for k in range(2, K + 1):
        neg_cnt = neg_cnt + (vlane == ids[:, k:k + 1]).astype(jnp.float32)
    loss = -jnp.sum(jax.nn.log_sigmoid(proj) * pos_mask
                    + jax.nn.log_sigmoid(-proj) * neg_cnt)
    o_ref[...] = jnp.reshape(loss, (1, 1))


# ----------------------------------------------------------------------------
# Pallas wrapper
# ----------------------------------------------------------------------------
_VMEM = pl.BlockSpec(memory_space=pltpu.MemorySpace.VMEM)

# TODO(synk): at production sizes this whole-array-resident, gridless call
# must become gridded (BlockSpecs over N rows / time chunks, loss kept as a
# pl.when-initialized accumulator over an 'arbitrary' axis, and a 'parallel'
# axis so v7x's second TensorCore is used).  At these toy shapes everything
# fits trivially in VMEM on one core.


def context2vec_pallas(x2d, lstm, mlp, wns_t, ids2d, *, L, Bp, H, P, K):
    Hp = x2d.shape[1]
    Np = P * Bp
    return pl.pallas_call(
        functools.partial(context2vec_kernel, L=L, Bp=Bp, H=H, P=P, K=K),
        out_shape=jax.ShapeDtypeStruct((1, 1), jnp.float32),
        in_specs=[_VMEM] * 13,
        out_specs=_VMEM,
        scratch_shapes=[
            pltpu.VMEM((L * Bp, 4 * Hp), jnp.float32),   # hoisted input gates
            pltpu.VMEM((L * Bp, Hp), jnp.float32),       # layer-0 hidden
            pltpu.VMEM((L * Bp, Hp), jnp.float32),       # layer-1 hidden
            pltpu.VMEM((Np, Hp), jnp.float32),           # MLP context input
        ],
        compiler_params=pltpu.CompilerParams(
            vmem_limit_bytes=32 * 1024 * 1024),
    )(x2d, *lstm, *mlp, wns_t, ids2d)


# ----------------------------------------------------------------------------
# Parameter construction (deterministic, mirrors module __init__ shapes)
# ----------------------------------------------------------------------------
def uniform(key, shape, bound):
    return jax.random.uniform(key, shape, jnp.float32, -bound, bound)


def make_embedding(key, vocab_size, dim):
    # init_embeddings: uniform(-2/(dim+1), 2/(dim+1)) over the full table
    return uniform(key, (vocab_size, dim), 2.0 / (dim + 1))


def make_lstm_layer(key, in_size, hidden_size):
    """One PyTorch LSTM layer (one direction): W_ih (4H,in), W_hh (4H,H), b."""
    k = 1.0 / np.sqrt(hidden_size)
    ks = jax.random.split(key, 4)
    wih = uniform(ks[0], (4 * hidden_size, in_size), k)
    whh = uniform(ks[1], (4 * hidden_size, hidden_size), k)
    b = uniform(ks[2], (4 * hidden_size,), k) + uniform(ks[3], (4 * hidden_size,), k)
    return wih, whh, b


def combine_bidir_lstm_layer(dir_l, dir_r, in_size, H, Hp):
    """Combine both directions' PyTorch-layout params into one block-diagonal,
    lane-padded weight set.

    Input rows : [l2r features | r2l features | 0 ... pad to Hp]
    Gate cols  : 4 blocks [i | f | o | g], each Hp wide = [l2r H | r2l H | 0].
    The zero pad columns/bias keep the padded state lanes exactly 0.0."""
    wih_l, whh_l, b_l = (np.asarray(a) for a in dir_l)
    wih_r, whh_r, b_r = (np.asarray(a) for a in dir_r)
    G = 4 * Hp
    wih_c = np.zeros((Hp, G), np.float32)
    whh_c = np.zeros((Hp, G), np.float32)
    b_c = np.zeros((G,), np.float32)
    # PyTorch gate row-block order is (i, f, g, o); emit columns as (i, f, o, g).
    for blk, gate in enumerate((0, 1, 3, 2)):
        col = blk * Hp
        rows = slice(gate * H, (gate + 1) * H)
        wih_c[:in_size, col:col + H] = wih_l[rows].T
        wih_c[in_size:2 * in_size, col + H:col + 2 * H] = wih_r[rows].T
        whh_c[:H, col:col + H] = whh_l[rows].T
        whh_c[H:2 * H, col + H:col + 2 * H] = whh_r[rows].T
        b_c[col:col + H] = b_l[rows]
        b_c[col + H:col + 2 * H] = b_r[rows]
    return (jnp.asarray(wih_c), jnp.asarray(whh_c),
            jnp.asarray(b_c).reshape(1, -1))


def make_linear(key, in_size, out_size):
    k = 1.0 / np.sqrt(in_size)
    kw, kb = jax.random.split(key)
    w = uniform(kw, (out_size, in_size), k)
    b = uniform(kb, (out_size,), k)
    return w.T, b.reshape(1, -1)


def pad_linear(w_t, b, hp_in, hp_out):
    """Zero-pad a (in, out) weight / (1, out) bias to lane-dense (Hp, Hp)."""
    w_t = np.asarray(w_t)
    b = np.asarray(b).reshape(-1)
    wp = np.zeros((hp_in, hp_out), np.float32)
    wp[:w_t.shape[0], :w_t.shape[1]] = w_t
    bp = np.zeros((1, hp_out), np.float32)
    bp[0, :b.shape[0]] = b
    return jnp.asarray(wp), jnp.asarray(bp)


# ----------------------------------------------------------------------------
# Context2vec forward (training path -> scalar loss)
# ----------------------------------------------------------------------------
def context2vec_forward(X, y, params, neg_samples, hidden_size, *, Bp=8, Hp=128):
    l2r_table, r2l_table, lstm, mlp, wns_t = params
    B, S = X.shape
    E = l2r_table.shape[1]
    H = hidden_size
    L = S - 1            # LSTM timesteps
    P = S - 2            # target positions per sequence
    K = neg_samples.shape[-1]
    assert B <= Bp and 2 * E <= Hp and 2 * H <= Hp

    X_cut = X[:, :-1]                 # (B, S-1)
    X_rev = X[:, ::-1][:, :-1]        # flip(1)[:, :-1]

    # Time-major embedding gathers (XLA gathers); padded batch rows and pad
    # lanes are zero, so the padded lanes of the LSTM state stay exactly 0.
    l2r_emb = l2r_table[X_cut.T]      # (L, B, E)
    r2l_emb = r2l_table[X_rev.T]      # (L, B, E)
    x3 = jnp.concatenate([l2r_emb, r2l_emb], axis=2)            # (L, B, 2E)
    x3 = jnp.pad(x3, ((0, 0), (0, Bp - B), (0, Hp - 2 * E)))    # zero pad
    x2d = x3.reshape(L * Bp, Hp)

    # Positive + negative token ids, row order (p, b); padded rows = -1 so
    # they are masked out of the loss inside the kernel.
    ids3 = jnp.concatenate(
        [y.T[:, :, None], jnp.transpose(neg_samples, (1, 0, 2))], axis=2)
    ids3 = jnp.pad(ids3, ((0, 0), (0, Bp - B), (0, 0)), constant_values=-1)
    ids2d = ids3.reshape(P * Bp, K + 1).astype(jnp.int32)

    loss = context2vec_pallas(x2d, lstm, mlp, wns_t, ids2d,
                              L=L, Bp=Bp, H=H, P=P, K=K)
    return loss[0, 0]


# ----------------------------------------------------------------------------
# Main
# ----------------------------------------------------------------------------
if __name__ == "__main__":
    vocab_size = 50
    word_embed_size = 32
    hidden_size = 32
    batch = 2
    seq_len = 8
    num_neg = 10
    power = 0.75
    Bp, Hp, Vp = 8, 128, 128          # sublane / lane padding targets

    root = jax.random.PRNGKey(0)
    keys = jax.random.split(root, 12)

    # Inputs
    X = jax.random.randint(keys[0], (batch, seq_len), 0, vocab_size, dtype=jnp.int32)
    y = jax.random.randint(keys[1], (batch, seq_len - 2), 0, vocab_size, dtype=jnp.int32)

    # Parameters (deterministic synthetic init, PyTorch-equivalent shapes)
    l2r_table = make_embedding(keys[2], vocab_size, word_embed_size)
    r2l_table = make_embedding(keys[3], vocab_size, word_embed_size)

    l2r_layer0 = make_lstm_layer(keys[4], word_embed_size, hidden_size)
    l2r_layer1 = make_lstm_layer(keys[5], hidden_size, hidden_size)
    r2l_layer0 = make_lstm_layer(keys[6], word_embed_size, hidden_size)
    r2l_layer1 = make_lstm_layer(keys[7], hidden_size, hidden_size)
    layer0 = combine_bidir_lstm_layer(l2r_layer0, r2l_layer0,
                                      word_embed_size, hidden_size, Hp)
    layer1 = combine_bidir_lstm_layer(l2r_layer1, r2l_layer1,
                                      hidden_size, hidden_size, Hp)
    lstm = (*layer0, *layer1)          # wih0, whh0, b0, wih1, whh1, b1

    w1_t, b1 = make_linear(keys[8], 2 * hidden_size, 2 * hidden_size)
    w2_t, b2 = make_linear(keys[9], 2 * hidden_size, hidden_size)
    w1p, b1p = pad_linear(w1_t, b1, Hp, Hp)
    w2p, b2p = pad_linear(w2_t, b2, Hp, Hp)
    mlp = (w1p, b1p, w2p, b2p)

    W_ns = make_embedding(keys[10], vocab_size, hidden_size)   # NegativeSampling.W
    wns_t = np.zeros((Hp, Vp), np.float32)
    wns_t[:hidden_size, :vocab_size] = np.asarray(W_ns).T
    wns_t = jnp.asarray(wns_t)

    # Negative sampling (host side, deterministic)
    counter = list(range(1, vocab_size + 1))
    sampler = WalkerAlias(np.power(np.array(counter, np.float64), power))
    rng = np.random.default_rng(0)
    neg_samples = jnp.asarray(
        sampler.sample((batch, seq_len - 2, num_neg), rng), dtype=jnp.int32)

    params = (l2r_table, r2l_table, lstm, mlp, wns_t)

    loss = context2vec_forward(X, y, params, neg_samples, hidden_size,
                               Bp=Bp, Hp=Hp)
    loss = jax.block_until_ready(loss)
    assert np.isfinite(float(loss))
    print("KERNEL_OK")
</pallas_src>

<mosaic_0001>
module attributes {stable_mosaic.version = 11 : i64} {
  func.func @context2vec_kernel(%arg0: memref<56x128xf32, #tpu.memory_space<vmem>>, %arg1: memref<128x512xf32, #tpu.memory_space<vmem>>, %arg2: memref<128x512xf32, #tpu.memory_space<vmem>>, %arg3: memref<1x512xf32, #tpu.memory_space<vmem>>, %arg4: memref<128x512xf32, #tpu.memory_space<vmem>>, %arg5: memref<128x512xf32, #tpu.memory_space<vmem>>, %arg6: memref<1x512xf32, #tpu.memory_space<vmem>>, %arg7: memref<128x128xf32, #tpu.memory_space<vmem>>, %arg8: memref<1x128xf32, #tpu.memory_space<vmem>>, %arg9: memref<128x128xf32, #tpu.memory_space<vmem>>, %arg10: memref<1x128xf32, #tpu.memory_space<vmem>>, %arg11: memref<128x128xf32, #tpu.memory_space<vmem>>, %arg12: memref<48x11xi32, #tpu.memory_space<vmem>>, %arg13: memref<1x1xf32, #tpu.memory_space<vmem>>, %arg14: memref<56x512xf32, #tpu.memory_space<vmem>>, %arg15: memref<56x128xf32, #tpu.memory_space<vmem>>, %arg16: memref<56x128xf32, #tpu.memory_space<vmem>>, %arg17: memref<48x128xf32, #tpu.memory_space<vmem>>) attributes {dimension_semantics = [], scalar_prefetch = 0 : i64, scratch_operands = 4 : i64, tpu.core_type = #tpu.core_type<tc>} {
    %c0 = arith.constant 0 : index
    %c0_0 = arith.constant 0 : index
    %0 = vector.load %arg1[%c0, %c0_0] : memref<128x512xf32, #tpu.memory_space<vmem>>, vector<128x512xf32>
    %c0_1 = arith.constant 0 : index
    %c0_2 = arith.constant 0 : index
    %1 = vector.load %arg2[%c0_1, %c0_2] : memref<128x512xf32, #tpu.memory_space<vmem>>, vector<128x512xf32>
    %c0_3 = arith.constant 0 : index
    %c0_4 = arith.constant 0 : index
    %2 = vector.load %arg3[%c0_3, %c0_4] : memref<1x512xf32, #tpu.memory_space<vmem>>, vector<1x512xf32>
    %c0_5 = arith.constant 0 : index
    %c0_6 = arith.constant 0 : index
    %3 = vector.load %arg0[%c0_5, %c0_6] : memref<56x128xf32, #tpu.memory_space<vmem>>, vector<56x128xf32>
    %cst = arith.constant dense<0.000000e+00> : vector<56x512xf32>
    %4 = tpu.matmul %3, %0, %cst {dimension_numbers = #tpu.dot_dimension_numbers<[1], [0], [0], [1], [0, 0, 1, 1], [], []>} : vector<56x128xf32>, vector<128x512xf32>, vector<56x512xf32> -> vector<56x512xf32>
    %5 = vector.broadcast %2 : vector<1x512xf32> to vector<56x512xf32>
    %6 = arith.addf %4, %5 : vector<56x512xf32>
    %c0_7 = arith.constant 0 : index
    %c0_8 = arith.constant 0 : index
    %7 = vector.load %arg14[%c0_7, %c0_8] : memref<56x512xf32, #tpu.memory_space<vmem>>, vector<56x512xf32>
    tpu.vector_store %arg14[%c0_7, %c0_8], %6 {strides = array<i32>} : memref<56x512xf32, #tpu.memory_space<vmem>>, vector<56x512xf32>,
    %cst_9 = arith.constant 0.000000e+00 : f32
    %8 = vector.broadcast %cst_9 : f32 to vector<8x128xf32>
    %cst_10 = arith.constant 0.000000e+00 : f32
    %9 = vector.broadcast %cst_10 : f32 to vector<8x128xf32>
    %c0_11 = arith.constant 0 : index
    %c0_12 = arith.constant 0 : index
    %10 = vector.load %arg14[%c0_11, %c0_12] : memref<56x512xf32, #tpu.memory_space<vmem>>, vector<8x512xf32>
    %cst_13 = arith.constant dense<0.000000e+00> : vector<8x512xf32>
    %11 = tpu.matmul %8, %1, %cst_13 {dimension_numbers = #tpu.dot_dimension_numbers<[1], [0], [0], [1], [0, 0, 1, 1], [], []>} : vector<8x128xf32>, vector<128x512xf32>, vector<8x512xf32> -> vector<8x512xf32>
    %12 = arith.addf %10, %11 : vector<8x512xf32>
    %13 = vector.extract_strided_slice %12 {offsets = [0, 0], sizes = [8, 384], strides = [1, 1]} : vector<8x512xf32> to vector<8x384xf32>
    %14 = arith.negf %13 : vector<8x384xf32>
    %15 = math.exp %14 : vector<8x384xf32>
    %cst_14 = arith.constant 1.000000e+00 : f32
    %16 = vector.broadcast %cst_14 : f32 to vector<8x384xf32>
    %17 = arith.addf %16, %15 : vector<8x384xf32>
    %18 = arith.divf %16, %17 : vector<8x384xf32>
    %19 = vector.extract_strided_slice %12 {offsets = [0, 384], sizes = [8, 128], strides = [1, 1]} : vector<8x512xf32> to vector<8x128xf32>
    %20 = math.tanh %19 : vector<8x128xf32>
    %21 = vector.extract_strided_slice %18 {offsets = [0, 128], sizes = [8, 128], strides = [1, 1]} : vector<8x384xf32> to vector<8x128xf32>
    %22 = arith.mulf %21, %9 : vector<8x128xf32>
    %23 = vector.extract_strided_slice %18 {offsets = [0, 0], sizes = [8, 128], strides = [1, 1]} : vector<8x384xf32> to vector<8x128xf32>
    %24 = arith.mulf %23, %20 : vector<8x128xf32>
    %25 = arith.addf %22, %24 : vector<8x128xf32>
    %26 = vector.extract_strided_slice %18 {offsets = [0, 256], sizes = [8, 128], strides = [1, 1]} : vector<8x384xf32> to vector<8x128xf32>
    %27 = math.tanh %25 : vector<8x128xf32>
    %28 = arith.mulf %26, %27 : vector<8x128xf32>
    %c0_15 = arith.constant 0 : index
    %c0_16 = arith.constant 0 : index
    %29 = vector.load %arg15[%c0_15, %c0_16] : memref<56x128xf32, #tpu.memory_space<vmem>>, vector<8x128xf32>
    tpu.vector_store %arg15[%c0_15, %c0_16], %28 {strides = array<i32>} : memref<56x128xf32, #tpu.memory_space<vmem>>, vector<8x128xf32>,
    %c8 = arith.constant 8 : index
    %c0_17 = arith.constant 0 : index
    %30 = vector.load %arg14[%c8, %c0_17] : memref<56x512xf32, #tpu.memory_space<vmem>>, vector<8x512xf32>
    %cst_18 = arith.constant dense<0.000000e+00> : vector<8x512xf32>
    %31 = tpu.matmul %28, %1, %cst_18 {dimension_numbers = #tpu.dot_dimension_numbers<[1], [0], [0], [1], [0, 0, 1, 1], [], []>} : vector<8x128xf32>, vector<128x512xf32>, vector<8x512xf32> -> vector<8x512xf32>
    %32 = arith.addf %30, %31 : vector<8x512xf32>
    %33 = vector.extract_strided_slice %32 {offsets = [0, 0], sizes = [8, 384], strides = [1, 1]} : vector<8x512xf32> to vector<8x384xf32>
    %34 = arith.negf %33 : vector<8x384xf32>
    %35 = math.exp %34 : vector<8x384xf32>
    %cst_19 = arith.constant 1.000000e+00 : f32
    %36 = vector.broadcast %cst_19 : f32 to vector<8x384xf32>
    %37 = arith.addf %36, %35 : vector<8x384xf32>
    %38 = arith.divf %36, %37 : vector<8x384xf32>
    %39 = vector.extract_strided_slice %32 {offsets = [0, 384], sizes = [8, 128], strides = [1, 1]} : vector<8x512xf32> to vector<8x128xf32>
    %40 = math.tanh %39 : vector<8x128xf32>
    %41 = vector.extract_strided_slice %38 {offsets = [0, 128], sizes = [8, 128], strides = [1, 1]} : vector<8x384xf32> to vector<8x128xf32>
    %42 = arith.mulf %41, %25 : vector<8x128xf32>
    %43 = vector.extract_strided_slice %38 {offsets = [0, 0], sizes = [8, 128], strides = [1, 1]} : vector<8x384xf32> to vector<8x128xf32>
    %44 = arith.mulf %43, %40 : vector<8x128xf32>
    %45 = arith.addf %42, %44 : vector<8x128xf32>
    %46 = vector.extract_strided_slice %38 {offsets = [0, 256], sizes = [8, 128], strides = [1, 1]} : vector<8x384xf32> to vector<8x128xf32>
    %47 = math.tanh %45 : vector<8x128xf32>
    %48 = arith.mulf %46, %47 : vector<8x128xf32>
    %c8_20 = arith.constant 8 : index
    %c0_21 = arith.constant 0 : index
    %49 = vector.load %arg15[%c8_20, %c0_21] : memref<56x128xf32, #tpu.memory_space<vmem>>, vector<8x128xf32>
    tpu.vector_store %arg15[%c8_20, %c0_21], %48 {strides = array<i32>} : memref<56x128xf32, #tpu.memory_space<vmem>>, vector<8x128xf32>,
    %c16 = arith.constant 16 : index
    %c0_22 = arith.constant 0 : index
    %50 = vector.load %arg14[%c16, %c0_22] : memref<56x512xf32, #tpu.memory_space<vmem>>, vector<8x512xf32>
    %cst_23 = arith.constant dense<0.000000e+00> : vector<8x512xf32>
    %51 = tpu.matmul %48, %1, %cst_23 {dimension_numbers = #tpu.dot_dimension_numbers<[1], [0], [0], [1], [0, 0, 1, 1], [], []>} : vector<8x128xf32>, vector<128x512xf32>, vector<8x512xf32> -> vector<8x512xf32>
    %52 = arith.addf %50, %51 : vector<8x512xf32>
    %53 = vector.extract_strided_slice %52 {offsets = [0, 0], sizes = [8, 384], strides = [1, 1]} : vector<8x512xf32> to vector<8x384xf32>
    %54 = arith.negf %53 : vector<8x384xf32>
    %55 = math.exp %54 : vector<8x384xf32>
    %cst_24 = arith.constant 1.000000e+00 : f32
    %56 = vector.broadcast %cst_24 : f32 to vector<8x384xf32>
    %57 = arith.addf %56, %55 : vector<8x384xf32>
    %58 = arith.divf %56, %57 : vector<8x384xf32>
    %59 = vector.extract_strided_slice %52 {offsets = [0, 384], sizes = [8, 128], strides = [1, 1]} : vector<8x512xf32> to vector<8x128xf32>
    %60 = math.tanh %59 : vector<8x128xf32>
    %61 = vector.extract_strided_slice %58 {offsets = [0, 128], sizes = [8, 128], strides = [1, 1]} : vector<8x384xf32> to vector<8x128xf32>
    %62 = arith.mulf %61, %45 : vector<8x128xf32>
    %63 = vector.extract_strided_slice %58 {offsets = [0, 0], sizes = [8, 128], strides = [1, 1]} : vector<8x384xf32> to vector<8x128xf32>
    %64 = arith.mulf %63, %60 : vector<8x128xf32>
    %65 = arith.addf %62, %64 : vector<8x128xf32>
    %66 = vector.extract_strided_slice %58 {offsets = [0, 256], sizes = [8, 128], strides = [1, 1]} : vector<8x384xf32> to vector<8x128xf32>
    %67 = math.tanh %65 : vector<8x128xf32>
    %68 = arith.mulf %66, %67 : vector<8x128xf32>
    %c16_25 = arith.constant 16 : index
    %c0_26 = arith.constant 0 : index
    %69 = vector.load %arg15[%c16_25, %c0_26] : memref<56x128xf32, #tpu.memory_space<vmem>>, vector<8x128xf32>
    tpu.vector_store %arg15[%c16_25, %c0_26], %68 {strides = array<i32>} : memref<56x128xf32, #tpu.memory_space<vmem>>, vector<8x128xf32>,
    %c24 = arith.constant 24 : index
    %c0_27 = arith.constant 0 : index
    %70 = vector.load %arg14[%c24, %c0_27] : memref<56x512xf32, #tpu.memory_space<vmem>>, vector<8x512xf32>
    %cst_28 = arith.constant dense<0.000000e+00> : vector<8x512xf32>
    %71 = tpu.matmul %68, %1, %cst_28 {dimension_numbers = #tpu.dot_dimension_numbers<[1], [0], [0], [1], [0, 0, 1, 1], [], []>} : vector<8x128xf32>, vector<128x512xf32>, vector<8x512xf32> -> vector<8x512xf32>
    %72 = arith.addf %70, %71 : vector<8x512xf32>
    %73 = vector.extract_strided_slice %72 {offsets = [0, 0], sizes = [8, 384], strides = [1, 1]} : vector<8x512xf32> to vector<8x384xf32>
    %74 = arith.negf %73 : vector<8x384xf32>
    %75 = math.exp %74 : vector<8x384xf32>
    %cst_29 = arith.constant 1.000000e+00 : f32
    %76 = vector.broadcast %cst_29 : f32 to vector<8x384xf32>
    %77 = arith.addf %76, %75 : vector<8x384xf32>
    %78 = arith.divf %76, %77 : vector<8x384xf32>
    %79 = vector.extract_strided_slice %72 {offsets = [0, 384], sizes = [8, 128], strides = [1, 1]} : vector<8x512xf32> to vector<8x128xf32>
    %80 = math.tanh %79 : vector<8x128xf32>
    %81 = vector.extract_strided_slice %78 {offsets = [0, 128], sizes = [8, 128], strides = [1, 1]} : vector<8x384xf32> to vector<8x128xf32>
    %82 = arith.mulf %81, %65 : vector<8x128xf32>
    %83 = vector.extract_strided_slice %78 {offsets = [0, 0], sizes = [8, 128], strides = [1, 1]} : vector<8x384xf32> to vector<8x128xf32>
    %84 = arith.mulf %83, %80 : vector<8x128xf32>
    %85 = arith.addf %82, %84 : vector<8x128xf32>
    %86 = vector.extract_strided_slice %78 {offsets = [0, 256], sizes = [8, 128], strides = [1, 1]} : vector<8x384xf32> to vector<8x128xf32>
    %87 = math.tanh %85 : vector<8x128xf32>
    %88 = arith.mulf %86, %87 : vector<8x128xf32>
    %c24_30 = arith.constant 24 : index
    %c0_31 = arith.constant 0 : index
    %89 = vector.load %arg15[%c24_30, %c0_31] : memref<56x128xf32, #tpu.memory_space<vmem>>, vector<8x128xf32>
    tpu.vector_store %arg15[%c24_30, %c0_31], %88 {strides = array<i32>} : memref<56x128xf32, #tpu.memory_space<vmem>>, vector<8x128xf32>,
    %c32 = arith.constant 32 : index
    %c0_32 = arith.constant 0 : index
    %90 = vector.load %arg14[%c32, %c0_32] : memref<56x512xf32, #tpu.memory_space<vmem>>, vector<8x512xf32>
    %cst_33 = arith.constant dense<0.000000e+00> : vector<8x512xf32>
    %91 = tpu.matmul %88, %1, %cst_33 {dimension_numbers = #tpu.dot_dimension_numbers<[1], [0], [0], [1], [0, 0, 1, 1], [], []>} : vector<8x128xf32>, vector<128x512xf32>, vector<8x512xf32> -> vector<8x512xf32>
    %92 = arith.addf %90, %91 : vector<8x512xf32>
    %93 = vector.extract_strided_slice %92 {offsets = [0, 0], sizes = [8, 384], strides = [1, 1]} : vector<8x512xf32> to vector<8x384xf32>
    %94 = arith.negf %93 : vector<8x384xf32>
    %95 = math.exp %94 : vector<8x384xf32>
    %cst_34 = arith.constant 1.000000e+00 : f32
    %96 = vector.broadcast %cst_34 : f32 to vector<8x384xf32>
    %97 = arith.addf %96, %95 : vector<8x384xf32>
    %98 = arith.divf %96, %97 : vector<8x384xf32>
    %99 = vector.extract_strided_slice %92 {offsets = [0, 384], sizes = [8, 128], strides = [1, 1]} : vector<8x512xf32> to vector<8x128xf32>
    %100 = math.tanh %99 : vector<8x128xf32>
    %101 = vector.extract_strided_slice %98 {offsets = [0, 128], sizes = [8, 128], strides = [1, 1]} : vector<8x384xf32> to vector<8x128xf32>
    %102 = arith.mulf %101, %85 : vector<8x128xf32>
    %103 = vector.extract_strided_slice %98 {offsets = [0, 0], sizes = [8, 128], strides = [1, 1]} : vector<8x384xf32> to vector<8x128xf32>
    %104 = arith.mulf %103, %100 : vector<8x128xf32>
    %105 = arith.addf %102, %104 : vector<8x128xf32>
    %106 = vector.extract_strided_slice %98 {offsets = [0, 256], sizes = [8, 128], strides = [1, 1]} : vector<8x384xf32> to vector<8x128xf32>
    %107 = math.tanh %105 : vector<8x128xf32>
    %108 = arith.mulf %106, %107 : vector<8x128xf32>
    %c32_35 = arith.constant 32 : index
    %c0_36 = arith.constant 0 : index
    %109 = vector.load %arg15[%c32_35, %c0_36] : memref<56x128xf32, #tpu.memory_space<vmem>>, vector<8x128xf32>
    tpu.vector_store %arg15[%c32_35, %c0_36], %108 {strides = array<i32>} : memref<56x128xf32, #tpu.memory_space<vmem>>, vector<8x128xf32>,
    %c40 = arith.constant 40 : index
    %c0_37 = arith.constant 0 : index
    %110 = vector.load %arg14[%c40, %c0_37] : memref<56x512xf32, #tpu.memory_space<vmem>>, vector<8x512xf32>
    %cst_38 = arith.constant dense<0.000000e+00> : vector<8x512xf32>
    %111 = tpu.matmul %108, %1, %cst_38 {dimension_numbers = #tpu.dot_dimension_numbers<[1], [0], [0], [1], [0, 0, 1, 1], [], []>} : vector<8x128xf32>, vector<128x512xf32>, vector<8x512xf32> -> vector<8x512xf32>
    %112 = arith.addf %110, %111 : vector<8x512xf32>
    %113 = vector.extract_strided_slice %112 {offsets = [0, 0], sizes = [8, 384], strides = [1, 1]} : vector<8x512xf32> to vector<8x384xf32>
    %114 = arith.negf %113 : vector<8x384xf32>
    %115 = math.exp %114 : vector<8x384xf32>
    %cst_39 = arith.constant 1.000000e+00 : f32
    %116 = vector.broadcast %cst_39 : f32 to vector<8x384xf32>
    %117 = arith.addf %116, %115 : vector<8x384xf32>
    %118 = arith.divf %116, %117 : vector<8x384xf32>
    %119 = vector.extract_strided_slice %112 {offsets = [0, 384], sizes = [8, 128], strides = [1, 1]} : vector<8x512xf32> to vector<8x128xf32>
    %120 = math.tanh %119 : vector<8x128xf32>
    %121 = vector.extract_strided_slice %118 {offsets = [0, 128], sizes = [8, 128], strides = [1, 1]} : vector<8x384xf32> to vector<8x128xf32>
    %122 = arith.mulf %121, %105 : vector<8x128xf32>
    %123 = vector.extract_strided_slice %118 {offsets = [0, 0], sizes = [8, 128], strides = [1, 1]} : vector<8x384xf32> to vector<8x128xf32>
    %124 = arith.mulf %123, %120 : vector<8x128xf32>
    %125 = arith.addf %122, %124 : vector<8x128xf32>
    %126 = vector.extract_strided_slice %118 {offsets = [0, 256], sizes = [8, 128], strides = [1, 1]} : vector<8x384xf32> to vector<8x128xf32>
    %127 = math.tanh %125 : vector<8x128xf32>
    %128 = arith.mulf %126, %127 : vector<8x128xf32>
    %c40_40 = arith.constant 40 : index
    %c0_41 = arith.constant 0 : index
    %129 = vector.load %arg15[%c40_40, %c0_41] : memref<56x128xf32, #tpu.memory_space<vmem>>, vector<8x128xf32>
    tpu.vector_store %arg15[%c40_40, %c0_41], %128 {strides = array<i32>} : memref<56x128xf32, #tpu.memory_space<vmem>>, vector<8x128xf32>,
    %c48 = arith.constant 48 : index
    %c0_42 = arith.constant 0 : index
    %130 = vector.load %arg14[%c48, %c0_42] : memref<56x512xf32, #tpu.memory_space<vmem>>, vector<8x512xf32>
    %cst_43 = arith.constant dense<0.000000e+00> : vector<8x512xf32>
    %131 = tpu.matmul %128, %1, %cst_43 {dimension_numbers = #tpu.dot_dimension_numbers<[1], [0], [0], [1], [0, 0, 1, 1], [], []>} : vector<8x128xf32>, vector<128x512xf32>, vector<8x512xf32> -> vector<8x512xf32>
    %132 = arith.addf %130, %131 : vector<8x512xf32>
    %133 = vector.extract_strided_slice %132 {offsets = [0, 0], sizes = [8, 384], strides = [1, 1]} : vector<8x512xf32> to vector<8x384xf32>
    %134 = arith.negf %133 : vector<8x384xf32>
    %135 = math.exp %134 : vector<8x384xf32>
    %cst_44 = arith.constant 1.000000e+00 : f32
    %136 = vector.broadcast %cst_44 : f32 to vector<8x384xf32>
    %137 = arith.addf %136, %135 : vector<8x384xf32>
    %138 = arith.divf %136, %137 : vector<8x384xf32>
    %139 = vector.extract_strided_slice %132 {offsets = [0, 384], sizes = [8, 128], strides = [1, 1]} : vector<8x512xf32> to vector<8x128xf32>
    %140 = math.tanh %139 : vector<8x128xf32>
    %141 = vector.extract_strided_slice %138 {offsets = [0, 128], sizes = [8, 128], strides = [1, 1]} : vector<8x384xf32> to vector<8x128xf32>
    %142 = arith.mulf %141, %125 : vector<8x128xf32>
    %143 = vector.extract_strided_slice %138 {offsets = [0, 0], sizes = [8, 128], strides = [1, 1]} : vector<8x384xf32> to vector<8x128xf32>
    %144 = arith.mulf %143, %140 : vector<8x128xf32>
    %145 = arith.addf %142, %144 : vector<8x128xf32>
    %146 = vector.extract_strided_slice %138 {offsets = [0, 256], sizes = [8, 128], strides = [1, 1]} : vector<8x384xf32> to vector<8x128xf32>
    %147 = math.tanh %145 : vector<8x128xf32>
    %148 = arith.mulf %146, %147 : vector<8x128xf32>
    %c48_45 = arith.constant 48 : index
    %c0_46 = arith.constant 0 : index
    %149 = vector.load %arg15[%c48_45, %c0_46] : memref<56x128xf32, #tpu.memory_space<vmem>>, vector<8x128xf32>
    tpu.vector_store %arg15[%c48_45, %c0_46], %148 {strides = array<i32>} : memref<56x128xf32, #tpu.memory_space<vmem>>, vector<8x128xf32>,
    %c0_47 = arith.constant 0 : index
    %c0_48 = arith.constant 0 : index
    %150 = vector.load %arg4[%c0_47, %c0_48] : memref<128x512xf32, #tpu.memory_space<vmem>>, vector<128x512xf32>
    %c0_49 = arith.constant 0 : index
    %c0_50 = arith.constant 0 : index
    %151 = vector.load %arg5[%c0_49, %c0_50] : memref<128x512xf32, #tpu.memory_space<vmem>>, vector<128x512xf32>
    %c0_51 = arith.constant 0 : index
    %c0_52 = arith.constant 0 : index
    %152 = vector.load %arg6[%c0_51, %c0_52] : memref<1x512xf32, #tpu.memory_space<vmem>>, vector<1x512xf32>
    %c0_53 = arith.constant 0 : index
    %c0_54 = arith.constant 0 : index
    %153 = vector.load %arg15[%c0_53, %c0_54] : memref<56x128xf32, #tpu.memory_space<vmem>>, vector<56x128xf32>
    %cst_55 = arith.constant dense<0.000000e+00> : vector<56x512xf32>
    %154 = tpu.matmul %153, %150, %cst_55 {dimension_numbers = #tpu.dot_dimension_numbers<[1], [0], [0], [1], [0, 0, 1, 1], [], []>} : vector<56x128xf32>, vector<128x512xf32>, vector<56x512xf32> -> vector<56x512xf32>
    %155 = vector.broadcast %152 : vector<1x512xf32> to vector<56x512xf32>
    %156 = arith.addf %154, %155 : vector<56x512xf32>
    %c0_56 = arith.constant 0 : index
    %c0_57 = arith.constant 0 : index
    %157 = vector.load %arg14[%c0_56, %c0_57] : memref<56x512xf32, #tpu.memory_space<vmem>>, vector<56x512xf32>
    tpu.vector_store %arg14[%c0_56, %c0_57], %156 {strides = array<i32>} : memref<56x512xf32, #tpu.memory_space<vmem>>, vector<56x512xf32>,
    %cst_58 = arith.constant 0.000000e+00 : f32
    %158 = vector.broadcast %cst_58 : f32 to vector<8x128xf32>
    %cst_59 = arith.constant 0.000000e+00 : f32
    %159 = vector.broadcast %cst_59 : f32 to vector<8x128xf32>
    %c0_60 = arith.constant 0 : index
    %c0_61 = arith.constant 0 : index
    %160 = vector.load %arg14[%c0_60, %c0_61] : memref<56x512xf32, #tpu.memory_space<vmem>>, vector<8x512xf32>
    %cst_62 = arith.constant dense<0.000000e+00> : vector<8x512xf32>
    %161 = tpu.matmul %158, %151, %cst_62 {dimension_numbers = #tpu.dot_dimension_numbers<[1], [0], [0], [1], [0, 0, 1, 1], [], []>} : vector<8x128xf32>, vector<128x512xf32>, vector<8x512xf32> -> vector<8x512xf32>
    %162 = arith.addf %160, %161 : vector<8x512xf32>
    %163 = vector.extract_strided_slice %162 {offsets = [0, 0], sizes = [8, 384], strides = [1, 1]} : vector<8x512xf32> to vector<8x384xf32>
    %164 = arith.negf %163 : vector<8x384xf32>
    %165 = math.exp %164 : vector<8x384xf32>
    %cst_63 = arith.constant 1.000000e+00 : f32
    %166 = vector.broadcast %cst_63 : f32 to vector<8x384xf32>
    %167 = arith.addf %166, %165 : vector<8x384xf32>
    %168 = arith.divf %166, %167 : vector<8x384xf32>
    %169 = vector.extract_strided_slice %162 {offsets = [0, 384], sizes = [8, 128], strides = [1, 1]} : vector<8x512xf32> to vector<8x128xf32>
    %170 = math.tanh %169 : vector<8x128xf32>
    %171 = vector.extract_strided_slice %168 {offsets = [0, 128], sizes = [8, 128], strides = [1, 1]} : vector<8x384xf32> to vector<8x128xf32>
    %172 = arith.mulf %171, %159 : vector<8x128xf32>
    %173 = vector.extract_strided_slice %168 {offsets = [0, 0], sizes = [8, 128], strides = [1, 1]} : vector<8x384xf32> to vector<8x128xf32>
    %174 = arith.mulf %173, %170 : vector<8x128xf32>
    %175 = arith.addf %172, %174 : vector<8x128xf32>
    %176 = vector.extract_strided_slice %168 {offsets = [0, 256], sizes = [8, 128], strides = [1, 1]} : vector<8x384xf32> to vector<8x128xf32>
    %177 = math.tanh %175 : vector<8x128xf32>
    %178 = arith.mulf %176, %177 : vector<8x128xf32>
    %c0_64 = arith.constant 0 : index
    %c0_65 = arith.constant 0 : index
    %179 = vector.load %arg16[%c0_64, %c0_65] : memref<56x128xf32, #tpu.memory_space<vmem>>, vector<8x128xf32>
    tpu.vector_store %arg16[%c0_64, %c0_65], %178 {strides = array<i32>} : memref<56x128xf32, #tpu.memory_space<vmem>>, vector<8x128xf32>,
    %c8_66 = arith.constant 8 : index
    %c0_67 = arith.constant 0 : index
    %180 = vector.load %arg14[%c8_66, %c0_67] : memref<56x512xf32, #tpu.memory_space<vmem>>, vector<8x512xf32>
    %cst_68 = arith.constant dense<0.000000e+00> : vector<8x512xf32>
    %181 = tpu.matmul %178, %151, %cst_68 {dimension_numbers = #tpu.dot_dimension_numbers<[1], [0], [0], [1], [0, 0, 1, 1], [], []>} : vector<8x128xf32>, vector<128x512xf32>, vector<8x512xf32> -> vector<8x512xf32>
    %182 = arith.addf %180, %181 : vector<8x512xf32>
    %183 = vector.extract_strided_slice %182 {offsets = [0, 0], sizes = [8, 384], strides = [1, 1]} : vector<8x512xf32> to vector<8x384xf32>
    %184 = arith.negf %183 : vector<8x384xf32>
    %185 = math.exp %184 : vector<8x384xf32>
    %cst_69 = arith.constant 1.000000e+00 : f32
    %186 = vector.broadcast %cst_69 : f32 to vector<8x384xf32>
    %187 = arith.addf %186, %185 : vector<8x384xf32>
    %188 = arith.divf %186, %187 : vector<8x384xf32>
    %189 = vector.extract_strided_slice %182 {offsets = [0, 384], sizes = [8, 128], strides = [1, 1]} : vector<8x512xf32> to vector<8x128xf32>
    %190 = math.tanh %189 : vector<8x128xf32>
    %191 = vector.extract_strided_slice %188 {offsets = [0, 128], sizes = [8, 128], strides = [1, 1]} : vector<8x384xf32> to vector<8x128xf32>
    %192 = arith.mulf %191, %175 : vector<8x128xf32>
    %193 = vector.extract_strided_slice %188 {offsets = [0, 0], sizes = [8, 128], strides = [1, 1]} : vector<8x384xf32> to vector<8x128xf32>
    %194 = arith.mulf %193, %190 : vector<8x128xf32>
    %195 = arith.addf %192, %194 : vector<8x128xf32>
    %196 = vector.extract_strided_slice %188 {offsets = [0, 256], sizes = [8, 128], strides = [1, 1]} : vector<8x384xf32> to vector<8x128xf32>
    %197 = math.tanh %195 : vector<8x128xf32>
    %198 = arith.mulf %196, %197 : vector<8x128xf32>
    %c8_70 = arith.constant 8 : index
    %c0_71 = arith.constant 0 : index
    %199 = vector.load %arg16[%c8_70, %c0_71] : memref<56x128xf32, #tpu.memory_space<vmem>>, vector<8x128xf32>
    tpu.vector_store %arg16[%c8_70, %c0_71], %198 {strides = array<i32>} : memref<56x128xf32, #tpu.memory_space<vmem>>, vector<8x128xf32>,
    %c16_72 = arith.constant 16 : index
    %c0_73 = arith.constant 0 : index
    %200 = vector.load %arg14[%c16_72, %c0_73] : memref<56x512xf32, #tpu.memory_space<vmem>>, vector<8x512xf32>
    %cst_74 = arith.constant dense<0.000000e+00> : vector<8x512xf32>
    %201 = tpu.matmul %198, %151, %cst_74 {dimension_numbers = #tpu.dot_dimension_numbers<[1], [0], [0], [1], [0, 0, 1, 1], [], []>} : vector<8x128xf32>, vector<128x512xf32>, vector<8x512xf32> -> vector<8x512xf32>
    %202 = arith.addf %200, %201 : vector<8x512xf32>
    %203 = vector.extract_strided_slice %202 {offsets = [0, 0], sizes = [8, 384], strides = [1, 1]} : vector<8x512xf32> to vector<8x384xf32>
    %204 = arith.negf %203 : vector<8x384xf32>
    %205 = math.exp %204 : vector<8x384xf32>
    %cst_75 = arith.constant 1.000000e+00 : f32
    %206 = vector.broadcast %cst_75 : f32 to vector<8x384xf32>
    %207 = arith.addf %206, %205 : vector<8x384xf32>
    %208 = arith.divf %206, %207 : vector<8x384xf32>
    %209 = vector.extract_strided_slice %202 {offsets = [0, 384], sizes = [8, 128], strides = [1, 1]} : vector<8x512xf32> to vector<8x128xf32>
    %210 = math.tanh %209 : vector<8x128xf32>
    %211 = vector.extract_strided_slice %208 {offsets = [0, 128], sizes = [8, 128], strides = [1, 1]} : vector<8x384xf32> to vector<8x128xf32>
    %212 = arith.mulf %211, %195 : vector<8x128xf32>
    %213 = vector.extract_strided_slice %208 {offsets = [0, 0], sizes = [8, 128], strides = [1, 1]} : vector<8x384xf32> to vector<8x128xf32>
    %214 = arith.mulf %213, %210 : vector<8x128xf32>
    %215 = arith.addf %212, %214 : vector<8x128xf32>
    %216 = vector.extract_strided_slice %208 {offsets = [0, 256], sizes = [8, 128], strides = [1, 1]} : vector<8x384xf32> to vector<8x128xf32>
    %217 = math.tanh %215 : vector<8x128xf32>
    %218 = arith.mulf %216, %217 : vector<8x128xf32>
    %c16_76 = arith.constant 16 : index
    %c0_77 = arith.constant 0 : index
    %219 = vector.load %arg16[%c16_76, %c0_77] : memref<56x128xf32, #tpu.memory_space<vmem>>, vector<8x128xf32>
    tpu.vector_store %arg16[%c16_76, %c0_77], %218 {strides = array<i32>} : memref<56x128xf32, #tpu.memory_space<vmem>>, vector<8x128xf32>,
    %c24_78 = arith.constant 24 : index
    %c0_79 = arith.constant 0 : index
    %220 = vector.load %arg14[%c24_78, %c0_79] : memref<56x512xf32, #tpu.memory_space<vmem>>, vector<8x512xf32>
    %cst_80 = arith.constant dense<0.000000e+00> : vector<8x512xf32>
    %221 = tpu.matmul %218, %151, %cst_80 {dimension_numbers = #tpu.dot_dimension_numbers<[1], [0], [0], [1], [0, 0, 1, 1], [], []>} : vector<8x128xf32>, vector<128x512xf32>, vector<8x512xf32> -> vector<8x512xf32>
    %222 = arith.addf %220, %221 : vector<8x512xf32>
    %223 = vector.extract_strided_slice %222 {offsets = [0, 0], sizes = [8, 384], strides = [1, 1]} : vector<8x512xf32> to vector<8x384xf32>
    %224 = arith.negf %223 : vector<8x384xf32>
    %225 = math.exp %224 : vector<8x384xf32>
    %cst_81 = arith.constant 1.000000e+00 : f32
    %226 = vector.broadcast %cst_81 : f32 to vector<8x384xf32>
    %227 = arith.addf %226, %225 : vector<8x384xf32>
    %228 = arith.divf %226, %227 : vector<8x384xf32>
    %229 = vector.extract_strided_slice %222 {offsets = [0, 384], sizes = [8, 128], strides = [1, 1]} : vector<8x512xf32> to vector<8x128xf32>
    %230 = math.tanh %229 : vector<8x128xf32>
    %231 = vector.extract_strided_slice %228 {offsets = [0, 128], sizes = [8, 128], strides = [1, 1]} : vector<8x384xf32> to vector<8x128xf32>
    %232 = arith.mulf %231, %215 : vector<8x128xf32>
    %233 = vector.extract_strided_slice %228 {offsets = [0, 0], sizes = [8, 128], strides = [1, 1]} : vector<8x384xf32> to vector<8x128xf32>
    %234 = arith.mulf %233, %230 : vector<8x128xf32>
    %235 = arith.addf %232, %234 : vector<8x128xf32>
    %236 = vector.extract_strided_slice %228 {offsets = [0, 256], sizes = [8, 128], strides = [1, 1]} : vector<8x384xf32> to vector<8x128xf32>
    %237 = math.tanh %235 : vector<8x128xf32>
    %238 = arith.mulf %236, %237 : vector<8x128xf32>
    %c24_82 = arith.constant 24 : index
    %c0_83 = arith.constant 0 : index
    %239 = vector.load %arg16[%c24_82, %c0_83] : memref<56x128xf32, #tpu.memory_space<vmem>>, vector<8x128xf32>
    tpu.vector_store %arg16[%c24_82, %c0_83], %238 {strides = array<i32>} : memref<56x128xf32, #tpu.memory_space<vmem>>, vector<8x128xf32>,
    %c32_84 = arith.constant 32 : index
    %c0_85 = arith.constant 0 : index
    %240 = vector.load %arg14[%c32_84, %c0_85] : memref<56x512xf32, #tpu.memory_space<vmem>>, vector<8x512xf32>
    %cst_86 = arith.constant dense<0.000000e+00> : vector<8x512xf32>
    %241 = tpu.matmul %238, %151, %cst_86 {dimension_numbers = #tpu.dot_dimension_numbers<[1], [0], [0], [1], [0, 0, 1, 1], [], []>} : vector<8x128xf32>, vector<128x512xf32>, vector<8x512xf32> -> vector<8x512xf32>
    %242 = arith.addf %240, %241 : vector<8x512xf32>
    %243 = vector.extract_strided_slice %242 {offsets = [0, 0], sizes = [8, 384], strides = [1, 1]} : vector<8x512xf32> to vector<8x384xf32>
    %244 = arith.negf %243 : vector<8x384xf32>
    %245 = math.exp %244 : vector<8x384xf32>
    %cst_87 = arith.constant 1.000000e+00 : f32
    %246 = vector.broadcast %cst_87 : f32 to vector<8x384xf32>
    %247 = arith.addf %246, %245 : vector<8x384xf32>
    %248 = arith.divf %246, %247 : vector<8x384xf32>
    %249 = vector.extract_strided_slice %242 {offsets = [0, 384], sizes = [8, 128], strides = [1, 1]} : vector<8x512xf32> to vector<8x128xf32>
    %250 = math.tanh %249 : vector<8x128xf32>
    %251 = vector.extract_strided_slice %248 {offsets = [0, 128], sizes = [8, 128], strides = [1, 1]} : vector<8x384xf32> to vector<8x128xf32>
    %252 = arith.mulf %251, %235 : vector<8x128xf32>
    %253 = vector.extract_strided_slice %248 {offsets = [0, 0], sizes = [8, 128], strides = [1, 1]} : vector<8x384xf32> to vector<8x128xf32>
    %254 = arith.mulf %253, %250 : vector<8x128xf32>
    %255 = arith.addf %252, %254 : vector<8x128xf32>
    %256 = vector.extract_strided_slice %248 {offsets = [0, 256], sizes = [8, 128], strides = [1, 1]} : vector<8x384xf32> to vector<8x128xf32>
    %257 = math.tanh %255 : vector<8x128xf32>
    %258 = arith.mulf %256, %257 : vector<8x128xf32>
    %c32_88 = arith.constant 32 : index
    %c0_89 = arith.constant 0 : index
    %259 = vector.load %arg16[%c32_88, %c0_89] : memref<56x128xf32, #tpu.memory_space<vmem>>, vector<8x128xf32>
    tpu.vector_store %arg16[%c32_88, %c0_89], %258 {strides = array<i32>} : memref<56x128xf32, #tpu.memory_space<vmem>>, vector<8x128xf32>,
    %c40_90 = arith.constant 40 : index
    %c0_91 = arith.constant 0 : index
    %260 = vector.load %arg14[%c40_90, %c0_91] : memref<56x512xf32, #tpu.memory_space<vmem>>, vector<8x512xf32>
    %cst_92 = arith.constant dense<0.000000e+00> : vector<8x512xf32>
    %261 = tpu.matmul %258, %151, %cst_92 {dimension_numbers = #tpu.dot_dimension_numbers<[1], [0], [0], [1], [0, 0, 1, 1], [], []>} : vector<8x128xf32>, vector<128x512xf32>, vector<8x512xf32> -> vector<8x512xf32>
    %262 = arith.addf %260, %261 : vector<8x512xf32>
    %263 = vector.extract_strided_slice %262 {offsets = [0, 0], sizes = [8, 384], strides = [1, 1]} : vector<8x512xf32> to vector<8x384xf32>
    %264 = arith.negf %263 : vector<8x384xf32>
    %265 = math.exp %264 : vector<8x384xf32>
    %cst_93 = arith.constant 1.000000e+00 : f32
    %266 = vector.broadcast %cst_93 : f32 to vector<8x384xf32>
    %267 = arith.addf %266, %265 : vector<8x384xf32>
    %268 = arith.divf %266, %267 : vector<8x384xf32>
    %269 = vector.extract_strided_slice %262 {offsets = [0, 384], sizes = [8, 128], strides = [1, 1]} : vector<8x512xf32> to vector<8x128xf32>
    %270 = math.tanh %269 : vector<8x128xf32>
    %271 = vector.extract_strided_slice %268 {offsets = [0, 128], sizes = [8, 128], strides = [1, 1]} : vector<8x384xf32> to vector<8x128xf32>
    %272 = arith.mulf %271, %255 : vector<8x128xf32>
    %273 = vector.extract_strided_slice %268 {offsets = [0, 0], sizes = [8, 128], strides = [1, 1]} : vector<8x384xf32> to vector<8x128xf32>
    %274 = arith.mulf %273, %270 : vector<8x128xf32>
    %275 = arith.addf %272, %274 : vector<8x128xf32>
    %276 = vector.extract_strided_slice %268 {offsets = [0, 256], sizes = [8, 128], strides = [1, 1]} : vector<8x384xf32> to vector<8x128xf32>
    %277 = math.tanh %275 : vector<8x128xf32>
    %278 = arith.mulf %276, %277 : vector<8x128xf32>
    %c40_94 = arith.constant 40 : index
    %c0_95 = arith.constant 0 : index
    %279 = vector.load %arg16[%c40_94, %c0_95] : memref<56x128xf32, #tpu.memory_space<vmem>>, vector<8x128xf32>
    tpu.vector_store %arg16[%c40_94, %c0_95], %278 {strides = array<i32>} : memref<56x128xf32, #tpu.memory_space<vmem>>, vector<8x128xf32>,
    %c48_96 = arith.constant 48 : index
    %c0_97 = arith.constant 0 : index
    %280 = vector.load %arg14[%c48_96, %c0_97] : memref<56x512xf32, #tpu.memory_space<vmem>>, vector<8x512xf32>
    %cst_98 = arith.constant dense<0.000000e+00> : vector<8x512xf32>
    %281 = tpu.matmul %278, %151, %cst_98 {dimension_numbers = #tpu.dot_dimension_numbers<[1], [0], [0], [1], [0, 0, 1, 1], [], []>} : vector<8x128xf32>, vector<128x512xf32>, vector<8x512xf32> -> vector<8x512xf32>
    %282 = arith.addf %280, %281 : vector<8x512xf32>
    %283 = vector.extract_strided_slice %282 {offsets = [0, 0], sizes = [8, 384], strides = [1, 1]} : vector<8x512xf32> to vector<8x384xf32>
    %284 = arith.negf %283 : vector<8x384xf32>
    %285 = math.exp %284 : vector<8x384xf32>
    %cst_99 = arith.constant 1.000000e+00 : f32
    %286 = vector.broadcast %cst_99 : f32 to vector<8x384xf32>
    %287 = arith.addf %286, %285 : vector<8x384xf32>
    %288 = arith.divf %286, %287 : vector<8x384xf32>
    %289 = vector.extract_strided_slice %282 {offsets = [0, 384], sizes = [8, 128], strides = [1, 1]} : vector<8x512xf32> to vector<8x128xf32>
    %290 = math.tanh %289 : vector<8x128xf32>
    %291 = vector.extract_strided_slice %288 {offsets = [0, 128], sizes = [8, 128], strides = [1, 1]} : vector<8x384xf32> to vector<8x128xf32>
    %292 = arith.mulf %291, %275 : vector<8x128xf32>
    %293 = vector.extract_strided_slice %288 {offsets = [0, 0], sizes = [8, 128], strides = [1, 1]} : vector<8x384xf32> to vector<8x128xf32>
    %294 = arith.mulf %293, %290 : vector<8x128xf32>
    %295 = arith.addf %292, %294 : vector<8x128xf32>
    %296 = vector.extract_strided_slice %288 {offsets = [0, 256], sizes = [8, 128], strides = [1, 1]} : vector<8x384xf32> to vector<8x128xf32>
    %297 = math.tanh %295 : vector<8x128xf32>
    %298 = arith.mulf %296, %297 : vector<8x128xf32>
    %c48_100 = arith.constant 48 : index
    %c0_101 = arith.constant 0 : index
    %299 = vector.load %arg16[%c48_100, %c0_101] : memref<56x128xf32, #tpu.memory_space<vmem>>, vector<8x128xf32>
    tpu.vector_store %arg16[%c48_100, %c0_101], %298 {strides = array<i32>} : memref<56x128xf32, #tpu.memory_space<vmem>>, vector<8x128xf32>,
    %300 = tpu.iota {dimensions = array<i32: 1>} : vector<8x128xi32>
    %c32_i32 = arith.constant 32 : i32
    %301 = vector.broadcast %c32_i32 : i32 to vector<8x128xi32>
    %302 = arith.cmpi slt, %300, %301 : vector<8x128xi32>
    %c0_102 = arith.constant 0 : index
    %c0_103 = arith.constant 0 : index
    %303 = vector.load %arg16[%c0_102, %c0_103] : memref<56x128xf32, #tpu.memory_space<vmem>>, vector<8x128xf32>
    %c40_104 = arith.constant 40 : index
    %c0_105 = arith.constant 0 : index
    %304 = vector.load %arg16[%c40_104, %c0_105] : memref<56x128xf32, #tpu.memory_space<vmem>>, vector<8x128xf32>
    %305 = arith.select %302, %303, %304 : vector<8x128xi1>, vector<8x128xf32>
    %c0_106 = arith.constant 0 : index
    %c0_107 = arith.constant 0 : index
    %306 = vector.load %arg17[%c0_106, %c0_107] : memref<48x128xf32, #tpu.memory_space<vmem>>, vector<8x128xf32>
    tpu.vector_store %arg17[%c0_106, %c0_107], %305 {strides = array<i32>} : memref<48x128xf32, #tpu.memory_space<vmem>>, vector<8x128xf32>,
    %c8_108 = arith.constant 8 : index
    %c0_109 = arith.constant 0 : index
    %307 = vector.load %arg16[%c8_108, %c0_109] : memref<56x128xf32, #tpu.memory_space<vmem>>, vector<8x128xf32>
    %c32_110 = arith.constant 32 : index
    %c0_111 = arith.constant 0 : index
    %308 = vector.load %arg16[%c32_110, %c0_111] : memref<56x128xf32, #tpu.memory_space<vmem>>, vector<8x128xf32>
    %309 = arith.select %302, %307, %308 : vector<8x128xi1>, vector<8x128xf32>
    %c8_112 = arith.constant 8 : index
    %c0_113 = arith.constant 0 : index
    %310 = vector.load %arg17[%c8_112, %c0_113] : memref<48x128xf32, #tpu.memory_space<vmem>>, vector<8x128xf32>
    tpu.vector_store %arg17[%c8_112, %c0_113], %309 {strides = array<i32>} : memref<48x128xf32, #tpu.memory_space<vmem>>, vector<8x128xf32>,
    %c16_114 = arith.constant 16 : index
    %c0_115 = arith.constant 0 : index
    %311 = vector.load %arg16[%c16_114, %c0_115] : memref<56x128xf32, #tpu.memory_space<vmem>>, vector<8x128xf32>
    %c24_116 = arith.constant 24 : index
    %c0_117 = arith.constant 0 : index
    %312 = vector.load %arg16[%c24_116, %c0_117] : memref<56x128xf32, #tpu.memory_space<vmem>>, vector<8x128xf32>
    %313 = arith.select %302, %311, %312 : vector<8x128xi1>, vector<8x128xf32>
    %c16_118 = arith.constant 16 : index
    %c0_119 = arith.constant 0 : index
    %314 = vector.load %arg17[%c16_118, %c0_119] : memref<48x128xf32, #tpu.memory_space<vmem>>, vector<8x128xf32>
    tpu.vector_store %arg17[%c16_118, %c0_119], %313 {strides = array<i32>} : memref<48x128xf32, #tpu.memory_space<vmem>>, vector<8x128xf32>,
    %c24_120 = arith.constant 24 : index
    %c0_121 = arith.constant 0 : index
    %315 = vector.load %arg16[%c24_120, %c0_121] : memref<56x128xf32, #tpu.memory_space<vmem>>, vector<8x128xf32>
    %c16_122 = arith.constant 16 : index
    %c0_123 = arith.constant 0 : index
    %316 = vector.load %arg16[%c16_122, %c0_123] : memref<56x128xf32, #tpu.memory_space<vmem>>, vector<8x128xf32>
    %317 = arith.select %302, %315, %316 : vector<8x128xi1>, vector<8x128xf32>
    %c24_124 = arith.constant 24 : index
    %c0_125 = arith.constant 0 : index
    %318 = vector.load %arg17[%c24_124, %c0_125] : memref<48x128xf32, #tpu.memory_space<vmem>>, vector<8x128xf32>
    tpu.vector_store %arg17[%c24_124, %c0_125], %317 {strides = array<i32>} : memref<48x128xf32, #tpu.memory_space<vmem>>, vector<8x128xf32>,
    %c32_126 = arith.constant 32 : index
    %c0_127 = arith.constant 0 : index
    %319 = vector.load %arg16[%c32_126, %c0_127] : memref<56x128xf32, #tpu.memory_space<vmem>>, vector<8x128xf32>
    %c8_128 = arith.constant 8 : index
    %c0_129 = arith.constant 0 : index
    %320 = vector.load %arg16[%c8_128, %c0_129] : memref<56x128xf32, #tpu.memory_space<vmem>>, vector<8x128xf32>
    %321 = arith.select %302, %319, %320 : vector<8x128xi1>, vector<8x128xf32>
    %c32_130 = arith.constant 32 : index
    %c0_131 = arith.constant 0 : index
    %322 = vector.load %arg17[%c32_130, %c0_131] : memref<48x128xf32, #tpu.memory_space<vmem>>, vector<8x128xf32>
    tpu.vector_store %arg17[%c32_130, %c0_131], %321 {strides = array<i32>} : memref<48x128xf32, #tpu.memory_space<vmem>>, vector<8x128xf32>,
    %c40_132 = arith.constant 40 : index
    %c0_133 = arith.constant 0 : index
    %323 = vector.load %arg16[%c40_132, %c0_133] : memref<56x128xf32, #tpu.memory_space<vmem>>, vector<8x128xf32>
    %c0_134 = arith.constant 0 : index
    %c0_135 = arith.constant 0 : index
    %324 = vector.load %arg16[%c0_134, %c0_135] : memref<56x128xf32, #tpu.memory_space<vmem>>, vector<8x128xf32>
    %325 = arith.select %302, %323, %324 : vector<8x128xi1>, vector<8x128xf32>
    %c40_136 = arith.constant 40 : index
    %c0_137 = arith.constant 0 : index
    %326 = vector.load %arg17[%c40_136, %c0_137] : memref<48x128xf32, #tpu.memory_space<vmem>>, vector<8x128xf32>
    tpu.vector_store %arg17[%c40_136, %c0_137], %325 {strides = array<i32>} : memref<48x128xf32, #tpu.memory_space<vmem>>, vector<8x128xf32>,
    %c0_138 = arith.constant 0 : index
    %c0_139 = arith.constant 0 : index
    %327 = vector.load %arg17[%c0_138, %c0_139] : memref<48x128xf32, #tpu.memory_space<vmem>>, vector<48x128xf32>
    %c0_140 = arith.constant 0 : index
    %c0_141 = arith.constant 0 : index
    %328 = vector.load %arg7[%c0_140, %c0_141] : memref<128x128xf32, #tpu.memory_space<vmem>>, vector<128x128xf32>
    %cst_142 = arith.constant dense<0.000000e+00> : vector<48x128xf32>
    %329 = tpu.matmul %327, %328, %cst_142 {dimension_numbers = #tpu.dot_dimension_numbers<[1], [0], [0], [1], [0, 0, 1, 1], [], []>} : vector<48x128xf32>, vector<128x128xf32>, vector<48x128xf32> -> vector<48x128xf32>
    %c0_143 = arith.constant 0 : index
    %c0_144 = arith.constant 0 : index
    %330 = vector.load %arg8[%c0_143, %c0_144] : memref<1x128xf32, #tpu.memory_space<vmem>>, vector<1x128xf32>
    %331 = vector.broadcast %330 : vector<1x128xf32> to vector<48x128xf32>
    %332 = arith.addf %329, %331 : vector<48x128xf32>
    %cst_145 = arith.constant 0.000000e+00 : f32
    %333 = vector.broadcast %cst_145 : f32 to vector<48x128xf32>
    %334 = arith.maximumf %332, %333 : vector<48x128xf32>
    %c0_146 = arith.constant 0 : index
    %c0_147 = arith.constant 0 : index
    %335 = vector.load %arg9[%c0_146, %c0_147] : memref<128x128xf32, #tpu.memory_space<vmem>>, vector<128x128xf32>
    %cst_148 = arith.constant dense<0.000000e+00> : vector<48x128xf32>
    %336 = tpu.matmul %334, %335, %cst_148 {dimension_numbers = #tpu.dot_dimension_numbers<[1], [0], [0], [1], [0, 0, 1, 1], [], []>} : vector<48x128xf32>, vector<128x128xf32>, vector<48x128xf32> -> vector<48x128xf32>
    %c0_149 = arith.constant 0 : index
    %c0_150 = arith.constant 0 : index
    %337 = vector.load %arg10[%c0_149, %c0_150] : memref<1x128xf32, #tpu.memory_space<vmem>>, vector<1x128xf32>
    %338 = vector.broadcast %337 : vector<1x128xf32> to vector<48x128xf32>
    %339 = arith.addf %336, %338 : vector<48x128xf32>
    %c0_151 = arith.constant 0 : index
    %c0_152 = arith.constant 0 : index
    %340 = vector.load %arg11[%c0_151, %c0_152] : memref<128x128xf32, #tpu.memory_space<vmem>>, vector<128x128xf32>
    %cst_153 = arith.constant dense<0.000000e+00> : vector<48x128xf32>
    %341 = tpu.matmul %339, %340, %cst_153 {dimension_numbers = #tpu.dot_dimension_numbers<[1], [0], [0], [1], [0, 0, 1, 1], [], []>} : vector<48x128xf32>, vector<128x128xf32>, vector<48x128xf32> -> vector<48x128xf32>
    %c0_154 = arith.constant 0 : index
    %c0_155 = arith.constant 0 : index
    %342 = vector.load %arg12[%c0_154, %c0_155] : memref<48x11xi32, #tpu.memory_space<vmem>>, vector<48x11xi32>
    %343 = tpu.iota {dimensions = array<i32: 1>} : vector<48x128xi32>
    %344 = vector.extract_strided_slice %342 {offsets = [0, 0], sizes = [48, 1], strides = [1, 1]} : vector<48x11xi32> to vector<48x1xi32>
    %345 = vector.broadcast %344 : vector<48x1xi32> to vector<48x128xi32>
    %346 = arith.cmpi eq, %343, %345 : vector<48x128xi32>
    %347 = arith.extui %346 : vector<48x128xi1> to vector<48x128xi32>
    %348 = arith.sitofp %347 : vector<48x128xi32> to vector<48x128xf32>
    %349 = vector.extract_strided_slice %342 {offsets = [0, 1], sizes = [48, 1], strides = [1, 1]} : vector<48x11xi32> to vector<48x1xi32>
    %350 = vector.broadcast %349 : vector<48x1xi32> to vector<48x128xi32>
    %351 = arith.cmpi eq, %343, %350 : vector<48x128xi32>
    %352 = arith.extui %351 : vector<48x128xi1> to vector<48x128xi32>
    %353 = arith.sitofp %352 : vector<48x128xi32> to vector<48x128xf32>
    %354 = vector.extract_strided_slice %342 {offsets = [0, 2], sizes = [48, 1], strides = [1, 1]} : vector<48x11xi32> to vector<48x1xi32>
    %355 = vector.broadcast %354 : vector<48x1xi32> to vector<48x128xi32>
    %356 = arith.cmpi eq, %343, %355 : vector<48x128xi32>
    %357 = arith.extui %356 : vector<48x128xi1> to vector<48x128xi32>
    %358 = arith.sitofp %357 : vector<48x128xi32> to vector<48x128xf32>
    %359 = arith.addf %353, %358 : vector<48x128xf32>
    %360 = vector.extract_strided_slice %342 {offsets = [0, 3], sizes = [48, 1], strides = [1, 1]} : vector<48x11xi32> to vector<48x1xi32>
    %361 = vector.broadcast %360 : vector<48x1xi32> to vector<48x128xi32>
    %362 = arith.cmpi eq, %343, %361 : vector<48x128xi32>
    %363 = arith.extui %362 : vector<48x128xi1> to vector<48x128xi32>
    %364 = arith.sitofp %363 : vector<48x128xi32> to vector<48x128xf32>
    %365 = arith.addf %359, %364 : vector<48x128xf32>
    %366 = vector.extract_strided_slice %342 {offsets = [0, 4], sizes = [48, 1], strides = [1, 1]} : vector<48x11xi32> to vector<48x1xi32>
    %367 = vector.broadcast %366 : vector<48x1xi32> to vector<48x128xi32>
    %368 = arith.cmpi eq, %343, %367 : vector<48x128xi32>
    %369 = arith.extui %368 : vector<48x128xi1> to vector<48x128xi32>
    %370 = arith.sitofp %369 : vector<48x128xi32> to vector<48x128xf32>
    %371 = arith.addf %365, %370 : vector<48x128xf32>
    %372 = vector.extract_strided_slice %342 {offsets = [0, 5], sizes = [48, 1], strides = [1, 1]} : vector<48x11xi32> to vector<48x1xi32>
    %373 = vector.broadcast %372 : vector<48x1xi32> to vector<48x128xi32>
    %374 = arith.cmpi eq, %343, %373 : vector<48x128xi32>
    %375 = arith.extui %374 : vector<48x128xi1> to vector<48x128xi32>
    %376 = arith.sitofp %375 : vector<48x128xi32> to vector<48x128xf32>
    %377 = arith.addf %371, %376 : vector<48x128xf32>
    %378 = vector.extract_strided_slice %342 {offsets = [0, 6], sizes = [48, 1], strides = [1, 1]} : vector<48x11xi32> to vector<48x1xi32>
    %379 = vector.broadcast %378 : vector<48x1xi32> to vector<48x128xi32>
    %380 = arith.cmpi eq, %343, %379 : vector<48x128xi32>
    %381 = arith.extui %380 : vector<48x128xi1> to vector<48x128xi32>
    %382 = arith.sitofp %381 : vector<48x128xi32> to vector<48x128xf32>
    %383 = arith.addf %377, %382 : vector<48x128xf32>
    %384 = vector.extract_strided_slice %342 {offsets = [0, 7], sizes = [48, 1], strides = [1, 1]} : vector<48x11xi32> to vector<48x1xi32>
    %385 = vector.broadcast %384 : vector<48x1xi32> to vector<48x128xi32>
    %386 = arith.cmpi eq, %343, %385 : vector<48x128xi32>
    %387 = arith.extui %386 : vector<48x128xi1> to vector<48x128xi32>
    %388 = arith.sitofp %387 : vector<48x128xi32> to vector<48x128xf32>
    %389 = arith.addf %383, %388 : vector<48x128xf32>
    %390 = vector.extract_strided_slice %342 {offsets = [0, 8], sizes = [48, 1], strides = [1, 1]} : vector<48x11xi32> to vector<48x1xi32>
    %391 = vector.broadcast %390 : vector<48x1xi32> to vector<48x128xi32>
    %392 = arith.cmpi eq, %343, %391 : vector<48x128xi32>
    %393 = arith.extui %392 : vector<48x128xi1> to vector<48x128xi32>
    %394 = arith.sitofp %393 : vector<48x128xi32> to vector<48x128xf32>
    %395 = arith.addf %389, %394 : vector<48x128xf32>
    %396 = vector.extract_strided_slice %342 {offsets = [0, 9], sizes = [48, 1], strides = [1, 1]} : vector<48x11xi32> to vector<48x1xi32>
    %397 = vector.broadcast %396 : vector<48x1xi32> to vector<48x128xi32>
    %398 = arith.cmpi eq, %343, %397 : vector<48x128xi32>
    %399 = arith.extui %398 : vector<48x128xi1> to vector<48x128xi32>
    %400 = arith.sitofp %399 : vector<48x128xi32> to vector<48x128xf32>
    %401 = arith.addf %395, %400 : vector<48x128xf32>
    %402 = vector.extract_strided_slice %342 {offsets = [0, 10], sizes = [48, 1], strides = [1, 1]} : vector<48x11xi32> to vector<48x1xi32>
    %403 = vector.broadcast %402 : vector<48x1xi32> to vector<48x128xi32>
    %404 = arith.cmpi eq, %343, %403 : vector<48x128xi32>
    %405 = arith.extui %404 : vector<48x128xi1> to vector<48x128xi32>
    %406 = arith.sitofp %405 : vector<48x128xi32> to vector<48x128xf32>
    %407 = arith.addf %401, %406 : vector<48x128xf32>
    %cst_156 = arith.constant 0.000000e+00 : f32
    %408 = vector.broadcast %cst_156 : f32 to vector<48x128xf32>
    %409 = arith.subf %408, %341 : vector<48x128xf32>
    %cst_157 = arith.constant 0.000000e+00 : f32
    %410 = vector.broadcast %cst_157 : f32 to vector<48x128xf32>
    %411 = arith.maximumf %409, %410 : vector<48x128xf32>
    %412 = vector.broadcast %cst_157 : f32 to vector<48x128xf32>
    %413 = arith.subf %409, %412 : vector<48x128xf32>
    %414 = arith.cmpf one, %413, %413 : vector<48x128xf32>
    %415 = vector.broadcast %cst_157 : f32 to vector<48x128xf32>
    %416 = arith.addf %409, %415 : vector<48x128xf32>
    %417 = math.absf %413 : vector<48x128xf32>
    %cst_158 = arith.constant 0.000000e+00 : f32
    %418 = vector.broadcast %cst_158 : f32 to vector<48x128xf32>
    %419 = arith.subf %418, %417 : vector<48x128xf32>
    %420 = math.exp %419 : vector<48x128xf32>
    %421 = math.log1p %420 : vector<48x128xf32>
    %422 = arith.addf %411, %421 : vector<48x128xf32>
    %423 = arith.select %414, %416, %422 : vector<48x128xi1>, vector<48x128xf32>
    %cst_159 = arith.constant 0.000000e+00 : f32
    %424 = vector.broadcast %cst_159 : f32 to vector<48x128xf32>
    %425 = arith.subf %424, %423 : vector<48x128xf32>
    %426 = arith.mulf %425, %348 : vector<48x128xf32>
    %cst_160 = arith.constant 0.000000e+00 : f32
    %427 = vector.broadcast %cst_160 : f32 to vector<48x128xf32>
    %428 = arith.subf %427, %341 : vector<48x128xf32>
    %cst_161 = arith.constant 0.000000e+00 : f32
    %429 = vector.broadcast %cst_161 : f32 to vector<48x128xf32>
    %430 = arith.subf %429, %428 : vector<48x128xf32>
    %cst_162 = arith.constant 0.000000e+00 : f32
    %431 = vector.broadcast %cst_162 : f32 to vector<48x128xf32>
    %432 = arith.maximumf %430, %431 : vector<48x128xf32>
    %433 = vector.broadcast %cst_162 : f32 to vector<48x128xf32>
    %434 = arith.subf %430, %433 : vector<48x128xf32>
    %435 = arith.cmpf one, %434, %434 : vector<48x128xf32>
    %436 = vector.broadcast %cst_162 : f32 to vector<48x128xf32>
    %437 = arith.addf %430, %436 : vector<48x128xf32>
    %438 = math.absf %434 : vector<48x128xf32>
    %cst_163 = arith.constant 0.000000e+00 : f32
    %439 = vector.broadcast %cst_163 : f32 to vector<48x128xf32>
    %440 = arith.subf %439, %438 : vector<48x128xf32>
    %441 = math.exp %440 : vector<48x128xf32>
    %442 = math.log1p %441 : vector<48x128xf32>
    %443 = arith.addf %432, %442 : vector<48x128xf32>
    %444 = arith.select %435, %437, %443 : vector<48x128xi1>, vector<48x128xf32>
    %cst_164 = arith.constant 0.000000e+00 : f32
    %445 = vector.broadcast %cst_164 : f32 to vector<48x128xf32>
    %446 = arith.subf %445, %444 : vector<48x128xf32>
    %447 = arith.mulf %446, %407 : vector<48x128xf32>
    %448 = arith.addf %426, %447 : vector<48x128xf32>
    %449 = vector.shape_cast %448 : vector<48x128xf32> to vector<1x48x128xf32>
    %cst_165 = arith.constant dense<0.000000e+00> : vector<1xf32>
    %450 = vector.multi_reduction <add>, %449, %cst_165 [1, 2] : vector<1x48x128xf32> to vector<1xf32>
    %451 = vector.shape_cast %450 : vector<1xf32> to vector<1x1x1xf32>
    %452 = vector.extract %451[0, 0, 0] : f32 from vector<1x1x1xf32>
    %cst_166 = arith.constant 0.000000e+00 : f32
    %453 = arith.subf %cst_166, %452 : f32
    %454 = vector.broadcast %453 : f32 to vector<1x1xf32>
    %c0_167 = arith.constant 0 : index
    %c0_168 = arith.constant 0 : index
    %455 = vector.load %arg13[%c0_167, %c0_168] : memref<1x1xf32, #tpu.memory_space<vmem>>, vector<1x1xf32>
    tpu.vector_store %arg13[%c0_167, %c0_168], %454 {strides = array<i32>} : memref<1x1xf32, #tpu.memory_space<vmem>>, vector<1x1xf32>,
    return
  }
}

</mosaic_0001>

<llo_original>
// kernel: tpu_custom_call.1
$region0: #{tpu_custom_call.1}
  #allocation0 [shape = 'u32[]', space=smem, size = 0x4, offset = 0x4, fixed_abs, tag = 'smem constant byte address 0x4 - core index']
  #allocation1 [shape = 'u32[144,128]{1,0:T(1,128)}', space=vmem, size = 0x12000, scoped, tag = 'internal scratch']
  #allocation2 [shape = 'f32[56,512]{1,0:T(8,128)}', space=vmem, size = 0x1c000, scoped, tag = 'scratch operand']
  #allocation3 [shape = 'f32[56,128]{1,0:T(8,128)}', space=vmem, size = 0x7000, scoped, tag = 'scratch operand']
  #allocation4 [shape = 'f32[56,128]{1,0:T(8,128)}', space=vmem, size = 0x7000, scoped, tag = 'scratch operand']
  #allocation5 [shape = 'f32[48,128]{1,0:T(8,128)}', space=vmem, size = 0x6000, scoped, tag = 'scratch operand']
  %s0 = inlined_call_operand.vmem [shape: f32[56,128], index: 0, kind: input, shape index: {}]
  %s1 = inlined_call_operand.hbm [shape: f32[128,512], index: 1, kind: input, shape index: {}]
  %s2 = inlined_call_operand.hbm [shape: f32[128,512], index: 2, kind: input, shape index: {}]
  %s3 = inlined_call_operand.vmem [shape: f32[1,512], index: 3, kind: input, shape index: {}]
  %s4 = inlined_call_operand.hbm [shape: f32[128,512], index: 4, kind: input, shape index: {}]
  %s5 = inlined_call_operand.hbm [shape: f32[128,512], index: 5, kind: input, shape index: {}]
  %s6 = inlined_call_operand.vmem [shape: f32[1,512], index: 6, kind: input, shape index: {}]
  %s7 = inlined_call_operand.hbm [shape: f32[128,128], index: 7, kind: input, shape index: {}]
  %s8 = inlined_call_operand.vmem [shape: f32[1,128], index: 8, kind: input, shape index: {}]
  %s9 = inlined_call_operand.hbm [shape: f32[128,128], index: 9, kind: input, shape index: {}]
  %s10 = inlined_call_operand.vmem [shape: f32[1,128], index: 10, kind: input, shape index: {}]
  %s11 = inlined_call_operand.hbm [shape: f32[128,128], index: 11, kind: input, shape index: {}]
  %s12 = inlined_call_operand.vmem [shape: s32[48,11], index: 12, kind: input, shape index: {}]
  %s13 = inlined_call_operand.hbm [shape: f32[1,1], index: 13, kind: output, shape index: {}]
  %s14 = sld [smem:[#allocation0]]
  $region90: #{tpu_custom_call.1} parent=0
    _
  %s16 = ssub.s32 1, %s14
  %s17 = scalar_select 0, %s16, %s14
  $region1: #{tpu_custom_call.1} parent=0
    #allocation6 [shape = 'u8[262144]{0}', space=vmem, size = 0x40000, scoped, tag = 'input window, operand 1, single buffered']
    #allocation7 [shape = 's32[1]{0}', space=sflag, size = 0x4, scoped, tag = 'scoped memory for tpu_custom_call.1']
    #allocation8 [shape = 's32[1]{0}', space=sflag, size = 0x4, scoped, tag = 'scoped memory for tpu_custom_call.1']
    #allocation9 [shape = 'u8[262144]{0}', space=vmem, size = 0x40000, scoped, tag = 'input window, operand 2, single buffered']
    #allocation10 [shape = 's32[1]{0}', space=sflag, size = 0x4, scoped, tag = 'scoped memory for tpu_custom_call.1']
    #allocation11 [shape = 'u8[262144]{0}', space=vmem, size = 0x40000, scoped, tag = 'input window, operand 4, single buffered']
    #allocation12 [shape = 'u8[262144]{0}', space=vmem, size = 0x40000, scoped, tag = 'input window, operand 5, single buffered']
    #allocation13 [shape = 's32[1]{0}', space=sflag, size = 0x4, scoped, tag = 'scoped memory for tpu_custom_call.1']
    #allocation14 [shape = 'u8[65536]{0}', space=vmem, size = 0x10000, scoped, tag = 'input window, operand 7, single buffered']
    #allocation15 [shape = 'u8[65536]{0}', space=vmem, size = 0x10000, scoped, tag = 'input window, operand 9, single buffered']
    #allocation16 [shape = 's32[1]{0}', space=sflag, size = 0x4, scoped, tag = 'scoped memory for tpu_custom_call.1']
    #allocation17 [shape = 'u8[65536]{0}', space=vmem, size = 0x10000, scoped, tag = 'input window, operand 11, single buffered']
    #allocation18 [shape = 'u8[512]{0}', space=vmem, size = 0x400, scoped, tag = 'output window, operand 0, single buffered']
    %18 = vsyncpa [#allocation7], 0
    %19 = vsyncpa [#allocation10], 0
    %20 = vsyncpa [#allocation13], 0
    %21 = vsyncpa [#allocation16], 0
    %22 = vsyncpa [#allocation8], 0
    // Predicated region
    $region2: #{tpu_custom_call.1} parent=1 // pred_check
      _
    $region3: #{tpu_custom_call.1} parent=1 // pred_check_branch
      %24 = sbr.rel (0) target = $region5
    $region4: #{tpu_custom_call.1} parent=1 // pred_region
      _
    $region5: #{tpu_custom_call.1} parent=1 // pred_fallthru
      _
    // Predicated region
    $region6: #{tpu_custom_call.1} parent=1 // pred_check
      _
    $region7: #{tpu_custom_call.1} parent=1 // pred_check_branch
      %26 = sbr.rel (0) target = $region9
    $region8: #{tpu_custom_call.1} parent=1 // pred_region
      %s28 = ssub.s32 8192, 8192
      %29 = vsyncadd [#allocation7], %s28
      %s30 = sshll.u32 [#allocation6], 4
      %s31 = int_to_ptr.vmem [resolvable:$true] %s30
      %36 = dma.hbm_to_vmem [thread:$0]  %s1, 8192, %s31, [#allocation7], 512, 512, 32
    $region9: #{tpu_custom_call.1} parent=1 // pred_fallthru
      _
    // Predicated region
    $region10: #{tpu_custom_call.1} parent=1 // pred_check
      _
    $region11: #{tpu_custom_call.1} parent=1 // pred_check_branch
      %38 = sbr.rel (0) target = $region13
    $region12: #{tpu_custom_call.1} parent=1 // pred_region
      %s40 = ssub.s32 8192, 8192
      %41 = vsyncadd [#allocation10], %s40
      %s42 = sshll.u32 [#allocation9], 4
      %s43 = int_to_ptr.vmem [resolvable:$true] %s42
      %48 = dma.hbm_to_vmem [thread:$0]  %s2, 8192, %s43, [#allocation10], 512, 512, 32
    $region13: #{tpu_custom_call.1} parent=1 // pred_fallthru
      _
    // Predicated region
    $region14: #{tpu_custom_call.1} parent=1 // pred_check
      _
    $region15: #{tpu_custom_call.1} parent=1 // pred_check_branch
      %50 = sbr.rel (0) target = $region17
    $region16: #{tpu_custom_call.1} parent=1 // pred_region
      _
    $region17: #{tpu_custom_call.1} parent=1 // pred_fallthru
      _
    // Predicated region
    $region18: #{tpu_custom_call.1} parent=1 // pred_check
      _
    $region19: #{tpu_custom_call.1} parent=1 // pred_check_branch
      %52 = sbr.rel (0) target = $region21
    $region20: #{tpu_custom_call.1} parent=1 // pred_region
      %s54 = ssub.s32 8192, 8192
      %55 = vsyncadd [#allocation10], %s54
      %s56 = sshll.u32 [#allocation11], 4
      %s57 = int_to_ptr.vmem [resolvable:$true] %s56
      %62 = dma.hbm_to_vmem [thread:$0]  %s4, 8192, %s57, [#allocation10], 512, 512, 32
    $region21: #{tpu_custom_call.1} parent=1 // pred_fallthru
      _
    // Predicated region
    $region22: #{tpu_custom_call.1} parent=1 // pred_check
      _
    $region23: #{tpu_custom_call.1} parent=1 // pred_check_branch
      %64 = sbr.rel (0) target = $region25
    $region24: #{tpu_custom_call.1} parent=1 // pred_region
      %s66 = ssub.s32 8192, 8192
      %67 = vsyncadd [#allocation13], %s66
      %s68 = sshll.u32 [#allocation12], 4
      %s69 = int_to_ptr.vmem [resolvable:$true] %s68
      %74 = dma.hbm_to_vmem [thread:$0]  %s5, 8192, %s69, [#allocation13], 512, 512, 32
    $region25: #{tpu_custom_call.1} parent=1 // pred_fallthru
      _
    // Predicated region
    $region26: #{tpu_custom_call.1} parent=1 // pred_check
      _
    $region27: #{tpu_custom_call.1} parent=1 // pred_check_branch
      %76 = sbr.rel (0) target = $region29
    $region28: #{tpu_custom_call.1} parent=1 // pred_region
      _
    $region29: #{tpu_custom_call.1} parent=1 // pred_fallthru
      _
    // Predicated region
    $region30: #{tpu_custom_call.1} parent=1 // pred_check
      _
    $region31: #{tpu_custom_call.1} parent=1 // pred_check_branch
      %78 = sbr.rel (0) target = $region33
    $region32: #{tpu_custom_call.1} parent=1 // pred_region
      %s80 = ssub.s32 2048, 2048
      %81 = vsyncadd [#allocation13], %s80
      %s82 = sshll.u32 [#allocation14], 4
      %s83 = int_to_ptr.vmem [resolvable:$true] %s82
      %88 = dma.hbm_to_vmem [thread:$0]  %s7, 2048, %s83, [#allocation13], 128, 128, 8
    $region33: #{tpu_custom_call.1} parent=1 // pred_fallthru
      _
    // Predicated region
    $region34: #{tpu_custom_call.1} parent=1 // pred_check
      _
    $region35: #{tpu_custom_call.1} parent=1 // pred_check_branch
      %90 = sbr.rel (0) target = $region37
    $region36: #{tpu_custom_call.1} parent=1 // pred_region
      _
    $region37: #{tpu_custom_call.1} parent=1 // pred_fallthru
      _
    // Predicated region
    $region38: #{tpu_custom_call.1} parent=1 // pred_check
      _
    $region39: #{tpu_custom_call.1} parent=1 // pred_check_branch
      %92 = sbr.rel (0) target = $region41
    $region40: #{tpu_custom_call.1} parent=1 // pred_region
      %s94 = ssub.s32 2048, 2048
      %95 = vsyncadd [#allocation16], %s94
      %s96 = sshll.u32 [#allocation15], 4
      %s97 = int_to_ptr.vmem [resolvable:$true] %s96
      %102 = dma.hbm_to_vmem [thread:$0]  %s9, 2048, %s97, [#allocation16], 128, 128, 8
    $region41: #{tpu_custom_call.1} parent=1 // pred_fallthru
      _
    // Predicated region
    $region42: #{tpu_custom_call.1} parent=1 // pred_check
      _
    $region43: #{tpu_custom_call.1} parent=1 // pred_check_branch
      %104 = sbr.rel (0) target = $region45
    $region44: #{tpu_custom_call.1} parent=1 // pred_region
      _
    $region45: #{tpu_custom_call.1} parent=1 // pred_fallthru
      _
    // Predicated region
    $region46: #{tpu_custom_call.1} parent=1 // pred_check
      _
    $region47: #{tpu_custom_call.1} parent=1 // pred_check_branch
      %106 = sbr.rel (0) target = $region49
    $region48: #{tpu_custom_call.1} parent=1 // pred_region
      %s108 = ssub.s32 2048, 2048
      %109 = vsyncadd [#allocation16], %s108
      %s110 = sshll.u32 [#allocation17], 4
      %s111 = int_to_ptr.vmem [resolvable:$true] %s110
      %116 = dma.hbm_to_vmem [thread:$0]  %s11, 2048, %s111, [#allocation16], 128, 128, 8
    $region49: #{tpu_custom_call.1} parent=1 // pred_fallthru
      _
    // Predicated region
    $region50: #{tpu_custom_call.1} parent=1 // pred_check
      _
    $region51: #{tpu_custom_call.1} parent=1 // pred_check_branch
      %118 = sbr.rel (0) target = $region53
    $region52: #{tpu_custom_call.1} parent=1 // pred_region
      _
    $region53: #{tpu_custom_call.1} parent=1 // pred_fallthru
      _
    // Predicated region
    $region54: #{tpu_custom_call.1} parent=1 // pred_check
      _
    $region55: #{tpu_custom_call.1} parent=1 // pred_check_branch
      %120 = sbr.rel (0) target = $region57
    $region56: #{tpu_custom_call.1} parent=1 // pred_region
      %121 = dma.done [#allocation7], 8192
    $region57: #{tpu_custom_call.1} parent=1 // pred_fallthru
      _
    // Predicated region
    $region58: #{tpu_custom_call.1} parent=1 // pred_check
      _
    $region59: #{tpu_custom_call.1} parent=1 // pred_check_branch
      %123 = sbr.rel (0) target = $region61
    $region60: #{tpu_custom_call.1} parent=1 // pred_region
      %124 = dma.done [#allocation10], 8192
    $region61: #{tpu_custom_call.1} parent=1 // pred_fallthru
      _
    // Predicated region
    $region62: #{tpu_custom_call.1} parent=1 // pred_check
      _
    $region63: #{tpu_custom_call.1} parent=1 // pred_check_branch
      %126 = sbr.rel (0) target = $region65
    $region64: #{tpu_custom_call.1} parent=1 // pred_region
      %127 = dma.done [#allocation10], 8192
    $region65: #{tpu_custom_call.1} parent=1 // pred_fallthru
      _
    // Predicated region
    $region66: #{tpu_custom_call.1} parent=1 // pred_check
      _
    $region67: #{tpu_custom_call.1} parent=1 // pred_check_branch
      %129 = sbr.rel (0) target = $region69
    $region68: #{tpu_custom_call.1} parent=1 // pred_region
      %130 = dma.done [#allocation13], 8192
    $region69: #{tpu_custom_call.1} parent=1 // pred_fallthru
      _
    // Predicated region
    $region70: #{tpu_custom_call.1} parent=1 // pred_check
      _
    $region71: #{tpu_custom_call.1} parent=1 // pred_check_branch
      %132 = sbr.rel (0) target = $region73
    $region72: #{tpu_custom_call.1} parent=1 // pred_region
      %133 = dma.done [#allocation13], 2048
    $region73: #{tpu_custom_call.1} parent=1 // pred_fallthru
      _
    // Predicated region
    $region74: #{tpu_custom_call.1} parent=1 // pred_check
      _
    $region75: #{tpu_custom_call.1} parent=1 // pred_check_branch
      %135 = sbr.rel (0) target = $region77
    $region76: #{tpu_custom_call.1} parent=1 // pred_region
      %136 = dma.done [#allocation16], 2048
    $region77: #{tpu_custom_call.1} parent=1 // pred_fallthru
      _
    // Predicated region
    $region78: #{tpu_custom_call.1} parent=1 // pred_check
      _
    $region79: #{tpu_custom_call.1} parent=1 // pred_check_branch
      %138 = sbr.rel (0) target = $region81
    $region80: #{tpu_custom_call.1} parent=1 // pred_region
      %139 = dma.done [#allocation16], 2048
    $region81: #{tpu_custom_call.1} parent=1 // pred_fallthru
      _
    %v140 = vld [vmem:[#allocation6] sm:$0xff]
    %v141 = vld [vmem:[#allocation6 + $0x8] sm:$0xff]
    %v142 = vld [vmem:[#allocation6 + $0x10] sm:$0xff]
    %v143 = vld [vmem:[#allocation6 + $0x18] sm:$0xff]
    %v144 = vld [vmem:[#allocation6 + $0x20] sm:$0xff]
    %v145 = vld [vmem:[#allocation6 + $0x28] sm:$0xff]
    %v146 = vld [vmem:[#allocation6 + $0x30] sm:$0xff]
    %v147 = vld [vmem:[#allocation6 + $0x38] sm:$0xff]
    %v148 = vld [vmem:[#allocation6 + $0x40] sm:$0xff]
    %v149 = vld [vmem:[#allocation6 + $0x48] sm:$0xff]
    %v150 = vld [vmem:[#allocation6 + $0x50] sm:$0xff]
    %v151 = vld [vmem:[#allocation6 + $0x58] sm:$0xff]
    %v152 = vld [vmem:[#allocation6 + $0x60] sm:$0xff]
    %v153 = vld [vmem:[#allocation6 + $0x68] sm:$0xff]
    %v154 = vld [vmem:[#allocation6 + $0x70] sm:$0xff]
    %v155 = vld [vmem:[#allocation6 + $0x78] sm:$0xff]
    %v156 = vld [vmem:[#allocation6 + $0x80] sm:$0xff]
    %v157 = vld [vmem:[#allocation6 + $0x88] sm:$0xff]
    %v158 = vld [vmem:[#allocation6 + $0x90] sm:$0xff]
    %v159 = vld [vmem:[#allocation6 + $0x98] sm:$0xff]
    %v160 = vld [vmem:[#allocation6 + $0xa0] sm:$0xff]
    %v161 = vld [vmem:[#allocation6 + $0xa8] sm:$0xff]
    %v162 = vld [vmem:[#allocation6 + $0xb0] sm:$0xff]
    %v163 = vld [vmem:[#allocation6 + $0xb8] sm:$0xff]
    %v164 = vld [vmem:[#allocation6 + $0xc0] sm:$0xff]
    %v165 = vld [vmem:[#allocation6 + $0xc8] sm:$0xff]
    %v166 = vld [vmem:[#allocation6 + $0xd0] sm:$0xff]
    %v167 = vld [vmem:[#allocation6 + $0xd8] sm:$0xff]
    %v168 = vld [vmem:[#allocation6 + $0xe0] sm:$0xff]
    %v169 = vld [vmem:[#allocation6 + $0xe8] sm:$0xff]
    %v170 = vld [vmem:[#allocation6 + $0xf0] sm:$0xff]
    %v171 = vld [vmem:[#allocation6 + $0xf8] sm:$0xff]
    %v172 = vld [vmem:[#allocation6 + $0x100] sm:$0xff]
    %v173 = vld [vmem:[#allocation6 + $0x108] sm:$0xff]
    %v174 = vld [vmem:[#allocation6 + $0x110] sm:$0xff]
    %v175 = vld [vmem:[#allocation6 + $0x118] sm:$0xff]
    %v176 = vld [vmem:[#allocation6 + $0x120] sm:$0xff]
    %v177 = vld [vmem:[#allocation6 + $0x128] sm:$0xff]
    %v178 = vld [vmem:[#allocation6 + $0x130] sm:$0xff]
    %v179 = vld [vmem:[#allocation6 + $0x138] sm:$0xff]
    %v180 = vld [vmem:[#allocation6 + $0x140] sm:$0xff]
    %v181 = vld [vmem:[#allocation6 + $0x148] sm:$0xff]
    %v182 = vld [vmem:[#allocation6 + $0x150] sm:$0xff]
    %v183 = vld [vmem:[#allocation6 + $0x158] sm:$0xff]
    %v184 = vld [vmem:[#allocation6 + $0x160] sm:$0xff]
    %v185 = vld [vmem:[#allocation6 + $0x168] sm:$0xff]
    %v186 = vld [vmem:[#allocation6 + $0x170] sm:$0xff]
    %v187 = vld [vmem:[#allocation6 + $0x178] sm:$0xff]
    %v188 = vld [vmem:[#allocation6 + $0x180] sm:$0xff]
    %v189 = vld [vmem:[#allocation6 + $0x188] sm:$0xff]
    %v190 = vld [vmem:[#allocation6 + $0x190] sm:$0xff]
    %v191 = vld [vmem:[#allocation6 + $0x198] sm:$0xff]
    %v192 = vld [vmem:[#allocation6 + $0x1a0] sm:$0xff]
    %v193 = vld [vmem:[#allocation6 + $0x1a8] sm:$0xff]
    %v194 = vld [vmem:[#allocation6 + $0x1b0] sm:$0xff]
    %v195 = vld [vmem:[#allocation6 + $0x1b8] sm:$0xff]
    %v196 = vld [vmem:[#allocation6 + $0x1c0] sm:$0xff]
    %v197 = vld [vmem:[#allocation6 + $0x1c8] sm:$0xff]
    %v198 = vld [vmem:[#allocation6 + $0x1d0] sm:$0xff]
    %v199 = vld [vmem:[#allocation6 + $0x1d8] sm:$0xff]
    %v200 = vld [vmem:[#allocation6 + $0x1e0] sm:$0xff]
    %v201 = vld [vmem:[#allocation6 + $0x1e8] sm:$0xff]
    %v202 = vld [vmem:[#allocation6 + $0x1f0] sm:$0xff]
    %v203 = vld [vmem:[#allocation6 + $0x1f8] sm:$0xff]
    %v204 = vld [vmem:[#allocation9] sm:$0xff]
    %v205 = vld [vmem:[#allocation9 + $0x8] sm:$0xff]
    %v206 = vld [vmem:[#allocation9 + $0x10] sm:$0xff]
    %v207 = vld [vmem:[#allocation9 + $0x18] sm:$0xff]
    %v208 = vld [vmem:[#allocation9 + $0x20] sm:$0xff]
    %v209 = vld [vmem:[#allocation9 + $0x28] sm:$0xff]
    %v210 = vld [vmem:[#allocation9 + $0x30] sm:$0xff]
    %v211 = vld [vmem:[#allocation9 + $0x38] sm:$0xff]
    %v212 = vld [vmem:[#allocation9 + $0x40] sm:$0xff]
    %v213 = vld [vmem:[#allocation9 + $0x48] sm:$0xff]
    %v214 = vld [vmem:[#allocation9 + $0x50] sm:$0xff]
    %v215 = vld [vmem:[#allocation9 + $0x58] sm:$0xff]
    %v216 = vld [vmem:[#allocation9 + $0x60] sm:$0xff]
    %v217 = vld [vmem:[#allocation9 + $0x68] sm:$0xff]
    %v218 = vld [vmem:[#allocation9 + $0x70] sm:$0xff]
    %v219 = vld [vmem:[#allocation9 + $0x78] sm:$0xff]
    %v220 = vld [vmem:[#allocation9 + $0x80] sm:$0xff]
    %v221 = vld [vmem:[#allocation9 + $0x88] sm:$0xff]
    %v222 = vld [vmem:[#allocation9 + $0x90] sm:$0xff]
    %v223 = vld [vmem:[#allocation9 + $0x98] sm:$0xff]
    %v224 = vld [vmem:[#allocation9 + $0xa0] sm:$0xff]
    %v225 = vld [vmem:[#allocation9 + $0xa8] sm:$0xff]
    %v226 = vld [vmem:[#allocation9 + $0xb0] sm:$0xff]
    %v227 = vld [vmem:[#allocation9 + $0xb8] sm:$0xff]
    %v228 = vld [vmem:[#allocation9 + $0xc0] sm:$0xff]
    %v229 = vld [vmem:[#allocation9 + $0xc8] sm:$0xff]
    %v230 = vld [vmem:[#allocation9 + $0xd0] sm:$0xff]
    %v231 = vld [vmem:[#allocation9 + $0xd8] sm:$0xff]
    %v232 = vld [vmem:[#allocation9 + $0xe0] sm:$0xff]
    %v233 = vld [vmem:[#allocation9 + $0xe8] sm:$0xff]
    %v234 = vld [vmem:[#allocation9 + $0xf0] sm:$0xff]
    %v235 = vld [vmem:[#allocation9 + $0xf8] sm:$0xff]
    %v236 = vld [vmem:[#allocation9 + $0x100] sm:$0xff]
    %v237 = vld [vmem:[#allocation9 + $0x108] sm:$0xff]
    %v238 = vld [vmem:[#allocation9 + $0x110] sm:$0xff]
    %v239 = vld [vmem:[#allocation9 + $0x118] sm:$0xff]
    %v240 = vld [vmem:[#allocation9 + $0x120] sm:$0xff]
    %v241 = vld [vmem:[#allocation9 + $0x128] sm:$0xff]
    %v242 = vld [vmem:[#allocation9 + $0x130] sm:$0xff]
    %v243 = vld [vmem:[#allocation9 + $0x138] sm:$0xff]
    %v244 = vld [vmem:[#allocation9 + $0x140] sm:$0xff]
    %v245 = vld [vmem:[#allocation9 + $0x148] sm:$0xff]
    %v246 = vld [vmem:[#allocation9 + $0x150] sm:$0xff]
    %v247 = vld [vmem:[#allocation9 + $0x158] sm:$0xff]
    %v248 = vld [vmem:[#allocation9 + $0x160] sm:$0xff]
    %v249 = vld [vmem:[#allocation9 + $0x168] sm:$0xff]
    %v250 = vld [vmem:[#allocation9 + $0x170] sm:$0xff]
    %v251 = vld [vmem:[#allocation9 + $0x178] sm:$0xff]
    %v252 = vld [vmem:[#allocation9 + $0x180] sm:$0xff]
    %v253 = vld [vmem:[#allocation9 + $0x188] sm:$0xff]
    %v254 = vld [vmem:[#allocation9 + $0x190] sm:$0xff]
    %v255 = vld [vmem:[#allocation9 + $0x198] sm:$0xff]
    %v256 = vld [vmem:[#allocation9 + $0x1a0] sm:$0xff]
    %v257 = vld [vmem:[#allocation9 + $0x1a8] sm:$0xff]
    %v258 = vld [vmem:[#allocation9 + $0x1b0] sm:$0xff]
    %v259 = vld [vmem:[#allocation9 + $0x1b8] sm:$0xff]
    %v260 = vld [vmem:[#allocation9 + $0x1c0] sm:$0xff]
    %v261 = vld [vmem:[#allocation9 + $0x1c8] sm:$0xff]
    %v262 = vld [vmem:[#allocation9 + $0x1d0] sm:$0xff]
    %v263 = vld [vmem:[#allocation9 + $0x1d8] sm:$0xff]
    %v264 = vld [vmem:[#allocation9 + $0x1e0] sm:$0xff]
    %v265 = vld [vmem:[#allocation9 + $0x1e8] sm:$0xff]
    %v266 = vld [vmem:[#allocation9 + $0x1f0] sm:$0xff]
    %v267 = vld [vmem:[#allocation9 + $0x1f8] sm:$0xff]
    %v268 = vld [vmem:[%s3] sm:$0xf]
    %v269 = vld [vmem:[%s0] sm:$0xff]
    %v270 = vld [vmem:[%s0 + $0x8] sm:$0xff]
    %v271 = vld [vmem:[%s0 + $0x10] sm:$0xff]
    %v272 = vld [vmem:[%s0 + $0x18] sm:$0xff]
    %v273 = vld [vmem:[%s0 + $0x20] sm:$0xff]
    %v274 = vld [vmem:[%s0 + $0x28] sm:$0xff]
    %v275 = vld [vmem:[%s0 + $0x30] sm:$0xff]
    %v277 = vlaneseq
    %v278 = vshrl.u32 %v277, 7
    %v279 = vsub.s32 0, %v278
    %v280 = vrot.slane %v268, %v279
    %v281 = vlaneseq
    %v282 = vshrl.u32 %v281, 7
    %v283 = vsub.s32 1, %v282
    %v284 = vrot.slane %v268, %v283
    %v285 = vlaneseq
    %v286 = vshrl.u32 %v285, 7
    %v287 = vsub.s32 2, %v286
    %v288 = vrot.slane %v268, %v287
    %v289 = vlaneseq
    %v290 = vshrl.u32 %v289, 7
    %v291 = vsub.s32 3, %v290
    %v292 = vrot.slane %v268, %v291
    %297 = vmatprep.subr.mxu0 %v141
    %298 = vmatpush1.msra.mxu0 %v140
    %299 = vmatprep.subr.mxu0 %v145
    %300 = vmatpush1.msra.mxu0 %v144
    %301 = vmatprep.subr.mxu0 %v149
    %302 = vmatpush1.msra.mxu0 %v148
    %303 = vmatprep.subr.mxu0 %v153
    %304 = vmatpush1.msra.mxu0 %v152
    %305 = vmatprep.subr.mxu0 %v157
    %306 = vmatpush1.msra.mxu0 %v156
    %307 = vmatprep.subr.mxu0 %v161
    %308 = vmatpush1.msra.mxu0 %v160
    %309 = vmatprep.subr.mxu0 %v165
    %310 = vmatpush1.msra.mxu0 %v164
    %311 = vmatprep.subr.mxu0 %v169
    %312 = vmatpush1.msra.mxu0 %v168
    %313 = vmatprep.subr.mxu0 %v173
    %314 = vmatpush1.msra.mxu0 %v172
    %315 = vmatprep.subr.mxu0 %v177
    %316 = vmatpush1.msra.mxu0 %v176
    %317 = vmatprep.subr.mxu0 %v181
    %318 = vmatpush1.msra.mxu0 %v180
    %319 = vmatprep.subr.mxu0 %v185
    %320 = vmatpush1.msra.mxu0 %v184
    %321 = vmatprep.subr.mxu0 %v189
    %322 = vmatpush1.msra.mxu0 %v188
    %323 = vmatprep.subr.mxu0 %v193
    %324 = vmatpush1.msra.mxu0 %v192
    %325 = vmatprep.subr.mxu0 %v197
    %326 = vmatpush1.msra.mxu0 %v196
    %327 = vmatprep.subr.mxu0 %v201
    %328 = vmatpush1.msra.mxu0 %v200
    %329 = vmatprep.subr.mxu0 0.0
    %330 = vmatpush1.msra.mxu0 0.0
    %331 = vmatprep.subr.mxu0 0.0
    %332 = vmatpush1.msra.mxu0 0.0
    %333 = vmatprep.subr.mxu0 0.0
    %334 = vmatpush1.msra.mxu0 0.0
    %335 = vmatprep.subr.mxu0 0.0
    %336 = vmatpush1.msra.mxu0 0.0
    %337 = vmatprep.subr.mxu0 0.0
    %338 = vmatpush1.msra.mxu0 0.0
    %339 = vmatprep.subr.mxu0 0.0
    %340 = vmatpush1.msra.mxu0 0.0
    %341 = vmatprep.subr.mxu0 0.0
    %342 = vmatpush1.msra.mxu0 0.0
    %343 = vmatprep.subr.mxu0 0.0
    %344 = vmatpush1.msra.mxu0 0.0
    %345 = vmatprep.subr.mxu0 0.0
    %346 = vmatpush1.msra.mxu0 0.0
    %347 = vmatprep.subr.mxu0 0.0
    %348 = vmatpush1.msra.mxu0 0.0
    %349 = vmatprep.subr.mxu0 0.0
    %350 = vmatpush1.msra.mxu0 0.0
    %351 = vmatprep.subr.mxu0 0.0
    %352 = vmatpush1.msra.mxu0 0.0
    %353 = vmatprep.subr.mxu0 0.0
    %354 = vmatpush1.msra.mxu0 0.0
    %355 = vmatprep.subr.mxu0 0.0
    %356 = vmatpush1.msra.mxu0 0.0
    %357 = vmatprep.subr.mxu0 0.0
    %358 = vmatpush1.msra.mxu0 0.0
    %359 = vmatprep.subr.mxu0 0.0
    %360 = vmatpush1.msra.mxu0 0.0
    %361 = vmatprep.mubr.f32.mxu0 0.0
    %362 = vmatmul.mubr.f32.gmra.mrb[0].mxu0 %v269
    %v363 = vpop.f32.mrb[0].mxu0
    %v364 = vadd.f32 %v280, %v363
    %v365 = vpop.f32.mrb[0].mxu0
    %v366 = vadd.f32 %v284, %v365
    %367 = vmatprep.mubr.f32.mxu0 0.0
    %368 = vmatmul.mubr.f32.gmra.mrb[0].mxu0 %v270
    %v369 = vpop.f32.mrb[0].mxu0
    %v370 = vadd.f32 %v280, %v369
    %v371 = vpop.f32.mrb[0].mxu0
    %v372 = vadd.f32 %v284, %v371
    %373 = vmatprep.mubr.f32.mxu0 0.0
    %374 = vmatmul.mubr.f32.gmra.mrb[0].mxu0 %v271
    %v375 = vpop.f32.mrb[0].mxu0
    %v376 = vadd.f32 %v280, %v375
    %v377 = vpop.f32.mrb[0].mxu0
    %v378 = vadd.f32 %v284, %v377
    %379 = vmatprep.mubr.f32.mxu0 0.0
    %380 = vmatmul.mubr.f32.gmra.mrb[0].mxu0 %v272
    %v381 = vpop.f32.mrb[0].mxu0
    %v382 = vadd.f32 %v280, %v381
    %v383 = vpop.f32.mrb[0].mxu0
    %v384 = vadd.f32 %v284, %v383
    %385 = vmatprep.mubr.f32.mxu0 0.0
    %386 = vmatmul.mubr.f32.gmra.mrb[0].mxu0 %v273
    %v387 = vpop.f32.mrb[0].mxu0
    %v388 = vadd.f32 %v280, %v387
    %v389 = vpop.f32.mrb[0].mxu0
    %v390 = vadd.f32 %v284, %v389
    %391 = vmatprep.mubr.f32.mxu0 0.0
    %392 = vmatmul.mubr.f32.gmra.mrb[0].mxu0 %v274
    %v393 = vpop.f32.mrb[0].mxu0
    %v394 = vadd.f32 %v280, %v393
    %v395 = vpop.f32.mrb[0].mxu0
    %v396 = vadd.f32 %v284, %v395
    %397 = vmatprep.mubr.f32.mxu0 0.0
    %398 = vmatmul.mubr.f32.gmra.mrb[0].mxu0 %v275
    %v399 = vpop.f32.mrb[0].mxu0
    %v400 = vadd.f32 %v280, %v399
    %v401 = vpop.f32.mrb[0].mxu0
    %v402 = vadd.f32 %v284, %v401
    %403 = vdwg.mxu0
    %404 = vmatprep.subr.mxu0 %v143
    %405 = vmatpush1.msra.mxu0 %v142
    %406 = vmatprep.subr.mxu0 %v147
    %407 = vmatpush1.msra.mxu0 %v146
    %408 = vmatprep.subr.mxu0 %v151
    %409 = vmatpush1.msra.mxu0 %v150
    %410 = vmatprep.subr.mxu0 %v155
    %411 = vmatpush1.msra.mxu0 %v154
    %412 = vmatprep.subr.mxu0 %v159
    %413 = vmatpush1.msra.mxu0 %v158
    %414 = vmatprep.subr.mxu0 %v163
    %415 = vmatpush1.msra.mxu0 %v162
    %416 = vmatprep.subr.mxu0 %v167
    %417 = vmatpush1.msra.mxu0 %v166
    %418 = vmatprep.subr.mxu0 %v171
    %419 = vmatpush1.msra.mxu0 %v170
    %420 = vmatprep.subr.mxu0 %v175
    %421 = vmatpush1.msra.mxu0 %v174
    %422 = vmatprep.subr.mxu0 %v179
    %423 = vmatpush1.msra.mxu0 %v178
    %424 = vmatprep.subr.mxu0 %v183
    %425 = vmatpush1.msra.mxu0 %v182
    %426 = vmatprep.subr.mxu0 %v187
    %427 = vmatpush1.msra.mxu0 %v186
    %428 = vmatprep.subr.mxu0 %v191
    %429 = vmatpush1.msra.mxu0 %v190
    %430 = vmatprep.subr.mxu0 %v195
    %431 = vmatpush1.msra.mxu0 %v194
    %432 = vmatprep.subr.mxu0 %v199
    %433 = vmatpush1.msra.mxu0 %v198
    %434 = vmatprep.subr.mxu0 %v203
    %435 = vmatpush1.msra.mxu0 %v202
    %436 = vmatprep.subr.mxu0 0.0
    %437 = vmatpush1.msra.mxu0 0.0
    %438 = vmatprep.subr.mxu0 0.0
    %439 = vmatpush1.msra.mxu0 0.0
    %440 = vmatprep.subr.mxu0 0.0
    %441 = vmatpush1.msra.mxu0 0.0
    %442 = vmatprep.subr.mxu0 0.0
    %443 = vmatpush1.msra.mxu0 0.0
    %444 = vmatprep.subr.mxu0 0.0
    %445 = vmatpush1.msra.mxu0 0.0
    %446 = vmatprep.subr.mxu0 0.0
    %447 = vmatpush1.msra.mxu0 0.0
    %448 = vmatprep.subr.mxu0 0.0
    %449 = vmatpush1.msra.mxu0 0.0
    %450 = vmatprep.subr.mxu0 0.0
    %451 = vmatpush1.msra.mxu0 0.0
    %452 = vmatprep.subr.mxu0 0.0
    %453 = vmatpush1.msra.mxu0 0.0
    %454 = vmatprep.subr.mxu0 0.0
    %455 = vmatpush1.msra.mxu0 0.0
    %456 = vmatprep.subr.mxu0 0.0
    %457 = vmatpush1.msra.mxu0 0.0
    %458 = vmatprep.subr.mxu0 0.0
    %459 = vmatpush1.msra.mxu0 0.0
    %460 = vmatprep.subr.mxu0 0.0
    %461 = vmatpush1.msra.mxu0 0.0
    %462 = vmatprep.subr.mxu0 0.0
    %463 = vmatpush1.msra.mxu0 0.0
    %464 = vmatprep.subr.mxu0 0.0
    %465 = vmatpush1.msra.mxu0 0.0
    %466 = vmatprep.subr.mxu0 0.0
    %467 = vmatpush1.msra.mxu0 0.0
    %468 = vmatprep.mubr.f32.mxu0 0.0
    %469 = vmatmul.mubr.f32.gmra.mrb[0].mxu0 %v269
    %v470 = vpop.f32.mrb[0].mxu0
    %v471 = vadd.f32 %v288, %v470
    %v472 = vpop.f32.mrb[0].mxu0
    %v473 = vadd.f32 %v292, %v472
    %474 = vmatprep.mubr.f32.mxu0 0.0
    %475 = vmatmul.mubr.f32.gmra.mrb[0].mxu0 %v270
    %v476 = vpop.f32.mrb[0].mxu0
    %v477 = vadd.f32 %v288, %v476
    %v478 = vpop.f32.mrb[0].mxu0
    %v479 = vadd.f32 %v292, %v478
    %480 = vmatprep.mubr.f32.mxu0 0.0
    %481 = vmatmul.mubr.f32.gmra.mrb[0].mxu0 %v271
    %v482 = vpop.f32.mrb[0].mxu0
    %v483 = vadd.f32 %v288, %v482
    %v484 = vpop.f32.mrb[0].mxu0
    %v485 = vadd.f32 %v292, %v484
    %486 = vmatprep.mubr.f32.mxu0 0.0
    %487 = vmatmul.mubr.f32.gmra.mrb[0].mxu0 %v272
    %v488 = vpop.f32.mrb[0].mxu0
    %v489 = vadd.f32 %v288, %v488
    %v490 = vpop.f32.mrb[0].mxu0
    %v491 = vadd.f32 %v292, %v490
    %492 = vmatprep.mubr.f32.mxu0 0.0
    %493 = vmatmul.mubr.f32.gmra.mrb[0].mxu0 %v273
    %v494 = vpop.f32.mrb[0].mxu0
    %v495 = vadd.f32 %v288, %v494
    %v496 = vpop.f32.mrb[0].mxu0
    %v497 = vadd.f32 %v292, %v496
    %498 = vmatprep.mubr.f32.mxu0 0.0
    %499 = vmatmul.mubr.f32.gmra.mrb[0].mxu0 %v274
    %v500 = vpop.f32.mrb[0].mxu0
    %v501 = vadd.f32 %v288, %v500
    %v502 = vpop.f32.mrb[0].mxu0
    %v503 = vadd.f32 %v292, %v502
    %504 = vmatprep.mubr.f32.mxu0 0.0
    %505 = vmatmul.mubr.f32.gmra.mrb[0].mxu0 %v275
    %v506 = vpop.f32.mrb[0].mxu0
    %v507 = vadd.f32 %v288, %v506
    %v508 = vpop.f32.mrb[0].mxu0
    %v509 = vadd.f32 %v292, %v508
    %510 = vdwg.mxu0
    %511 = vst [vmem:[#allocation2] sm:$0xff] %v364
    %512 = vst [vmem:[#allocation2 + $0x8] sm:$0xff] %v366
    %513 = vst [vmem:[#allocation2 + $0x10] sm:$0xff] %v471
    %514 = vst [vmem:[#allocation2 + $0x18] sm:$0xff] %v473
    %515 = vst [vmem:[#allocation2 + $0x20] sm:$0xff] %v370
    %516 = vst [vmem:[#allocation2 + $0x28] sm:$0xff] %v372
    %517 = vst [vmem:[#allocation2 + $0x30] sm:$0xff] %v477
    %518 = vst [vmem:[#allocation2 + $0x38] sm:$0xff] %v479
    %519 = vst [vmem:[#allocation2 + $0x40] sm:$0xff] %v376
    %520 = vst [vmem:[#allocation2 + $0x48] sm:$0xff] %v378
    %521 = vst [vmem:[#allocation2 + $0x50] sm:$0xff] %v483
    %522 = vst [vmem:[#allocation2 + $0x58] sm:$0xff] %v485
    %523 = vst [vmem:[#allocation2 + $0x60] sm:$0xff] %v382
    %524 = vst [vmem:[#allocation2 + $0x68] sm:$0xff] %v384
    %525 = vst [vmem:[#allocation2 + $0x70] sm:$0xff] %v489
    %526 = vst [vmem:[#allocation2 + $0x78] sm:$0xff] %v491
    %527 = vst [vmem:[#allocation2 + $0x80] sm:$0xff] %v388
    %528 = vst [vmem:[#allocation2 + $0x88] sm:$0xff] %v390
    %529 = vst [vmem:[#allocation2 + $0x90] sm:$0xff] %v495
    %530 = vst [vmem:[#allocation2 + $0x98] sm:$0xff] %v497
    %531 = vst [vmem:[#allocation2 + $0xa0] sm:$0xff] %v394
    %532 = vst [vmem:[#allocation2 + $0xa8] sm:$0xff] %v396
    %533 = vst [vmem:[#allocation2 + $0xb0] sm:$0xff] %v501
    %534 = vst [vmem:[#allocation2 + $0xb8] sm:$0xff] %v503
    %535 = vst [vmem:[#allocation2 + $0xc0] sm:$0xff] %v400
    %536 = vst [vmem:[#allocation2 + $0xc8] sm:$0xff] %v402
    %537 = vst [vmem:[#allocation2 + $0xd0] sm:$0xff] %v507
    %538 = vst [vmem:[#allocation2 + $0xd8] sm:$0xff] %v509
    %v539 = vld [vmem:[#allocation2] sm:$0xff]
    %v540 = vld [vmem:[#allocation2 + $0x8] sm:$0xff]
    %v541 = vld [vmem:[#allocation2 + $0x10] sm:$0xff]
    %v542 = vld [vmem:[#allocation2 + $0x18] sm:$0xff]
    %543 = vmatprep.subr.mxu0 %v205
    %544 = vmatpush1.msra.mxu0 %v204
    %545 = vmatprep.subr.mxu0 %v209
    %546 = vmatpush1.msra.mxu0 %v208
    %547 = vmatprep.subr.mxu0 %v213
    %548 = vmatpush1.msra.mxu0 %v212
    %549 = vmatprep.subr.mxu0 %v217
    %550 = vmatpush1.msra.mxu0 %v216
    %551 = vmatprep.subr.mxu0 %v221
    %552 = vmatpush1.msra.mxu0 %v220
    %553 = vmatprep.subr.mxu0 %v225
    %554 = vmatpush1.msra.mxu0 %v224
    %555 = vmatprep.subr.mxu0 %v229
    %556 = vmatpush1.msra.mxu0 %v228
    %557 = vmatprep.subr.mxu0 %v233
    %558 = vmatpush1.msra.mxu0 %v232
    %559 = vmatprep.subr.mxu0 %v237
    %560 = vmatpush1.msra.mxu0 %v236
    %561 = vmatprep.subr.mxu0 %v241
    %562 = vmatpush1.msra.mxu0 %v240
    %563 = vmatprep.subr.mxu0 %v245
    %564 = vmatpush1.msra.mxu0 %v244
    %565 = vmatprep.subr.mxu0 %v249
    %566 = vmatpush1.msra.mxu0 %v248
    %567 = vmatprep.subr.mxu0 %v253
    %568 = vmatpush1.msra.mxu0 %v252
    %569 = vmatprep.subr.mxu0 %v257
    %570 = vmatpush1.msra.mxu0 %v256
    %571 = vmatprep.subr.mxu0 %v261
    %572 = vmatpush1.msra.mxu0 %v260
    %573 = vmatprep.subr.mxu0 %v265
    %574 = vmatpush1.msra.mxu0 %v264
    %575 = vmatprep.subr.mxu0 0.0
    %576 = vmatpush1.msra.mxu0 0.0
    %577 = vmatprep.subr.mxu0 0.0
    %578 = vmatpush1.msra.mxu0 0.0
    %579 = vmatprep.subr.mxu0 0.0
    %580 = vmatpush1.msra.mxu0 0.0
    %581 = vmatprep.subr.mxu0 0.0
    %582 = vmatpush1.msra.mxu0 0.0
    %583 = vmatprep.subr.mxu0 0.0
    %584 = vmatpush1.msra.mxu0 0.0
    %585 = vmatprep.subr.mxu0 0.0
    %586 = vmatpush1.msra.mxu0 0.0
    %587 = vmatprep.subr.mxu0 0.0
    %588 = vmatpush1.msra.mxu0 0.0
    %589 = vmatprep.subr.mxu0 0.0
    %590 = vmatpush1.msra.mxu0 0.0
    %591 = vmatprep.subr.mxu0 0.0
    %592 = vmatpush1.msra.mxu0 0.0
    %593 = vmatprep.subr.mxu0 0.0
    %594 = vmatpush1.msra.mxu0 0.0
    %595 = vmatprep.subr.mxu0 0.0
    %596 = vmatpush1.msra.mxu0 0.0
    %597 = vmatprep.subr.mxu0 0.0
    %598 = vmatpush1.msra.mxu0 0.0
    %599 = vmatprep.subr.mxu0 0.0
    %600 = vmatpush1.msra.mxu0 0.0
    %601 = vmatprep.subr.mxu0 0.0
    %602 = vmatpush1.msra.mxu0 0.0
    %603 = vmatprep.subr.mxu0 0.0
    %604 = vmatpush1.msra.mxu0 0.0
    %605 = vmatprep.subr.mxu0 0.0
    %606 = vmatpush1.msra.mxu0 0.0
    %607 = vmatprep.mubr.f32.mxu0 0.0
    %608 = vmatmul.mubr.f32.gmra.mrb[0].mxu0 0.0
    %v609 = vpop.f32.mrb[0].mxu0
    %v610 = vadd.f32 0.0, %v609
    %v611 = vpop.f32.mrb[0].mxu0
    %v612 = vadd.f32 0.0, %v611
    %613 = vdwg.mxu0
    %614 = vmatprep.subr.mxu0 %v207
    %615 = vmatpush1.msra.mxu0 %v206
    %616 = vmatprep.subr.mxu0 %v211
    %617 = vmatpush1.msra.mxu0 %v210
    %618 = vmatprep.subr.mxu0 %v215
    %619 = vmatpush1.msra.mxu0 %v214
    %620 = vmatprep.subr.mxu0 %v219
    %621 = vmatpush1.msra.mxu0 %v218
    %622 = vmatprep.subr.mxu0 %v223
    %623 = vmatpush1.msra.mxu0 %v222
    %624 = vmatprep.subr.mxu0 %v227
    %625 = vmatpush1.msra.mxu0 %v226
    %626 = vmatprep.subr.mxu0 %v231
    %627 = vmatpush1.msra.mxu0 %v230
    %628 = vmatprep.subr.mxu0 %v235
    %629 = vmatpush1.msra.mxu0 %v234
    %630 = vmatprep.subr.mxu0 %v239
    %631 = vmatpush1.msra.mxu0 %v238
    %632 = vmatprep.subr.mxu0 %v243
    %633 = vmatpush1.msra.mxu0 %v242
    %634 = vmatprep.subr.mxu0 %v247
    %635 = vmatpush1.msra.mxu0 %v246
    %636 = vmatprep.subr.mxu0 %v251
    %637 = vmatpush1.msra.mxu0 %v250
    %638 = vmatprep.subr.mxu0 %v255
    %639 = vmatpush1.msra.mxu0 %v254
    %640 = vmatprep.subr.mxu0 %v259
    %641 = vmatpush1.msra.mxu0 %v258
    %642 = vmatprep.subr.mxu0 %v263
    %643 = vmatpush1.msra.mxu0 %v262
    %644 = vmatprep.subr.mxu0 %v267
    %645 = vmatpush1.msra.mxu0 %v266
    %646 = vmatprep.subr.mxu0 0.0
    %647 = vmatpush1.msra.mxu0 0.0
    %648 = vmatprep.subr.mxu0 0.0
    %649 = vmatpush1.msra.mxu0 0.0
    %650 = vmatprep.subr.mxu0 0.0
    %651 = vmatpush1.msra.mxu0 0.0
    %652 = vmatprep.subr.mxu0 0.0
    %653 = vmatpush1.msra.mxu0 0.0
    %654 = vmatprep.subr.mxu0 0.0
    %655 = vmatpush1.msra.mxu0 0.0
    %656 = vmatprep.subr.mxu0 0.0
    %657 = vmatpush1.msra.mxu0 0.0
    %658 = vmatprep.subr.mxu0 0.0
    %659 = vmatpush1.msra.mxu0 0.0
    %660 = vmatprep.subr.mxu0 0.0
    %661 = vmatpush1.msra.mxu0 0.0
    %662 = vmatprep.subr.mxu0 0.0
    %663 = vmatpush1.msra.mxu0 0.0
    %664 = vmatprep.subr.mxu0 0.0
    %665 = vmatpush1.msra.mxu0 0.0
    %666 = vmatprep.subr.mxu0 0.0
    %667 = vmatpush1.msra.mxu0 0.0
    %668 = vmatprep.subr.mxu0 0.0
    %669 = vmatpush1.msra.mxu0 0.0
    %670 = vmatprep.subr.mxu0 0.0
    %671 = vmatpush1.msra.mxu0 0.0
    %672 = vmatprep.subr.mxu0 0.0
    %673 = vmatpush1.msra.mxu0 0.0
    %674 = vmatprep.subr.mxu0 0.0
    %675 = vmatpush1.msra.mxu0 0.0
    %676 = vmatprep.subr.mxu0 0.0
    %677 = vmatpush1.msra.mxu0 0.0
    %678 = vmatprep.mubr.f32.mxu0 0.0
    %679 = vmatmul.mubr.f32.gmra.mrb[0].mxu0 0.0
    %v680 = vpop.f32.mrb[0].mxu0
    %v681 = vadd.f32 0.0, %v680
    %v682 = vpop.f32.mrb[0].mxu0
    %v683 = vadd.f32 0.0, %v682
    %684 = vdwg.mxu0
    %v685 = vadd.f32 %v539, %v610
    %v686 = vadd.f32 %v540, %v612
    %v687 = vadd.f32 %v541, %v681
    %v688 = vadd.f32 %v542, %v683
    %v689 = vxor.u32 %v685, 2147483648
    %v690 = vxor.u32 %v686, 2147483648
    %v691 = vxor.u32 %v687, 2147483648
    %v692 = vmul.f32 %v689, 1.442695
    %v693 = vpow.pop %v692
    %v694 = vmul.f32 %v690, 1.442695
    %v695 = vpow.pop %v694
    %v696 = vmul.f32 %v691, 1.442695
    %v697 = vpow.pop %v696
    %v698 = vadd.f32 %v693, 1.0
    %v699 = vadd.f32 %v695, 1.0
    %v700 = vadd.f32 %v697, 1.0
    %v701 = vrcp.pop %v698
    %v702 = vmul.f32 1.0, %v701
    %v703 = vrcp.pop %v699
    %v704 = vmul.f32 1.0, %v703
    %v705 = vrcp.pop %v700
    %v706 = vmul.f32 1.0, %v705
    %v707 = vtanh.pop %v688
    %v708 = vmul.f32 %v704, 0.0
    %v709 = vmul.f32 %v702, %v707
    %v710 = vadd.f32 %v708, %v709
    %v711 = vtanh.pop %v710
    %v712 = vmul.f32 %v706, %v711
    %713 = vst [vmem:[#allocation3] sm:$0xff] %v712
    %v714 = vld [vmem:[#allocation2 + $0x20] sm:$0xff]
    %v715 = vld [vmem:[#allocation2 + $0x28] sm:$0xff]
    %v716 = vld [vmem:[#allocation2 + $0x30] sm:$0xff]
    %v717 = vld [vmem:[#allocation2 + $0x38] sm:$0xff]
    %718 = vmatprep.subr.mxu0 %v205
    %719 = vmatpush1.msra.mxu0 %v204
    %720 = vmatprep.subr.mxu0 %v209
    %721 = vmatpush1.msra.mxu0 %v208
    %722 = vmatprep.subr.mxu0 %v213
    %723 = vmatpush1.msra.mxu0 %v212
    %724 = vmatprep.subr.mxu0 %v217
    %725 = vmatpush1.msra.mxu0 %v216
    %726 = vmatprep.subr.mxu0 %v221
    %727 = vmatpush1.msra.mxu0 %v220
    %728 = vmatprep.subr.mxu0 %v225
    %729 = vmatpush1.msra.mxu0 %v224
    %730 = vmatprep.subr.mxu0 %v229
    %731 = vmatpush1.msra.mxu0 %v228
    %732 = vmatprep.subr.mxu0 %v233
    %733 = vmatpush1.msra.mxu0 %v232
    %734 = vmatprep.subr.mxu0 %v237
    %735 = vmatpush1.msra.mxu0 %v236
    %736 = vmatprep.subr.mxu0 %v241
    %737 = vmatpush1.msra.mxu0 %v240
    %738 = vmatprep.subr.mxu0 %v245
    %739 = vmatpush1.msra.mxu0 %v244
    %740 = vmatprep.subr.mxu0 %v249
    %741 = vmatpush1.msra.mxu0 %v248
    %742 = vmatprep.subr.mxu0 %v253
    %743 = vmatpush1.msra.mxu0 %v252
    %744 = vmatprep.subr.mxu0 %v257
    %745 = vmatpush1.msra.mxu0 %v256
    %746 = vmatprep.subr.mxu0 %v261
    %747 = vmatpush1.msra.mxu0 %v260
    %748 = vmatprep.subr.mxu0 %v265
    %749 = vmatpush1.msra.mxu0 %v264
    %750 = vmatprep.subr.mxu0 0.0
    %751 = vmatpush1.msra.mxu0 0.0
    %752 = vmatprep.subr.mxu0 0.0
    %753 = vmatpush1.msra.mxu0 0.0
    %754 = vmatprep.subr.mxu0 0.0
    %755 = vmatpush1.msra.mxu0 0.0
    %756 = vmatprep.subr.mxu0 0.0
    %757 = vmatpush1.msra.mxu0 0.0
    %758 = vmatprep.subr.mxu0 0.0
    %759 = vmatpush1.msra.mxu0 0.0
    %760 = vmatprep.subr.mxu0 0.0
    %761 = vmatpush1.msra.mxu0 0.0
    %762 = vmatprep.subr.mxu0 0.0
    %763 = vmatpush1.msra.mxu0 0.0
    %764 = vmatprep.subr.mxu0 0.0
    %765 = vmatpush1.msra.mxu0 0.0
    %766 = vmatprep.subr.mxu0 0.0
    %767 = vmatpush1.msra.mxu0 0.0
    %768 = vmatprep.subr.mxu0 0.0
    %769 = vmatpush1.msra.mxu0 0.0
    %770 = vmatprep.subr.mxu0 0.0
    %771 = vmatpush1.msra.mxu0 0.0
    %772 = vmatprep.subr.mxu0 0.0
    %773 = vmatpush1.msra.mxu0 0.0
    %774 = vmatprep.subr.mxu0 0.0
    %775 = vmatpush1.msra.mxu0 0.0
    %776 = vmatprep.subr.mxu0 0.0
    %777 = vmatpush1.msra.mxu0 0.0
    %778 = vmatprep.subr.mxu0 0.0
    %779 = vmatpush1.msra.mxu0 0.0
    %780 = vmatprep.subr.mxu0 0.0
    %781 = vmatpush1.msra.mxu0 0.0
    %782 = vmatprep.mubr.f32.mxu0 0.0
    %783 = vmatmul.mubr.f32.gmra.mrb[0].mxu0 %v712
    %v784 = vpop.f32.mrb[0].mxu0
    %v785 = vadd.f32 0.0, %v784
    %v786 = vpop.f32.mrb[0].mxu0
    %v787 = vadd.f32 0.0, %v786
    %788 = vdwg.mxu0
    %789 = vmatprep.subr.mxu0 %v207
    %790 = vmatpush1.msra.mxu0 %v206
    %791 = vmatprep.subr.mxu0 %v211
    %792 = vmatpush1.msra.mxu0 %v210
    %793 = vmatprep.subr.mxu0 %v215
    %794 = vmatpush1.msra.mxu0 %v214
    %795 = vmatprep.subr.mxu0 %v219
    %796 = vmatpush1.msra.mxu0 %v218
    %797 = vmatprep.subr.mxu0 %v223
    %798 = vmatpush1.msra.mxu0 %v222
    %799 = vmatprep.subr.mxu0 %v227
    %800 = vmatpush1.msra.mxu0 %v226
    %801 = vmatprep.subr.mxu0 %v231
    %802 = vmatpush1.msra.mxu0 %v230
    %803 = vmatprep.subr.mxu0 %v235
    %804 = vmatpush1.msra.mxu0 %v234
    %805 = vmatprep.subr.mxu0 %v239
    %806 = vmatpush1.msra.mxu0 %v238
    %807 = vmatprep.subr.mxu0 %v243
    %808 = vmatpush1.msra.mxu0 %v242
    %809 = vmatprep.subr.mxu0 %v247
    %810 = vmatpush1.msra.mxu0 %v246
    %811 = vmatprep.subr.mxu0 %v251
    %812 = vmatpush1.msra.mxu0 %v250
    %813 = vmatprep.subr.mxu0 %v255
    %814 = vmatpush1.msra.mxu0 %v254
    %815 = vmatprep.subr.mxu0 %v259
    %816 = vmatpush1.msra.mxu0 %v258
    %817 = vmatprep.subr.mxu0 %v263
    %818 = vmatpush1.msra.mxu0 %v262
    %819 = vmatprep.subr.mxu0 %v267
    %820 = vmatpush1.msra.mxu0 %v266
    %821 = vmatprep.subr.mxu0 0.0
    %822 = vmatpush1.msra.mxu0 0.0
    %823 = vmatprep.subr.mxu0 0.0
    %824 = vmatpush1.msra.mxu0 0.0
    %825 = vmatprep.subr.mxu0 0.0
    %826 = vmatpush1.msra.mxu0 0.0
    %827 = vmatprep.subr.mxu0 0.0
    %828 = vmatpush1.msra.mxu0 0.0
    %829 = vmatprep.subr.mxu0 0.0
    %830 = vmatpush1.msra.mxu0 0.0
    %831 = vmatprep.subr.mxu0 0.0
    %832 = vmatpush1.msra.mxu0 0.0
    %833 = vmatprep.subr.mxu0 0.0
    %834 = vmatpush1.msra.mxu0 0.0
    %835 = vmatprep.subr.mxu0 0.0
    %836 = vmatpush1.msra.mxu0 0.0
    %837 = vmatprep.subr.mxu0 0.0
    %838 = vmatpush1.msra.mxu0 0.0
    %839 = vmatprep.subr.mxu0 0.0
    %840 = vmatpush1.msra.mxu0 0.0
    %841 = vmatprep.subr.mxu0 0.0
    %842 = vmatpush1.msra.mxu0 0.0
    %843 = vmatprep.subr.mxu0 0.0
    %844 = vmatpush1.msra.mxu0 0.0
    %845 = vmatprep.subr.mxu0 0.0
    %846 = vmatpush1.msra.mxu0 0.0
    %847 = vmatprep.subr.mxu0 0.0
    %848 = vmatpush1.msra.mxu0 0.0
    %849 = vmatprep.subr.mxu0 0.0
    %850 = vmatpush1.msra.mxu0 0.0
    %851 = vmatprep.subr.mxu0 0.0
    %852 = vmatpush1.msra.mxu0 0.0
    %853 = vmatprep.mubr.f32.mxu0 0.0
    %854 = vmatmul.mubr.f32.gmra.mrb[0].mxu0 %v712
    %v855 = vpop.f32.mrb[0].mxu0
    %v856 = vadd.f32 0.0, %v855
    %v857 = vpop.f32.mrb[0].mxu0
    %v858 = vadd.f32 0.0, %v857
    %859 = vdwg.mxu0
    %v860 = vadd.f32 %v714, %v785
    %v861 = vadd.f32 %v715, %v787
    %v862 = vadd.f32 %v716, %v856
    %v863 = vadd.f32 %v717, %v858
    %v864 = vxor.u32 %v860, 2147483648
    %v865 = vxor.u32 %v861, 2147483648
    %v866 = vxor.u32 %v862, 2147483648
    %v867 = vmul.f32 %v864, 1.442695
    %v868 = vpow.pop %v867
    %v869 = vmul.f32 %v865, 1.442695
    %v870 = vpow.pop %v869
    %v871 = vmul.f32 %v866, 1.442695
    %v872 = vpow.pop %v871
    %v873 = vadd.f32 %v868, 1.0
    %v874 = vadd.f32 %v870, 1.0
    %v875 = vadd.f32 %v872, 1.0
    %v876 = vrcp.pop %v873
    %v877 = vmul.f32 1.0, %v876
    %v878 = vrcp.pop %v874
    %v879 = vmul.f32 1.0, %v878
    %v880 = vrcp.pop %v875
    %v881 = vmul.f32 1.0, %v880
    %v882 = vtanh.pop %v863
    %v883 = vmul.f32 %v879, %v710
    %v884 = vmul.f32 %v877, %v882
    %v885 = vadd.f32 %v883, %v884
    %v886 = vtanh.pop %v885
    %v887 = vmul.f32 %v881, %v886
    %888 = vst [vmem:[#allocation3 + $0x8] sm:$0xff] %v887
    %v889 = vld [vmem:[#allocation2 + $0x40] sm:$0xff]
    %v890 = vld [vmem:[#allocation2 + $0x48] sm:$0xff]
    %v891 = vld [vmem:[#allocation2 + $0x50] sm:$0xff]
    %v892 = vld [vmem:[#allocation2 + $0x58] sm:$0xff]
    %893 = vmatprep.subr.mxu0 %v205
    %894 = vmatpush1.msra.mxu0 %v204
    %895 = vmatprep.subr.mxu0 %v209
    %896 = vmatpush1.msra.mxu0 %v208
    %897 = vmatprep.subr.mxu0 %v213
    %898 = vmatpush1.msra.mxu0 %v212
    %899 = vmatprep.subr.mxu0 %v217
    %900 = vmatpush1.msra.mxu0 %v216
    %901 = vmatprep.subr.mxu0 %v221
    %902 = vmatpush1.msra.mxu0 %v220
    %903 = vmatprep.subr.mxu0 %v225
    %904 = vmatpush1.msra.mxu0 %v224
    %905 = vmatprep.subr.mxu0 %v229
    %906 = vmatpush1.msra.mxu0 %v228
    %907 = vmatprep.subr.mxu0 %v233
    %908 = vmatpush1.msra.mxu0 %v232
    %909 = vmatprep.subr.mxu0 %v237
    %910 = vmatpush1.msra.mxu0 %v236
    %911 = vmatprep.subr.mxu0 %v241
    %912 = vmatpush1.msra.mxu0 %v240
    %913 = vmatprep.subr.mxu0 %v245
    %914 = vmatpush1.msra.mxu0 %v244
    %915 = vmatprep.subr.mxu0 %v249
    %916 = vmatpush1.msra.mxu0 %v248
    %917 = vmatprep.subr.mxu0 %v253
    %918 = vmatpush1.msra.mxu0 %v252
    %919 = vmatprep.subr.mxu0 %v257
    %920 = vmatpush1.msra.mxu0 %v256
    %921 = vmatprep.subr.mxu0 %v261
    %922 = vmatpush1.msra.mxu0 %v260
    %923 = vmatprep.subr.mxu0 %v265
    %924 = vmatpush1.msra.mxu0 %v264
    %925 = vmatprep.subr.mxu0 0.0
    %926 = vmatpush1.msra.mxu0 0.0
    %927 = vmatprep.subr.mxu0 0.0
    %928 = vmatpush1.msra.mxu0 0.0
    %929 = vmatprep.subr.mxu0 0.0
    %930 = vmatpush1.msra.mxu0 0.0
    %931 = vmatprep.subr.mxu0 0.0
    %932 = vmatpush1.msra.mxu0 0.0
    %933 = vmatprep.subr.mxu0 0.0
    %934 = vmatpush1.msra.mxu0 0.0
    %935 = vmatprep.subr.mxu0 0.0
    %936 = vmatpush1.msra.mxu0 0.0
    %937 = vmatprep.subr.mxu0 0.0
    %938 = vmatpush1.msra.mxu0 0.0
    %939 = vmatprep.subr.mxu0 0.0
    %940 = vmatpush1.msra.mxu0 0.0
    %941 = vmatprep.subr.mxu0 0.0
    %942 = vmatpush1.msra.mxu0 0.0
    %943 = vmatprep.subr.mxu0 0.0
    %944 = vmatpush1.msra.mxu0 0.0
    %945 = vmatprep.subr.mxu0 0.0
    %946 = vmatpush1.msra.mxu0 0.0
    %947 = vmatprep.subr.mxu0 0.0
    %948 = vmatpush1.msra.mxu0 0.0
    %949 = vmatprep.subr.mxu0 0.0
    %950 = vmatpush1.msra.mxu0 0.0
    %951 = vmatprep.subr.mxu0 0.0
    %952 = vmatpush1.msra.mxu0 0.0
    %953 = vmatprep.subr.mxu0 0.0
    %954 = vmatpush1.msra.mxu0 0.0
    %955 = vmatprep.subr.mxu0 0.0
    %956 = vmatpush1.msra.mxu0 0.0
    %957 = vmatprep.mubr.f32.mxu0 0.0
    %958 = vmatmul.mubr.f32.gmra.mrb[0].mxu0 %v887
    %v959 = vpop.f32.mrb[0].mxu0
    %v960 = vadd.f32 0.0, %v959
    %v961 = vpop.f32.mrb[0].mxu0
    %v962 = vadd.f32 0.0, %v961
    %963 = vdwg.mxu0
    %964 = vmatprep.subr.mxu0 %v207
    %965 = vmatpush1.msra.mxu0 %v206
    %966 = vmatprep.subr.mxu0 %v211
    %967 = vmatpush1.msra.mxu0 %v210
    %968 = vmatprep.subr.mxu0 %v215
    %969 = vmatpush1.msra.mxu0 %v214
    %970 = vmatprep.subr.mxu0 %v219
    %971 = vmatpush1.msra.mxu0 %v218
    %972 = vmatprep.subr.mxu0 %v223
    %973 = vmatpush1.msra.mxu0 %v222
    %974 = vmatprep.subr.mxu0 %v227
    %975 = vmatpush1.msra.mxu0 %v226
    %976 = vmatprep.subr.mxu0 %v231
    %977 = vmatpush1.msra.mxu0 %v230
    %978 = vmatprep.subr.mxu0 %v235
    %979 = vmatpush1.msra.mxu0 %v234
    %980 = vmatprep.subr.mxu0 %v239
    %981 = vmatpush1.msra.mxu0 %v238
    %982 = vmatprep.subr.mxu0 %v243
    %983 = vmatpush1.msra.mxu0 %v242
    %984 = vmatprep.subr.mxu0 %v247
    %985 = vmatpush1.msra.mxu0 %v246
    %986 = vmatprep.subr.mxu0 %v251
    %987 = vmatpush1.msra.mxu0 %v250
    %988 = vmatprep.subr.mxu0 %v255
    %989 = vmatpush1.msra.mxu0 %v254
    %990 = vmatprep.subr.mxu0 %v259
    %991 = vmatpush1.msra.mxu0 %v258
    %992 = vmatprep.subr.mxu0 %v263
    %993 = vmatpush1.msra.mxu0 %v262
    %994 = vmatprep.subr.mxu0 %v267
    %995 = vmatpush1.msra.mxu0 %v266
    %996 = vmatprep.subr.mxu0 0.0
    %997 = vmatpush1.msra.mxu0 0.0
    %998 = vmatprep.subr.mxu0 0.0
    %999 = vmatpush1.msra.mxu0 0.0
    %1000 = vmatprep.subr.mxu0 0.0
    %1001 = vmatpush1.msra.mxu0 0.0
    %1002 = vmatprep.subr.mxu0 0.0
    %1003 = vmatpush1.msra.mxu0 0.0
    %1004 = vmatprep.subr.mxu0 0.0
    %1005 = vmatpush1.msra.mxu0 0.0
    %1006 = vmatprep.subr.mxu0 0.0
    %1007 = vmatpush1.msra.mxu0 0.0
    %1008 = vmatprep.subr.mxu0 0.0
    %1009 = vmatpush1.msra.mxu0 0.0
    %1010 = vmatprep.subr.mxu0 0.0
    %1011 = vmatpush1.msra.mxu0 0.0
    %1012 = vmatprep.subr.mxu0 0.0
    %1013 = vmatpush1.msra.mxu0 0.0
    %1014 = vmatprep.subr.mxu0 0.0
    %1015 = vmatpush1.msra.mxu0 0.0
    %1016 = vmatprep.subr.mxu0 0.0
    %1017 = vmatpush1.msra.mxu0 0.0
    %1018 = vmatprep.subr.mxu0 0.0
    %1019 = vmatpush1.msra.mxu0 0.0
    %1020 = vmatprep.subr.mxu0 0.0
    %1021 = vmatpush1.msra.mxu0 0.0
    %1022 = vmatprep.subr.mxu0 0.0
    %1023 = vmatpush1.msra.mxu0 0.0
    %1024 = vmatprep.subr.mxu0 0.0
    %1025 = vmatpush1.msra.mxu0 0.0
    %1026 = vmatprep.subr.mxu0 0.0
    %1027 = vmatpush1.msra.mxu0 0.0
    %1028 = vmatprep.mubr.f32.mxu0 0.0
    %1029 = vmatmul.mubr.f32.gmra.mrb[0].mxu0 %v887
    %v1030 = vpop.f32.mrb[0].mxu0
    %v1031 = vadd.f32 0.0, %v1030
    %v1032 = vpop.f32.mrb[0].mxu0
    %v1033 = vadd.f32 0.0, %v1032
    %1034 = vdwg.mxu0
    %v1035 = vadd.f32 %v889, %v960
    %v1036 = vadd.f32 %v890, %v962
    %v1037 = vadd.f32 %v891, %v1031
    %v1038 = vadd.f32 %v892, %v1033
    %v1039 = vxor.u32 %v1035, 2147483648
    %v1040 = vxor.u32 %v1036, 2147483648
    %v1041 = vxor.u32 %v1037, 2147483648
    %v1042 = vmul.f32 %v1039, 1.442695
    %v1043 = vpow.pop %v1042
    %v1044 = vmul.f32 %v1040, 1.442695
    %v1045 = vpow.pop %v1044
    %v1046 = vmul.f32 %v1041, 1.442695
    %v1047 = vpow.pop %v1046
    %v1048 = vadd.f32 %v1043, 1.0
    %v1049 = vadd.f32 %v1045, 1.0
    %v1050 = vadd.f32 %v1047, 1.0
    %v1051 = vrcp.pop %v1048
    %v1052 = vmul.f32 1.0, %v1051
    %v1053 = vrcp.pop %v1049
    %v1054 = vmul.f32 1.0, %v1053
    %v1055 = vrcp.pop %v1050
    %v1056 = vmul.f32 1.0, %v1055
    %v1057 = vtanh.pop %v1038
    %v1058 = vmul.f32 %v1054, %v885
    %v1059 = vmul.f32 %v1052, %v1057
    %v1060 = vadd.f32 %v1058, %v1059
    %v1061 = vtanh.pop %v1060
    %v1062 = vmul.f32 %v1056, %v1061
    %1063 = vst [vmem:[#allocation3 + $0x10] sm:$0xff] %v1062
    %v1064 = vld [vmem:[#allocation2 + $0x60] sm:$0xff]
    %v1065 = vld [vmem:[#allocation2 + $0x68] sm:$0xff]
    %v1066 = vld [vmem:[#allocation2 + $0x70] sm:$0xff]
    %v1067 = vld [vmem:[#allocation2 + $0x78] sm:$0xff]
    %1068 = vmatprep.subr.mxu0 %v205
    %1069 = vmatpush1.msra.mxu0 %v204
    %1070 = vmatprep.subr.mxu0 %v209
    %1071 = vmatpush1.msra.mxu0 %v208
    %1072 = vmatprep.subr.mxu0 %v213
    %1073 = vmatpush1.msra.mxu0 %v212
    %1074 = vmatprep.subr.mxu0 %v217
    %1075 = vmatpush1.msra.mxu0 %v216
    %1076 = vmatprep.subr.mxu0 %v221
    %1077 = vmatpush1.msra.mxu0 %v220
    %1078 = vmatprep.subr.mxu0 %v225
    %1079 = vmatpush1.msra.mxu0 %v224
    %1080 = vmatprep.subr.mxu0 %v229
    %1081 = vmatpush1.msra.mxu0 %v228
    %1082 = vmatprep.subr.mxu0 %v233
    %1083 = vmatpush1.msra.mxu0 %v232
    %1084 = vmatprep.subr.mxu0 %v237
    %1085 = vmatpush1.msra.mxu0 %v236
    %1086 = vmatprep.subr.mxu0 %v241
    %1087 = vmatpush1.msra.mxu0 %v240
    %1088 = vmatprep.subr.mxu0 %v245
    %1089 = vmatpush1.msra.mxu0 %v244
    %1090 = vmatprep.subr.mxu0 %v249
    %1091 = vmatpush1.msra.mxu0 %v248
    %1092 = vmatprep.subr.mxu0 %v253
    %1093 = vmatpush1.msra.mxu0 %v252
    %1094 = vmatprep.subr.mxu0 %v257
    %1095 = vmatpush1.msra.mxu0 %v256
    %1096 = vmatprep.subr.mxu0 %v261
    %1097 = vmatpush1.msra.mxu0 %v260
    %1098 = vmatprep.subr.mxu0 %v265
    %1099 = vmatpush1.msra.mxu0 %v264
    %1100 = vmatprep.subr.mxu0 0.0
    %1101 = vmatpush1.msra.mxu0 0.0
    %1102 = vmatprep.subr.mxu0 0.0
    %1103 = vmatpush1.msra.mxu0 0.0
    %1104 = vmatprep.subr.mxu0 0.0
    %1105 = vmatpush1.msra.mxu0 0.0
    %1106 = vmatprep.subr.mxu0 0.0
    %1107 = vmatpush1.msra.mxu0 0.0
    %1108 = vmatprep.subr.mxu0 0.0
    %1109 = vmatpush1.msra.mxu0 0.0
    %1110 = vmatprep.subr.mxu0 0.0
    %1111 = vmatpush1.msra.mxu0 0.0
    %1112 = vmatprep.subr.mxu0 0.0
    %1113 = vmatpush1.msra.mxu0 0.0
    %1114 = vmatprep.subr.mxu0 0.0
    %1115 = vmatpush1.msra.mxu0 0.0
    %1116 = vmatprep.subr.mxu0 0.0
    %1117 = vmatpush1.msra.mxu0 0.0
    %1118 = vmatprep.subr.mxu0 0.0
    %1119 = vmatpush1.msra.mxu0 0.0
    %1120 = vmatprep.subr.mxu0 0.0
    %1121 = vmatpush1.msra.mxu0 0.0
    %1122 = vmatprep.subr.mxu0 0.0
    %1123 = vmatpush1.msra.mxu0 0.0
    %1124 = vmatprep.subr.mxu0 0.0
    %1125 = vmatpush1.msra.mxu0 0.0
    %1126 = vmatprep.subr.mxu0 0.0
    %1127 = vmatpush1.msra.mxu0 0.0
    %1128 = vmatprep.subr.mxu0 0.0
    %1129 = vmatpush1.msra.mxu0 0.0
    %1130 = vmatprep.subr.mxu0 0.0
    %1131 = vmatpush1.msra.mxu0 0.0
    %1132 = vmatprep.mubr.f32.mxu0 0.0
    %1133 = vmatmul.mubr.f32.gmra.mrb[0].mxu0 %v1062
    %v1134 = vpop.f32.mrb[0].mxu0
    %v1135 = vadd.f32 0.0, %v1134
    %v1136 = vpop.f32.mrb[0].mxu0
    %v1137 = vadd.f32 0.0, %v1136
    %1138 = vdwg.mxu0
    %1139 = vmatprep.subr.mxu0 %v207
    %1140 = vmatpush1.msra.mxu0 %v206
    %1141 = vmatprep.subr.mxu0 %v211
    %1142 = vmatpush1.msra.mxu0 %v210
    %1143 = vmatprep.subr.mxu0 %v215
    %1144 = vmatpush1.msra.mxu0 %v214
    %1145 = vmatprep.subr.mxu0 %v219
    %1146 = vmatpush1.msra.mxu0 %v218
    %1147 = vmatprep.subr.mxu0 %v223
    %1148 = vmatpush1.msra.mxu0 %v222
    %1149 = vmatprep.subr.mxu0 %v227
    %1150 = vmatpush1.msra.mxu0 %v226
    %1151 = vmatprep.subr.mxu0 %v231
    %1152 = vmatpush1.msra.mxu0 %v230
    %1153 = vmatprep.subr.mxu0 %v235
    %1154 = vmatpush1.msra.mxu0 %v234
    %1155 = vmatprep.subr.mxu0 %v239
    %1156 = vmatpush1.msra.mxu0 %v238
    %1157 = vmatprep.subr.mxu0 %v243
    %1158 = vmatpush1.msra.mxu0 %v242
    %1159 = vmatprep.subr.mxu0 %v247
    %1160 = vmatpush1.msra.mxu0 %v246
    %1161 = vmatprep.subr.mxu0 %v251
    %1162 = vmatpush1.msra.mxu0 %v250
    %1163 = vmatprep.subr.mxu0 %v255
    %1164 = vmatpush1.msra.mxu0 %v254
    %1165 = vmatprep.subr.mxu0 %v259
    %1166 = vmatpush1.msra.mxu0 %v258
    %1167 = vmatprep.subr.mxu0 %v263
    %1168 = vmatpush1.msra.mxu0 %v262
    %1169 = vmatprep.subr.mxu0 %v267
    %1170 = vmatpush1.msra.mxu0 %v266
    %1171 = vmatprep.subr.mxu0 0.0
    %1172 = vmatpush1.msra.mxu0 0.0
    %1173 = vmatprep.subr.mxu0 0.0
    %1174 = vmatpush1.msra.mxu0 0.0
    %1175 = vmatprep.subr.mxu0 0.0
    %1176 = vmatpush1.msra.mxu0 0.0
    %1177 = vmatprep.subr.mxu0 0.0
    %1178 = vmatpush1.msra.mxu0 0.0
    %1179 = vmatprep.subr.mxu0 0.0
    %1180 = vmatpush1.msra.mxu0 0.0
    %1181 = vmatprep.subr.mxu0 0.0
    %1182 = vmatpush1.msra.mxu0 0.0
    %1183 = vmatprep.subr.mxu0 0.0
    %1184 = vmatpush1.msra.mxu0 0.0
    %1185 = vmatprep.subr.mxu0 0.0
    %1186 = vmatpush1.msra.mxu0 0.0
    %1187 = vmatprep.subr.mxu0 0.0
    %1188 = vmatpush1.msra.mxu0 0.0
    %1189 = vmatprep.subr.mxu0 0.0
    %1190 = vmatpush1.msra.mxu0 0.0
    %1191 = vmatprep.subr.mxu0 0.0
    %1192 = vmatpush1.msra.mxu0 0.0
    %1193 = vmatprep.subr.mxu0 0.0
    %1194 = vmatpush1.msra.mxu0 0.0
    %1195 = vmatprep.subr.mxu0 0.0
    %1196 = vmatpush1.msra.mxu0 0.0
    %1197 = vmatprep.subr.mxu0 0.0
    %1198 = vmatpush1.msra.mxu0 0.0
    %1199 = vmatprep.subr.mxu0 0.0
    %1200 = vmatpush1.msra.mxu0 0.0
    %1201 = vmatprep.subr.mxu0 0.0
    %1202 = vmatpush1.msra.mxu0 0.0
    %1203 = vmatprep.mubr.f32.mxu0 0.0
    %1204 = vmatmul.mubr.f32.gmra.mrb[0].mxu0 %v1062
    %v1205 = vpop.f32.mrb[0].mxu0
    %v1206 = vadd.f32 0.0, %v1205
    %v1207 = vpop.f32.mrb[0].mxu0
    %v1208 = vadd.f32 0.0, %v1207
    %1209 = vdwg.mxu0
    %v1210 = vadd.f32 %v1064, %v1135
    %v1211 = vadd.f32 %v1065, %v1137
    %v1212 = vadd.f32 %v1066, %v1206
    %v1213 = vadd.f32 %v1067, %v1208
    %v1214 = vxor.u32 %v1210, 2147483648
    %v1215 = vxor.u32 %v1211, 2147483648
    %v1216 = vxor.u32 %v1212, 2147483648
    %v1217 = vmul.f32 %v1214, 1.442695
    %v1218 = vpow.pop %v1217
    %v1219 = vmul.f32 %v1215, 1.442695
    %v1220 = vpow.pop %v1219
    %v1221 = vmul.f32 %v1216, 1.442695
    %v1222 = vpow.pop %v1221
    %v1223 = vadd.f32 %v1218, 1.0
    %v1224 = vadd.f32 %v1220, 1.0
    %v1225 = vadd.f32 %v1222, 1.0
    %v1226 = vrcp.pop %v1223
    %v1227 = vmul.f32 1.0, %v1226
    %v1228 = vrcp.pop %v1224
    %v1229 = vmul.f32 1.0, %v1228
    %v1230 = vrcp.pop %v1225
    %v1231 = vmul.f32 1.0, %v1230
    %v1232 = vtanh.pop %v1213
    %v1233 = vmul.f32 %v1229, %v1060
    %v1234 = vmul.f32 %v1227, %v1232
    %v1235 = vadd.f32 %v1233, %v1234
    %v1236 = vtanh.pop %v1235
    %v1237 = vmul.f32 %v1231, %v1236
    %1238 = vst [vmem:[#allocation3 + $0x18] sm:$0xff] %v1237
    %v1239 = vld [vmem:[#allocation2 + $0x80] sm:$0xff]
    %v1240 = vld [vmem:[#allocation2 + $0x88] sm:$0xff]
    %v1241 = vld [vmem:[#allocation2 + $0x90] sm:$0xff]
    %v1242 = vld [vmem:[#allocation2 + $0x98] sm:$0xff]
    %1243 = vmatprep.subr.mxu0 %v205
    %1244 = vmatpush1.msra.mxu0 %v204
    %1245 = vmatprep.subr.mxu0 %v209
    %1246 = vmatpush1.msra.mxu0 %v208
    %1247 = vmatprep.subr.mxu0 %v213
    %1248 = vmatpush1.msra.mxu0 %v212
    %1249 = vmatprep.subr.mxu0 %v217
    %1250 = vmatpush1.msra.mxu0 %v216
    %1251 = vmatprep.subr.mxu0 %v221
    %1252 = vmatpush1.msra.mxu0 %v220
    %1253 = vmatprep.subr.mxu0 %v225
    %1254 = vmatpush1.msra.mxu0 %v224
    %1255 = vmatprep.subr.mxu0 %v229
    %1256 = vmatpush1.msra.mxu0 %v228
    %1257 = vmatprep.subr.mxu0 %v233
    %1258 = vmatpush1.msra.mxu0 %v232
    %1259 = vmatprep.subr.mxu0 %v237
    %1260 = vmatpush1.msra.mxu0 %v236
    %1261 = vmatprep.subr.mxu0 %v241
    %1262 = vmatpush1.msra.mxu0 %v240
    %1263 = vmatprep.subr.mxu0 %v245
    %1264 = vmatpush1.msra.mxu0 %v244
    %1265 = vmatprep.subr.mxu0 %v249
    %1266 = vmatpush1.msra.mxu0 %v248
    %1267 = vmatprep.subr.mxu0 %v253
    %1268 = vmatpush1.msra.mxu0 %v252
    %1269 = vmatprep.subr.mxu0 %v257
    %1270 = vmatpush1.msra.mxu0 %v256
    %1271 = vmatprep.subr.mxu0 %v261
    %1272 = vmatpush1.msra.mxu0 %v260
    %1273 = vmatprep.subr.mxu0 %v265
    %1274 = vmatpush1.msra.mxu0 %v264
    %1275 = vmatprep.subr.mxu0 0.0
    %1276 = vmatpush1.msra.mxu0 0.0
    %1277 = vmatprep.subr.mxu0 0.0
    %1278 = vmatpush1.msra.mxu0 0.0
    %1279 = vmatprep.subr.mxu0 0.0
    %1280 = vmatpush1.msra.mxu0 0.0
    %1281 = vmatprep.subr.mxu0 0.0
    %1282 = vmatpush1.msra.mxu0 0.0
    %1283 = vmatprep.subr.mxu0 0.0
    %1284 = vmatpush1.msra.mxu0 0.0
    %1285 = vmatprep.subr.mxu0 0.0
    %1286 = vmatpush1.msra.mxu0 0.0
    %1287 = vmatprep.subr.mxu0 0.0
    %1288 = vmatpush1.msra.mxu0 0.0
    %1289 = vmatprep.subr.mxu0 0.0
    %1290 = vmatpush1.msra.mxu0 0.0
    %1291 = vmatprep.subr.mxu0 0.0
    %1292 = vmatpush1.msra.mxu0 0.0
    %1293 = vmatprep.subr.mxu0 0.0
    %1294 = vmatpush1.msra.mxu0 0.0
    %1295 = vmatprep.subr.mxu0 0.0
    %1296 = vmatpush1.msra.mxu0 0.0
    %1297 = vmatprep.subr.mxu0 0.0
    %1298 = vmatpush1.msra.mxu0 0.0
    %1299 = vmatprep.subr.mxu0 0.0
    %1300 = vmatpush1.msra.mxu0 0.0
    %1301 = vmatprep.subr.mxu0 0.0
    %1302 = vmatpush1.msra.mxu0 0.0
    %1303 = vmatprep.subr.mxu0 0.0
    %1304 = vmatpush1.msra.mxu0 0.0
    %1305 = vmatprep.subr.mxu0 0.0
    %1306 = vmatpush1.msra.mxu0 0.0
    %1307 = vmatprep.mubr.f32.mxu0 0.0
    %1308 = vmatmul.mubr.f32.gmra.mrb[0].mxu0 %v1237
    %v1309 = vpop.f32.mrb[0].mxu0
    %v1310 = vadd.f32 0.0, %v1309
    %v1311 = vpop.f32.mrb[0].mxu0
    %v1312 = vadd.f32 0.0, %v1311
    %1313 = vdwg.mxu0
    %1314 = vmatprep.subr.mxu0 %v207
    %1315 = vmatpush1.msra.mxu0 %v206
    %1316 = vmatprep.subr.mxu0 %v211
    %1317 = vmatpush1.msra.mxu0 %v210
    %1318 = vmatprep.subr.mxu0 %v215
    %1319 = vmatpush1.msra.mxu0 %v214
    %1320 = vmatprep.subr.mxu0 %v219
    %1321 = vmatpush1.msra.mxu0 %v218
    %1322 = vmatprep.subr.mxu0 %v223
    %1323 = vmatpush1.msra.mxu0 %v222
    %1324 = vmatprep.subr.mxu0 %v227
    %1325 = vmatpush1.msra.mxu0 %v226
    %1326 = vmatprep.subr.mxu0 %v231
    %1327 = vmatpush1.msra.mxu0 %v230
    %1328 = vmatprep.subr.mxu0 %v235
    %1329 = vmatpush1.msra.mxu0 %v234
    %1330 = vmatprep.subr.mxu0 %v239
    %1331 = vmatpush1.msra.mxu0 %v238
    %1332 = vmatprep.subr.mxu0 %v243
    %1333 = vmatpush1.msra.mxu0 %v242
    %1334 = vmatprep.subr.mxu0 %v247
    %1335 = vmatpush1.msra.mxu0 %v246
    %1336 = vmatprep.subr.mxu0 %v251
    %1337 = vmatpush1.msra.mxu0 %v250
    %1338 = vmatprep.subr.mxu0 %v255
    %1339 = vmatpush1.msra.mxu0 %v254
    %1340 = vmatprep.subr.mxu0 %v259
    %1341 = vmatpush1.msra.mxu0 %v258
    %1342 = vmatprep.subr.mxu0 %v263
    %1343 = vmatpush1.msra.mxu0 %v262
    %1344 = vmatprep.subr.mxu0 %v267
    %1345 = vmatpush1.msra.mxu0 %v266
    %1346 = vmatprep.subr.mxu0 0.0
    %1347 = vmatpush1.msra.mxu0 0.0
    %1348 = vmatprep.subr.mxu0 0.0
    %1349 = vmatpush1.msra.mxu0 0.0
    %1350 = vmatprep.subr.mxu0 0.0
    %1351 = vmatpush1.msra.mxu0 0.0
    %1352 = vmatprep.subr.mxu0 0.0
    %1353 = vmatpush1.msra.mxu0 0.0
    %1354 = vmatprep.subr.mxu0 0.0
    %1355 = vmatpush1.msra.mxu0 0.0
    %1356 = vmatprep.subr.mxu0 0.0
    %1357 = vmatpush1.msra.mxu0 0.0
    %1358 = vmatprep.subr.mxu0 0.0
    %1359 = vmatpush1.msra.mxu0 0.0
    %1360 = vmatprep.subr.mxu0 0.0
    %1361 = vmatpush1.msra.mxu0 0.0
    %1362 = vmatprep.subr.mxu0 0.0
    %1363 = vmatpush1.msra.mxu0 0.0
    %1364 = vmatprep.subr.mxu0 0.0
    %1365 = vmatpush1.msra.mxu0 0.0
    %1366 = vmatprep.subr.mxu0 0.0
    %1367 = vmatpush1.msra.mxu0 0.0
    %1368 = vmatprep.subr.mxu0 0.0
    %1369 = vmatpush1.msra.mxu0 0.0
    %1370 = vmatprep.subr.mxu0 0.0
    %1371 = vmatpush1.msra.mxu0 0.0
    %1372 = vmatprep.subr.mxu0 0.0
    %1373 = vmatpush1.msra.mxu0 0.0
    %1374 = vmatprep.subr.mxu0 0.0
    %1375 = vmatpush1.msra.mxu0 0.0
    %1376 = vmatprep.subr.mxu0 0.0
    %1377 = vmatpush1.msra.mxu0 0.0
    %1378 = vmatprep.mubr.f32.mxu0 0.0
    %1379 = vmatmul.mubr.f32.gmra.mrb[0].mxu0 %v1237
    %v1380 = vpop.f32.mrb[0].mxu0
    %v1381 = vadd.f32 0.0, %v1380
    %v1382 = vpop.f32.mrb[0].mxu0
    %v1383 = vadd.f32 0.0, %v1382
    %1384 = vdwg.mxu0
    %v1385 = vadd.f32 %v1239, %v1310
    %v1386 = vadd.f32 %v1240, %v1312
    %v1387 = vadd.f32 %v1241, %v1381
    %v1388 = vadd.f32 %v1242, %v1383
    %v1389 = vxor.u32 %v1385, 2147483648
    %v1390 = vxor.u32 %v1386, 2147483648
    %v1391 = vxor.u32 %v1387, 2147483648
    %v1392 = vmul.f32 %v1389, 1.442695
    %v1393 = vpow.pop %v1392
    %v1394 = vmul.f32 %v1390, 1.442695
    %v1395 = vpow.pop %v1394
    %v1396 = vmul.f32 %v1391, 1.442695
    %v1397 = vpow.pop %v1396
    %v1398 = vadd.f32 %v1393, 1.0
    %v1399 = vadd.f32 %v1395, 1.0
    %v1400 = vadd.f32 %v1397, 1.0
    %v1401 = vrcp.pop %v1398
    %v1402 = vmul.f32 1.0, %v1401
    %v1403 = vrcp.pop %v1399
    %v1404 = vmul.f32 1.0, %v1403
    %v1405 = vrcp.pop %v1400
    %v1406 = vmul.f32 1.0, %v1405
    %v1407 = vtanh.pop %v1388
    %v1408 = vmul.f32 %v1404, %v1235
    %v1409 = vmul.f32 %v1402, %v1407
    %v1410 = vadd.f32 %v1408, %v1409
    %v1411 = vtanh.pop %v1410
    %v1412 = vmul.f32 %v1406, %v1411
    %1413 = vst [vmem:[#allocation3 + $0x20] sm:$0xff] %v1412
    %v1414 = vld [vmem:[#allocation2 + $0xa0] sm:$0xff]
    %v1415 = vld [vmem:[#allocation2 + $0xa8] sm:$0xff]
    %v1416 = vld [vmem:[#allocation2 + $0xb0] sm:$0xff]
    %v1417 = vld [vmem:[#allocation2 + $0xb8] sm:$0xff]
    %1418 = vmatprep.subr.mxu0 %v205
    %1419 = vmatpush1.msra.mxu0 %v204
    %1420 = vmatprep.subr.mxu0 %v209
    %1421 = vmatpush1.msra.mxu0 %v208
    %1422 = vmatprep.subr.mxu0 %v213
    %1423 = vmatpush1.msra.mxu0 %v212
    %1424 = vmatprep.subr.mxu0 %v217
    %1425 = vmatpush1.msra.mxu0 %v216
    %1426 = vmatprep.subr.mxu0 %v221
    %1427 = vmatpush1.msra.mxu0 %v220
    %1428 = vmatprep.subr.mxu0 %v225
    %1429 = vmatpush1.msra.mxu0 %v224
    %1430 = vmatprep.subr.mxu0 %v229
    %1431 = vmatpush1.msra.mxu0 %v228
    %1432 = vmatprep.subr.mxu0 %v233
    %1433 = vmatpush1.msra.mxu0 %v232
    %1434 = vmatprep.subr.mxu0 %v237
    %1435 = vmatpush1.msra.mxu0 %v236
    %1436 = vmatprep.subr.mxu0 %v241
    %1437 = vmatpush1.msra.mxu0 %v240
    %1438 = vmatprep.subr.mxu0 %v245
    %1439 = vmatpush1.msra.mxu0 %v244
    %1440 = vmatprep.subr.mxu0 %v249
    %1441 = vmatpush1.msra.mxu0 %v248
    %1442 = vmatprep.subr.mxu0 %v253
    %1443 = vmatpush1.msra.mxu0 %v252
    %1444 = vmatprep.subr.mxu0 %v257
    %1445 = vmatpush1.msra.mxu0 %v256
    %1446 = vmatprep.subr.mxu0 %v261
    %1447 = vmatpush1.msra.mxu0 %v260
    %1448 = vmatprep.subr.mxu0 %v265
    %1449 = vmatpush1.msra.mxu0 %v264
    %1450 = vmatprep.subr.mxu0 0.0
    %1451 = vmatpush1.msra.mxu0 0.0
    %1452 = vmatprep.subr.mxu0 0.0
    %1453 = vmatpush1.msra.mxu0 0.0
    %1454 = vmatprep.subr.mxu0 0.0
    %1455 = vmatpush1.msra.mxu0 0.0
    %1456 = vmatprep.subr.mxu0 0.0
    %1457 = vmatpush1.msra.mxu0 0.0
    %1458 = vmatprep.subr.mxu0 0.0
    %1459 = vmatpush1.msra.mxu0 0.0
    %1460 = vmatprep.subr.mxu0 0.0
    %1461 = vmatpush1.msra.mxu0 0.0
    %1462 = vmatprep.subr.mxu0 0.0
    %1463 = vmatpush1.msra.mxu0 0.0
    %1464 = vmatprep.subr.mxu0 0.0
    %1465 = vmatpush1.msra.mxu0 0.0
    %1466 = vmatprep.subr.mxu0 0.0
    %1467 = vmatpush1.msra.mxu0 0.0
    %1468 = vmatprep.subr.mxu0 0.0
    %1469 = vmatpush1.msra.mxu0 0.0
    %1470 = vmatprep.subr.mxu0 0.0
    %1471 = vmatpush1.msra.mxu0 0.0
    %1472 = vmatprep.subr.mxu0 0.0
    %1473 = vmatpush1.msra.mxu0 0.0
    %1474 = vmatprep.subr.mxu0 0.0
    %1475 = vmatpush1.msra.mxu0 0.0
    %1476 = vmatprep.subr.mxu0 0.0
    %1477 = vmatpush1.msra.mxu0 0.0
    %1478 = vmatprep.subr.mxu0 0.0
    %1479 = vmatpush1.msra.mxu0 0.0
    %1480 = vmatprep.subr.mxu0 0.0
    %1481 = vmatpush1.msra.mxu0 0.0
    %1482 = vmatprep.mubr.f32.mxu0 0.0
    %1483 = vmatmul.mubr.f32.gmra.mrb[0].mxu0 %v1412
    %v1484 = vpop.f32.mrb[0].mxu0
    %v1485 = vadd.f32 0.0, %v1484
    %v1486 = vpop.f32.mrb[0].mxu0
    %v1487 = vadd.f32 0.0, %v1486
    %1488 = vdwg.mxu0
    %1489 = vmatprep.subr.mxu0 %v207
    %1490 = vmatpush1.msra.mxu0 %v206
    %1491 = vmatprep.subr.mxu0 %v211
    %1492 = vmatpush1.msra.mxu0 %v210
    %1493 = vmatprep.subr.mxu0 %v215
    %1494 = vmatpush1.msra.mxu0 %v214
    %1495 = vmatprep.subr.mxu0 %v219
    %1496 = vmatpush1.msra.mxu0 %v218
    %1497 = vmatprep.subr.mxu0 %v223
    %1498 = vmatpush1.msra.mxu0 %v222
    %1499 = vmatprep.subr.mxu0 %v227
    %1500 = vmatpush1.msra.mxu0 %v226
    %1501 = vmatprep.subr.mxu0 %v231
    %1502 = vmatpush1.msra.mxu0 %v230
    %1503 = vmatprep.subr.mxu0 %v235
    %1504 = vmatpush1.msra.mxu0 %v234
    %1505 = vmatprep.subr.mxu0 %v239
    %1506 = vmatpush1.msra.mxu0 %v238
    %1507 = vmatprep.subr.mxu0 %v243
    %1508 = vmatpush1.msra.mxu0 %v242
    %1509 = vmatprep.subr.mxu0 %v247
    %1510 = vmatpush1.msra.mxu0 %v246
    %1511 = vmatprep.subr.mxu0 %v251
    %1512 = vmatpush1.msra.mxu0 %v250
    %1513 = vmatprep.subr.mxu0 %v255
    %1514 = vmatpush1.msra.mxu0 %v254
    %1515 = vmatprep.subr.mxu0 %v259
    %1516 = vmatpush1.msra.mxu0 %v258
    %1517 = vmatprep.subr.mxu0 %v263
    %1518 = vmatpush1.msra.mxu0 %v262
    %1519 = vmatprep.subr.mxu0 %v267
    %1520 = vmatpush1.msra.mxu0 %v266
    %1521 = vmatprep.subr.mxu0 0.0
    %1522 = vmatpush1.msra.mxu0 0.0
    %1523 = vmatprep.subr.mxu0 0.0
    %1524 = vmatpush1.msra.mxu0 0.0
    %1525 = vmatprep.subr.mxu0 0.0
    %1526 = vmatpush1.msra.mxu0 0.0
    %1527 = vmatprep.subr.mxu0 0.0
    %1528 = vmatpush1.msra.mxu0 0.0
    %1529 = vmatprep.subr.mxu0 0.0
    %1530 = vmatpush1.msra.mxu0 0.0
    %1531 = vmatprep.subr.mxu0 0.0
    %1532 = vmatpush1.msra.mxu0 0.0
    %1533 = vmatprep.subr.mxu0 0.0
    %1534 = vmatpush1.msra.mxu0 0.0
    %1535 = vmatprep.subr.mxu0 0.0
    %1536 = vmatpush1.msra.mxu0 0.0
    %1537 = vmatprep.subr.mxu0 0.0
    %1538 = vmatpush1.msra.mxu0 0.0
    %1539 = vmatprep.subr.mxu0 0.0
    %1540 = vmatpush1.msra.mxu0 0.0
    %1541 = vmatprep.subr.mxu0 0.0
    %1542 = vmatpush1.msra.mxu0 0.0
    %1543 = vmatprep.subr.mxu0 0.0
    %1544 = vmatpush1.msra.mxu0 0.0
    %1545 = vmatprep.subr.mxu0 0.0
    %1546 = vmatpush1.msra.mxu0 0.0
    %1547 = vmatprep.subr.mxu0 0.0
    %1548 = vmatpush1.msra.mxu0 0.0
    %1549 = vmatprep.subr.mxu0 0.0
    %1550 = vmatpush1.msra.mxu0 0.0
    %1551 = vmatprep.subr.mxu0 0.0
    %1552 = vmatpush1.msra.mxu0 0.0
    %1553 = vmatprep.mubr.f32.mxu0 0.0
    %1554 = vmatmul.mubr.f32.gmra.mrb[0].mxu0 %v1412
    %v1555 = vpop.f32.mrb[0].mxu0
    %v1556 = vadd.f32 0.0, %v1555
    %v1557 = vpop.f32.mrb[0].mxu0
    %v1558 = vadd.f32 0.0, %v1557
    %1559 = vdwg.mxu0
    %v1560 = vadd.f32 %v1414, %v1485
    %v1561 = vadd.f32 %v1415, %v1487
    %v1562 = vadd.f32 %v1416, %v1556
    %v1563 = vadd.f32 %v1417, %v1558
    %v1564 = vxor.u32 %v1560, 2147483648
    %v1565 = vxor.u32 %v1561, 2147483648
    %v1566 = vxor.u32 %v1562, 2147483648
    %v1567 = vmul.f32 %v1564, 1.442695
    %v1568 = vpow.pop %v1567
    %v1569 = vmul.f32 %v1565, 1.442695
    %v1570 = vpow.pop %v1569
    %v1571 = vmul.f32 %v1566, 1.442695
    %v1572 = vpow.pop %v1571
    %v1573 = vadd.f32 %v1568, 1.0
    %v1574 = vadd.f32 %v1570, 1.0
    %v1575 = vadd.f32 %v1572, 1.0
    %v1576 = vrcp.pop %v1573
    %v1577 = vmul.f32 1.0, %v1576
    %v1578 = vrcp.pop %v1574
    %v1579 = vmul.f32 1.0, %v1578
    %v1580 = vrcp.pop %v1575
    %v1581 = vmul.f32 1.0, %v1580
    %v1582 = vtanh.pop %v1563
    %v1583 = vmul.f32 %v1579, %v1410
    %v1584 = vmul.f32 %v1577, %v1582
    %v1585 = vadd.f32 %v1583, %v1584
    %v1586 = vtanh.pop %v1585
    %v1587 = vmul.f32 %v1581, %v1586
    %1588 = vst [vmem:[#allocation3 + $0x28] sm:$0xff] %v1587
    %v1589 = vld [vmem:[#allocation2 + $0xc0] sm:$0xff]
    %v1590 = vld [vmem:[#allocation2 + $0xc8] sm:$0xff]
    %v1591 = vld [vmem:[#allocation2 + $0xd0] sm:$0xff]
    %v1592 = vld [vmem:[#allocation2 + $0xd8] sm:$0xff]
    %1593 = vmatprep.subr.mxu0 %v205
    %1594 = vmatpush1.msra.mxu0 %v204
    %1595 = vmatprep.subr.mxu0 %v209
    %1596 = vmatpush1.msra.mxu0 %v208
    %1597 = vmatprep.subr.mxu0 %v213
    %1598 = vmatpush1.msra.mxu0 %v212
    %1599 = vmatprep.subr.mxu0 %v217
    %1600 = vmatpush1.msra.mxu0 %v216
    %1601 = vmatprep.subr.mxu0 %v221
    %1602 = vmatpush1.msra.mxu0 %v220
    %1603 = vmatprep.subr.mxu0 %v225
    %1604 = vmatpush1.msra.mxu0 %v224
    %1605 = vmatprep.subr.mxu0 %v229
    %1606 = vmatpush1.msra.mxu0 %v228
    %1607 = vmatprep.subr.mxu0 %v233
    %1608 = vmatpush1.msra.mxu0 %v232
    %1609 = vmatprep.subr.mxu0 %v237
    %1610 = vmatpush1.msra.mxu0 %v236
    %1611 = vmatprep.subr.mxu0 %v241
    %1612 = vmatpush1.msra.mxu0 %v240
    %1613 = vmatprep.subr.mxu0 %v245
    %1614 = vmatpush1.msra.mxu0 %v244
    %1615 = vmatprep.subr.mxu0 %v249
    %1616 = vmatpush1.msra.mxu0 %v248
    %1617 = vmatprep.subr.mxu0 %v253
    %1618 = vmatpush1.msra.mxu0 %v252
    %1619 = vmatprep.subr.mxu0 %v257
    %1620 = vmatpush1.msra.mxu0 %v256
    %1621 = vmatprep.subr.mxu0 %v261
    %1622 = vmatpush1.msra.mxu0 %v260
    %1623 = vmatprep.subr.mxu0 %v265
    %1624 = vmatpush1.msra.mxu0 %v264
    %1625 = vmatprep.subr.mxu0 0.0
    %1626 = vmatpush1.msra.mxu0 0.0
    %1627 = vmatprep.subr.mxu0 0.0
    %1628 = vmatpush1.msra.mxu0 0.0
    %1629 = vmatprep.subr.mxu0 0.0
    %1630 = vmatpush1.msra.mxu0 0.0
    %1631 = vmatprep.subr.mxu0 0.0
    %1632 = vmatpush1.msra.mxu0 0.0
    %1633 = vmatprep.subr.mxu0 0.0
    %1634 = vmatpush1.msra.mxu0 0.0
    %1635 = vmatprep.subr.mxu0 0.0
    %1636 = vmatpush1.msra.mxu0 0.0
    %1637 = vmatprep.subr.mxu0 0.0
    %1638 = vmatpush1.msra.mxu0 0.0
    %1639 = vmatprep.subr.mxu0 0.0
    %1640 = vmatpush1.msra.mxu0 0.0
    %1641 = vmatprep.subr.mxu0 0.0
    %1642 = vmatpush1.msra.mxu0 0.0
    %1643 = vmatprep.subr.mxu0 0.0
    %1644 = vmatpush1.msra.mxu0 0.0
    %1645 = vmatprep.subr.mxu0 0.0
    %1646 = vmatpush1.msra.mxu0 0.0
    %1647 = vmatprep.subr.mxu0 0.0
    %1648 = vmatpush1.msra.mxu0 0.0
    %1649 = vmatprep.subr.mxu0 0.0
    %1650 = vmatpush1.msra.mxu0 0.0
    %1651 = vmatprep.subr.mxu0 0.0
    %1652 = vmatpush1.msra.mxu0 0.0
    %1653 = vmatprep.subr.mxu0 0.0
    %1654 = vmatpush1.msra.mxu0 0.0
    %1655 = vmatprep.subr.mxu0 0.0
    %1656 = vmatpush1.msra.mxu0 0.0
    %1657 = vmatprep.mubr.f32.mxu0 0.0
    %1658 = vmatmul.mubr.f32.gmra.mrb[0].mxu0 %v1587
    %v1659 = vpop.f32.mrb[0].mxu0
    %v1660 = vadd.f32 0.0, %v1659
    %v1661 = vpop.f32.mrb[0].mxu0
    %v1662 = vadd.f32 0.0, %v1661
    %1663 = vdwg.mxu0
    %1664 = vmatprep.subr.mxu0 %v207
    %1665 = vmatpush1.msra.mxu0 %v206
    %1666 = vmatprep.subr.mxu0 %v211
    %1667 = vmatpush1.msra.mxu0 %v210
    %1668 = vmatprep.subr.mxu0 %v215
    %1669 = vmatpush1.msra.mxu0 %v214
    %1670 = vmatprep.subr.mxu0 %v219
    %1671 = vmatpush1.msra.mxu0 %v218
    %1672 = vmatprep.subr.mxu0 %v223
    %1673 = vmatpush1.msra.mxu0 %v222
    %1674 = vmatprep.subr.mxu0 %v227
    %1675 = vmatpush1.msra.mxu0 %v226
    %1676 = vmatprep.subr.mxu0 %v231
    %1677 = vmatpush1.msra.mxu0 %v230
    %1678 = vmatprep.subr.mxu0 %v235
    %1679 = vmatpush1.msra.mxu0 %v234
    %1680 = vmatprep.subr.mxu0 %v239
    %1681 = vmatpush1.msra.mxu0 %v238
    %1682 = vmatprep.subr.mxu0 %v243
    %1683 = vmatpush1.msra.mxu0 %v242
    %1684 = vmatprep.subr.mxu0 %v247
    %1685 = vmatpush1.msra.mxu0 %v246
    %1686 = vmatprep.subr.mxu0 %v251
    %1687 = vmatpush1.msra.mxu0 %v250
    %1688 = vmatprep.subr.mxu0 %v255
    %1689 = vmatpush1.msra.mxu0 %v254
    %1690 = vmatprep.subr.mxu0 %v259
    %1691 = vmatpush1.msra.mxu0 %v258
    %1692 = vmatprep.subr.mxu0 %v263
    %1693 = vmatpush1.msra.mxu0 %v262
    %1694 = vmatprep.subr.mxu0 %v267
    %1695 = vmatpush1.msra.mxu0 %v266
    %1696 = vmatprep.subr.mxu0 0.0
    %1697 = vmatpush1.msra.mxu0 0.0
    %1698 = vmatprep.subr.mxu0 0.0
    %1699 = vmatpush1.msra.mxu0 0.0
    %1700 = vmatprep.subr.mxu0 0.0
    %1701 = vmatpush1.msra.mxu0 0.0
    %1702 = vmatprep.subr.mxu0 0.0
    %1703 = vmatpush1.msra.mxu0 0.0
    %1704 = vmatprep.subr.mxu0 0.0
    %1705 = vmatpush1.msra.mxu0 0.0
    %1706 = vmatprep.subr.mxu0 0.0
    %1707 = vmatpush1.msra.mxu0 0.0
    %1708 = vmatprep.subr.mxu0 0.0
    %1709 = vmatpush1.msra.mxu0 0.0
    %1710 = vmatprep.subr.mxu0 0.0
    %1711 = vmatpush1.msra.mxu0 0.0
    %1712 = vmatprep.subr.mxu0 0.0
    %1713 = vmatpush1.msra.mxu0 0.0
    %1714 = vmatprep.subr.mxu0 0.0
    %1715 = vmatpush1.msra.mxu0 0.0
    %1716 = vmatprep.subr.mxu0 0.0
    %1717 = vmatpush1.msra.mxu0 0.0
    %1718 = vmatprep.subr.mxu0 0.0
    %1719 = vmatpush1.msra.mxu0 0.0
    %1720 = vmatprep.subr.mxu0 0.0
    %1721 = vmatpush1.msra.mxu0 0.0
    %1722 = vmatprep.subr.mxu0 0.0
    %1723 = vmatpush1.msra.mxu0 0.0
    %1724 = vmatprep.subr.mxu0 0.0
    %1725 = vmatpush1.msra.mxu0 0.0
    %1726 = vmatprep.subr.mxu0 0.0
    %1727 = vmatpush1.msra.mxu0 0.0
    %1728 = vmatprep.mubr.f32.mxu0 0.0
    %1729 = vmatmul.mubr.f32.gmra.mrb[0].mxu0 %v1587
    %v1730 = vpop.f32.mrb[0].mxu0
    %v1731 = vadd.f32 0.0, %v1730
    %v1732 = vpop.f32.mrb[0].mxu0
    %v1733 = vadd.f32 0.0, %v1732
    %1734 = vdwg.mxu0
    %v1735 = vadd.f32 %v1589, %v1660
    %v1736 = vadd.f32 %v1590, %v1662
    %v1737 = vadd.f32 %v1591, %v1731
    %v1738 = vadd.f32 %v1592, %v1733
    %v1739 = vxor.u32 %v1735, 2147483648
    %v1740 = vxor.u32 %v1736, 2147483648
    %v1741 = vxor.u32 %v1737, 2147483648
    %v1742 = vmul.f32 %v1739, 1.442695
    %v1743 = vpow.pop %v1742
    %v1744 = vmul.f32 %v1740, 1.442695
    %v1745 = vpow.pop %v1744
    %v1746 = vmul.f32 %v1741, 1.442695
    %v1747 = vpow.pop %v1746
    %v1748 = vadd.f32 %v1743, 1.0
    %v1749 = vadd.f32 %v1745, 1.0
    %v1750 = vadd.f32 %v1747, 1.0
    %v1751 = vrcp.pop %v1748
    %v1752 = vmul.f32 1.0, %v1751
    %v1753 = vrcp.pop %v1749
    %v1754 = vmul.f32 1.0, %v1753
    %v1755 = vrcp.pop %v1750
    %v1756 = vmul.f32 1.0, %v1755
    %v1757 = vtanh.pop %v1738
    %v1758 = vmul.f32 %v1754, %v1585
    %v1759 = vmul.f32 %v1752, %v1757
    %v1760 = vadd.f32 %v1758, %v1759
    %v1761 = vtanh.pop %v1760
    %v1762 = vmul.f32 %v1756, %v1761
    %1763 = vst [vmem:[#allocation3 + $0x30] sm:$0xff] %v1762
    %v1764 = vld [vmem:[#allocation11] sm:$0xff]
    %v1765 = vld [vmem:[#allocation11 + $0x8] sm:$0xff]
    %v1766 = vld [vmem:[#allocation11 + $0x10] sm:$0xff]
    %v1767 = vld [vmem:[#allocation11 + $0x18] sm:$0xff]
    %v1768 = vld [vmem:[#allocation11 + $0x20] sm:$0xff]
    %v1769 = vld [vmem:[#allocation11 + $0x28] sm:$0xff]
    %v1770 = vld [vmem:[#allocation11 + $0x30] sm:$0xff]
    %v1771 = vld [vmem:[#allocation11 + $0x38] sm:$0xff]
    %v1772 = vld [vmem:[#allocation11 + $0x40] sm:$0xff]
    %v1773 = vld [vmem:[#allocation11 + $0x48] sm:$0xff]
    %v1774 = vld [vmem:[#allocation11 + $0x50] sm:$0xff]
    %v1775 = vld [vmem:[#allocation11 + $0x58] sm:$0xff]
    %v1776 = vld [vmem:[#allocation11 + $0x60] sm:$0xff]
    %v1777 = vld [vmem:[#allocation11 + $0x68] sm:$0xff]
    %v1778 = vld [vmem:[#allocation11 + $0x70] sm:$0xff]
    %v1779 = vld [vmem:[#allocation11 + $0x78] sm:$0xff]
    %v1780 = vld [vmem:[#allocation11 + $0x80] sm:$0xff]
    %v1781 = vld [vmem:[#allocation11 + $0x88] sm:$0xff]
    %v1782 = vld [vmem:[#allocation11 + $0x90] sm:$0xff]
    %v1783 = vld [vmem:[#allocation11 + $0x98] sm:$0xff]
    %v1784 = vld [vmem:[#allocation11 + $0xa0] sm:$0xff]
    %v1785 = vld [vmem:[#allocation11 + $0xa8] sm:$0xff]
    %v1786 = vld [vmem:[#allocation11 + $0xb0] sm:$0xff]
    %v1787 = vld [vmem:[#allocation11 + $0xb8] sm:$0xff]
    %v1788 = vld [vmem:[#allocation11 + $0xc0] sm:$0xff]
    %v1789 = vld [vmem:[#allocation11 + $0xc8] sm:$0xff]
    %v1790 = vld [vmem:[#allocation11 + $0xd0] sm:$0xff]
    %v1791 = vld [vmem:[#allocation11 + $0xd8] sm:$0xff]
    %v1792 = vld [vmem:[#allocation11 + $0xe0] sm:$0xff]
    %v1793 = vld [vmem:[#allocation11 + $0xe8] sm:$0xff]
    %v1794 = vld [vmem:[#allocation11 + $0xf0] sm:$0xff]
    %v1795 = vld [vmem:[#allocation11 + $0xf8] sm:$0xff]
    %v1796 = vld [vmem:[#allocation11 + $0x100] sm:$0xff]
    %v1797 = vld [vmem:[#allocation11 + $0x108] sm:$0xff]
    %v1798 = vld [vmem:[#allocation11 + $0x110] sm:$0xff]
    %v1799 = vld [vmem:[#allocation11 + $0x118] sm:$0xff]
    %v1800 = vld [vmem:[#allocation11 + $0x120] sm:$0xff]
    %v1801 = vld [vmem:[#allocation11 + $0x128] sm:$0xff]
    %v1802 = vld [vmem:[#allocation11 + $0x130] sm:$0xff]
    %v1803 = vld [vmem:[#allocation11 + $0x138] sm:$0xff]
    %v1804 = vld [vmem:[#allocation11 + $0x140] sm:$0xff]
    %v1805 = vld [vmem:[#allocation11 + $0x148] sm:$0xff]
    %v1806 = vld [vmem:[#allocation11 + $0x150] sm:$0xff]
    %v1807 = vld [vmem:[#allocation11 + $0x158] sm:$0xff]
    %v1808 = vld [vmem:[#allocation11 + $0x160] sm:$0xff]
    %v1809 = vld [vmem:[#allocation11 + $0x168] sm:$0xff]
    %v1810 = vld [vmem:[#allocation11 + $0x170] sm:$0xff]
    %v1811 = vld [vmem:[#allocation11 + $0x178] sm:$0xff]
    %v1812 = vld [vmem:[#allocation11 + $0x180] sm:$0xff]
    %v1813 = vld [vmem:[#allocation11 + $0x188] sm:$0xff]
    %v1814 = vld [vmem:[#allocation11 + $0x190] sm:$0xff]
    %v1815 = vld [vmem:[#allocation11 + $0x198] sm:$0xff]
    %v1816 = vld [vmem:[#allocation11 + $0x1a0] sm:$0xff]
    %v1817 = vld [vmem:[#allocation11 + $0x1a8] sm:$0xff]
    %v1818 = vld [vmem:[#allocation11 + $0x1b0] sm:$0xff]
    %v1819 = vld [vmem:[#allocation11 + $0x1b8] sm:$0xff]
    %v1820 = vld [vmem:[#allocation11 + $0x1c0] sm:$0xff]
    %v1821 = vld [vmem:[#allocation11 + $0x1c8] sm:$0xff]
    %v1822 = vld [vmem:[#allocation11 + $0x1d0] sm:$0xff]
    %v1823 = vld [vmem:[#allocation11 + $0x1d8] sm:$0xff]
    %v1824 = vld [vmem:[#allocation11 + $0x1e0] sm:$0xff]
    %v1825 = vld [vmem:[#allocation11 + $0x1e8] sm:$0xff]
    %v1826 = vld [vmem:[#allocation11 + $0x1f0] sm:$0xff]
    %v1827 = vld [vmem:[#allocation11 + $0x1f8] sm:$0xff]
    %v1828 = vld [vmem:[#allocation12] sm:$0xff]
    %v1829 = vld [vmem:[#allocation12 + $0x8] sm:$0xff]
    %v1830 = vld [vmem:[#allocation12 + $0x10] sm:$0xff]
    %v1831 = vld [vmem:[#allocation12 + $0x18] sm:$0xff]
    %v1832 = vld [vmem:[#allocation12 + $0x20] sm:$0xff]
    %v1833 = vld [vmem:[#allocation12 + $0x28] sm:$0xff]
    %v1834 = vld [vmem:[#allocation12 + $0x30] sm:$0xff]
    %v1835 = vld [vmem:[#allocation12 + $0x38] sm:$0xff]
    %v1836 = vld [vmem:[#allocation12 + $0x40] sm:$0xff]
    %v1837 = vld [vmem:[#allocation12 + $0x48] sm:$0xff]
    %v1838 = vld [vmem:[#allocation12 + $0x50] sm:$0xff]
    %v1839 = vld [vmem:[#allocation12 + $0x58] sm:$0xff]
    %v1840 = vld [vmem:[#allocation12 + $0x60] sm:$0xff]
    %v1841 = vld [vmem:[#allocation12 + $0x68] sm:$0xff]
    %v1842 = vld [vmem:[#allocation12 + $0x70] sm:$0xff]
    %v1843 = vld [vmem:[#allocation12 + $0x78] sm:$0xff]
    %v1844 = vld [vmem:[#allocation12 + $0x80] sm:$0xff]
    %v1845 = vld [vmem:[#allocation12 + $0x88] sm:$0xff]
    %v1846 = vld [vmem:[#allocation12 + $0x90] sm:$0xff]
    %v1847 = vld [vmem:[#allocation12 + $0x98] sm:$0xff]
    %v1848 = vld [vmem:[#allocation12 + $0xa0] sm:$0xff]
    %v1849 = vld [vmem:[#allocation12 + $0xa8] sm:$0xff]
    %v1850 = vld [vmem:[#allocation12 + $0xb0] sm:$0xff]
    %v1851 = vld [vmem:[#allocation12 + $0xb8] sm:$0xff]
    %v1852 = vld [vmem:[#allocation12 + $0xc0] sm:$0xff]
    %v1853 = vld [vmem:[#allocation12 + $0xc8] sm:$0xff]
    %v1854 = vld [vmem:[#allocation12 + $0xd0] sm:$0xff]
    %v1855 = vld [vmem:[#allocation12 + $0xd8] sm:$0xff]
    %v1856 = vld [vmem:[#allocation12 + $0xe0] sm:$0xff]
    %v1857 = vld [vmem:[#allocation12 + $0xe8] sm:$0xff]
    %v1858 = vld [vmem:[#allocation12 + $0xf0] sm:$0xff]
    %v1859 = vld [vmem:[#allocation12 + $0xf8] sm:$0xff]
    %v1860 = vld [vmem:[#allocation12 + $0x100] sm:$0xff]
    %v1861 = vld [vmem:[#allocation12 + $0x108] sm:$0xff]
    %v1862 = vld [vmem:[#allocation12 + $0x110] sm:$0xff]
    %v1863 = vld [vmem:[#allocation12 + $0x118] sm:$0xff]
    %v1864 = vld [vmem:[#allocation12 + $0x120] sm:$0xff]
    %v1865 = vld [vmem:[#allocation12 + $0x128] sm:$0xff]
    %v1866 = vld [vmem:[#allocation12 + $0x130] sm:$0xff]
    %v1867 = vld [vmem:[#allocation12 + $0x138] sm:$0xff]
    %v1868 = vld [vmem:[#allocation12 + $0x140] sm:$0xff]
    %v1869 = vld [vmem:[#allocation12 + $0x148] sm:$0xff]
    %v1870 = vld [vmem:[#allocation12 + $0x150] sm:$0xff]
    %v1871 = vld [vmem:[#allocation12 + $0x158] sm:$0xff]
    %v1872 = vld [vmem:[#allocation12 + $0x160] sm:$0xff]
    %v1873 = vld [vmem:[#allocation12 + $0x168] sm:$0xff]
    %v1874 = vld [vmem:[#allocation12 + $0x170] sm:$0xff]
    %v1875 = vld [vmem:[#allocation12 + $0x178] sm:$0xff]
    %v1876 = vld [vmem:[#allocation12 + $0x180] sm:$0xff]
    %v1877 = vld [vmem:[#allocation12 + $0x188] sm:$0xff]
    %v1878 = vld [vmem:[#allocation12 + $0x190] sm:$0xff]
    %v1879 = vld [vmem:[#allocation12 + $0x198] sm:$0xff]
    %v1880 = vld [vmem:[#allocation12 + $0x1a0] sm:$0xff]
    %v1881 = vld [vmem:[#allocation12 + $0x1a8] sm:$0xff]
    %v1882 = vld [vmem:[#allocation12 + $0x1b0] sm:$0xff]
    %v1883 = vld [vmem:[#allocation12 + $0x1b8] sm:$0xff]
    %v1884 = vld [vmem:[#allocation12 + $0x1c0] sm:$0xff]
    %v1885 = vld [vmem:[#allocation12 + $0x1c8] sm:$0xff]
    %v1886 = vld [vmem:[#allocation12 + $0x1d0] sm:$0xff]
    %v1887 = vld [vmem:[#allocation12 + $0x1d8] sm:$0xff]
    %v1888 = vld [vmem:[#allocation12 + $0x1e0] sm:$0xff]
    %v1889 = vld [vmem:[#allocation12 + $0x1e8] sm:$0xff]
    %v1890 = vld [vmem:[#allocation12 + $0x1f0] sm:$0xff]
    %v1891 = vld [vmem:[#allocation12 + $0x1f8] sm:$0xff]
    %v1892 = vld [vmem:[%s6] sm:$0xf]
    %v1893 = vld [vmem:[#allocation3] sm:$0xff]
    %v1894 = vld [vmem:[#allocation3 + $0x8] sm:$0xff]
    %v1895 = vld [vmem:[#allocation3 + $0x10] sm:$0xff]
    %v1896 = vld [vmem:[#allocation3 + $0x18] sm:$0xff]
    %v1897 = vld [vmem:[#allocation3 + $0x20] sm:$0xff]
    %v1898 = vld [vmem:[#allocation3 + $0x28] sm:$0xff]
    %v1899 = vld [vmem:[#allocation3 + $0x30] sm:$0xff]
    %v1901 = vlaneseq
    %v1902 = vshrl.u32 %v1901, 7
    %v1903 = vsub.s32 0, %v1902
    %v1904 = vrot.slane %v1892, %v1903
    %v1905 = vlaneseq
    %v1906 = vshrl.u32 %v1905, 7
    %v1907 = vsub.s32 1, %v1906
    %v1908 = vrot.slane %v1892, %v1907
    %v1909 = vlaneseq
    %v1910 = vshrl.u32 %v1909, 7
    %v1911 = vsub.s32 2, %v1910
    %v1912 = vrot.slane %v1892, %v1911
    %v1913 = vlaneseq
    %v1914 = vshrl.u32 %v1913, 7
    %v1915 = vsub.s32 3, %v1914
    %v1916 = vrot.slane %v1892, %v1915
    %1921 = vmatprep.subr.mxu0 %v1765
    %1922 = vmatpush1.msra.mxu0 %v1764
    %1923 = vmatprep.subr.mxu0 %v1769
    %1924 = vmatpush1.msra.mxu0 %v1768
    %1925 = vmatprep.subr.mxu0 %v1773
    %1926 = vmatpush1.msra.mxu0 %v1772
    %1927 = vmatprep.subr.mxu0 %v1777
    %1928 = vmatpush1.msra.mxu0 %v1776
    %1929 = vmatprep.subr.mxu0 %v1781
    %1930 = vmatpush1.msra.mxu0 %v1780
    %1931 = vmatprep.subr.mxu0 %v1785
    %1932 = vmatpush1.msra.mxu0 %v1784
    %1933 = vmatprep.subr.mxu0 %v1789
    %1934 = vmatpush1.msra.mxu0 %v1788
    %1935 = vmatprep.subr.mxu0 %v1793
    %1936 = vmatpush1.msra.mxu0 %v1792
    %1937 = vmatprep.subr.mxu0 %v1797
    %1938 = vmatpush1.msra.mxu0 %v1796
    %1939 = vmatprep.subr.mxu0 %v1801
    %1940 = vmatpush1.msra.mxu0 %v1800
    %1941 = vmatprep.subr.mxu0 %v1805
    %1942 = vmatpush1.msra.mxu0 %v1804
    %1943 = vmatprep.subr.mxu0 %v1809
    %1944 = vmatpush1.msra.mxu0 %v1808
    %1945 = vmatprep.subr.mxu0 %v1813
    %1946 = vmatpush1.msra.mxu0 %v1812
    %1947 = vmatprep.subr.mxu0 %v1817
    %1948 = vmatpush1.msra.mxu0 %v1816
    %1949 = vmatprep.subr.mxu0 %v1821
    %1950 = vmatpush1.msra.mxu0 %v1820
    %1951 = vmatprep.subr.mxu0 %v1825
    %1952 = vmatpush1.msra.mxu0 %v1824
    %1953 = vmatprep.subr.mxu0 0.0
    %1954 = vmatpush1.msra.mxu0 0.0
    %1955 = vmatprep.subr.mxu0 0.0
    %1956 = vmatpush1.msra.mxu0 0.0
    %1957 = vmatprep.subr.mxu0 0.0
    %1958 = vmatpush1.msra.mxu0 0.0
    %1959 = vmatprep.subr.mxu0 0.0
    %1960 = vmatpush1.msra.mxu0 0.0
    %1961 = vmatprep.subr.mxu0 0.0
    %1962 = vmatpush1.msra.mxu0 0.0
    %1963 = vmatprep.subr.mxu0 0.0
    %1964 = vmatpush1.msra.mxu0 0.0
    %1965 = vmatprep.subr.mxu0 0.0
    %1966 = vmatpush1.msra.mxu0 0.0
    %1967 = vmatprep.subr.mxu0 0.0
    %1968 = vmatpush1.msra.mxu0 0.0
    %1969 = vmatprep.subr.mxu0 0.0
    %1970 = vmatpush1.msra.mxu0 0.0
    %1971 = vmatprep.subr.mxu0 0.0
    %1972 = vmatpush1.msra.mxu0 0.0
    %1973 = vmatprep.subr.mxu0 0.0
    %1974 = vmatpush1.msra.mxu0 0.0
    %1975 = vmatprep.subr.mxu0 0.0
    %1976 = vmatpush1.msra.mxu0 0.0
    %1977 = vmatprep.subr.mxu0 0.0
    %1978 = vmatpush1.msra.mxu0 0.0
    %1979 = vmatprep.subr.mxu0 0.0
    %1980 = vmatpush1.msra.mxu0 0.0
    %1981 = vmatprep.subr.mxu0 0.0
    %1982 = vmatpush1.msra.mxu0 0.0
    %1983 = vmatprep.subr.mxu0 0.0
    %1984 = vmatpush1.msra.mxu0 0.0
    %1985 = vmatprep.mubr.f32.mxu0 0.0
    %1986 = vmatmul.mubr.f32.gmra.mrb[0].mxu0 %v1893
    %v1987 = vpop.f32.mrb[0].mxu0
    %v1988 = vadd.f32 %v1904, %v1987
    %v1989 = vpop.f32.mrb[0].mxu0
    %v1990 = vadd.f32 %v1908, %v1989
    %1991 = vmatprep.mubr.f32.mxu0 0.0
    %1992 = vmatmul.mubr.f32.gmra.mrb[0].mxu0 %v1894
    %v1993 = vpop.f32.mrb[0].mxu0
    %v1994 = vadd.f32 %v1904, %v1993
    %v1995 = vpop.f32.mrb[0].mxu0
    %v1996 = vadd.f32 %v1908, %v1995
    %1997 = vmatprep.mubr.f32.mxu0 0.0
    %1998 = vmatmul.mubr.f32.gmra.mrb[0].mxu0 %v1895
    %v1999 = vpop.f32.mrb[0].mxu0
    %v2000 = vadd.f32 %v1904, %v1999
    %v2001 = vpop.f32.mrb[0].mxu0
    %v2002 = vadd.f32 %v1908, %v2001
    %2003 = vmatprep.mubr.f32.mxu0 0.0
    %2004 = vmatmul.mubr.f32.gmra.mrb[0].mxu0 %v1896
    %v2005 = vpop.f32.mrb[0].mxu0
    %v2006 = vadd.f32 %v1904, %v2005
    %v2007 = vpop.f32.mrb[0].mxu0
    %v2008 = vadd.f32 %v1908, %v2007
    %2009 = vmatprep.mubr.f32.mxu0 0.0
    %2010 = vmatmul.mubr.f32.gmra.mrb[0].mxu0 %v1897
    %v2011 = vpop.f32.mrb[0].mxu0
    %v2012 = vadd.f32 %v1904, %v2011
    %v2013 = vpop.f32.mrb[0].mxu0
    %v2014 = vadd.f32 %v1908, %v2013
    %2015 = vmatprep.mubr.f32.mxu0 0.0
    %2016 = vmatmul.mubr.f32.gmra.mrb[0].mxu0 %v1898
    %v2017 = vpop.f32.mrb[0].mxu0
    %v2018 = vadd.f32 %v1904, %v2017
    %v2019 = vpop.f32.mrb[0].mxu0
    %v2020 = vadd.f32 %v1908, %v2019
    %2021 = vmatprep.mubr.f32.mxu0 0.0
    %2022 = vmatmul.mubr.f32.gmra.mrb[0].mxu0 %v1899
    %v2023 = vpop.f32.mrb[0].mxu0
    %v2024 = vadd.f32 %v1904, %v2023
    %v2025 = vpop.f32.mrb[0].mxu0
    %v2026 = vadd.f32 %v1908, %v2025
    %2027 = vdwg.mxu0
    %2028 = vmatprep.subr.mxu0 %v1767
    %2029 = vmatpush1.msra.mxu0 %v1766
    %2030 = vmatprep.subr.mxu0 %v1771
    %2031 = vmatpush1.msra.mxu0 %v1770
    %2032 = vmatprep.subr.mxu0 %v1775
    %2033 = vmatpush1.msra.mxu0 %v1774
    %2034 = vmatprep.subr.mxu0 %v1779
    %2035 = vmatpush1.msra.mxu0 %v1778
    %2036 = vmatprep.subr.mxu0 %v1783
    %2037 = vmatpush1.msra.mxu0 %v1782
    %2038 = vmatprep.subr.mxu0 %v1787
    %2039 = vmatpush1.msra.mxu0 %v1786
    %2040 = vmatprep.subr.mxu0 %v1791
    %2041 = vmatpush1.msra.mxu0 %v1790
    %2042 = vmatprep.subr.mxu0 %v1795
    %2043 = vmatpush1.msra.mxu0 %v1794
    %2044 = vmatprep.subr.mxu0 %v1799
    %2045 = vmatpush1.msra.mxu0 %v1798
    %2046 = vmatprep.subr.mxu0 %v1803
    %2047 = vmatpush1.msra.mxu0 %v1802
    %2048 = vmatprep.subr.mxu0 %v1807
    %2049 = vmatpush1.msra.mxu0 %v1806
    %2050 = vmatprep.subr.mxu0 %v1811
    %2051 = vmatpush1.msra.mxu0 %v1810
    %2052 = vmatprep.subr.mxu0 %v1815
    %2053 = vmatpush1.msra.mxu0 %v1814
    %2054 = vmatprep.subr.mxu0 %v1819
    %2055 = vmatpush1.msra.mxu0 %v1818
    %2056 = vmatprep.subr.mxu0 %v1823
    %2057 = vmatpush1.msra.mxu0 %v1822
    %2058 = vmatprep.subr.mxu0 %v1827
    %2059 = vmatpush1.msra.mxu0 %v1826
    %2060 = vmatprep.subr.mxu0 0.0
    %2061 = vmatpush1.msra.mxu0 0.0
    %2062 = vmatprep.subr.mxu0 0.0
    %2063 = vmatpush1.msra.mxu0 0.0
    %2064 = vmatprep.subr.mxu0 0.0
    %2065 = vmatpush1.msra.mxu0 0.0
    %2066 = vmatprep.subr.mxu0 0.0
    %2067 = vmatpush1.msra.mxu0 0.0
    %2068 = vmatprep.subr.mxu0 0.0
    %2069 = vmatpush1.msra.mxu0 0.0
    %2070 = vmatprep.subr.mxu0 0.0
    %2071 = vmatpush1.msra.mxu0 0.0
    %2072 = vmatprep.subr.mxu0 0.0
    %2073 = vmatpush1.msra.mxu0 0.0
    %2074 = vmatprep.subr.mxu0 0.0
    %2075 = vmatpush1.msra.mxu0 0.0
    %2076 = vmatprep.subr.mxu0 0.0
    %2077 = vmatpush1.msra.mxu0 0.0
    %2078 = vmatprep.subr.mxu0 0.0
    %2079 = vmatpush1.msra.mxu0 0.0
    %2080 = vmatprep.subr.mxu0 0.0
    %2081 = vmatpush1.msra.mxu0 0.0
    %2082 = vmatprep.subr.mxu0 0.0
    %2083 = vmatpush1.msra.mxu0 0.0
    %2084 = vmatprep.subr.mxu0 0.0
    %2085 = vmatpush1.msra.mxu0 0.0
    %2086 = vmatprep.subr.mxu0 0.0
    %2087 = vmatpush1.msra.mxu0 0.0
    %2088 = vmatprep.subr.mxu0 0.0
    %2089 = vmatpush1.msra.mxu0 0.0
    %2090 = vmatprep.subr.mxu0 0.0
    %2091 = vmatpush1.msra.mxu0 0.0
    %2092 = vmatprep.mubr.f32.mxu0 0.0
    %2093 = vmatmul.mubr.f32.gmra.mrb[0].mxu0 %v1893
    %v2094 = vpop.f32.mrb[0].mxu0
    %v2095 = vadd.f32 %v1912, %v2094
    %v2096 = vpop.f32.mrb[0].mxu0
    %v2097 = vadd.f32 %v1916, %v2096
    %2098 = vmatprep.mubr.f32.mxu0 0.0
    %2099 = vmatmul.mubr.f32.gmra.mrb[0].mxu0 %v1894
    %v2100 = vpop.f32.mrb[0].mxu0
    %v2101 = vadd.f32 %v1912, %v2100
    %v2102 = vpop.f32.mrb[0].mxu0
    %v2103 = vadd.f32 %v1916, %v2102
    %2104 = vmatprep.mubr.f32.mxu0 0.0
    %2105 = vmatmul.mubr.f32.gmra.mrb[0].mxu0 %v1895
    %v2106 = vpop.f32.mrb[0].mxu0
    %v2107 = vadd.f32 %v1912, %v2106
    %v2108 = vpop.f32.mrb[0].mxu0
    %v2109 = vadd.f32 %v1916, %v2108
    %2110 = vmatprep.mubr.f32.mxu0 0.0
    %2111 = vmatmul.mubr.f32.gmra.mrb[0].mxu0 %v1896
    %v2112 = vpop.f32.mrb[0].mxu0
    %v2113 = vadd.f32 %v1912, %v2112
    %v2114 = vpop.f32.mrb[0].mxu0
    %v2115 = vadd.f32 %v1916, %v2114
    %2116 = vmatprep.mubr.f32.mxu0 0.0
    %2117 = vmatmul.mubr.f32.gmra.mrb[0].mxu0 %v1897
    %v2118 = vpop.f32.mrb[0].mxu0
    %v2119 = vadd.f32 %v1912, %v2118
    %v2120 = vpop.f32.mrb[0].mxu0
    %v2121 = vadd.f32 %v1916, %v2120
    %2122 = vmatprep.mubr.f32.mxu0 0.0
    %2123 = vmatmul.mubr.f32.gmra.mrb[0].mxu0 %v1898
    %v2124 = vpop.f32.mrb[0].mxu0
    %v2125 = vadd.f32 %v1912, %v2124
    %v2126 = vpop.f32.mrb[0].mxu0
    %v2127 = vadd.f32 %v1916, %v2126
    %2128 = vmatprep.mubr.f32.mxu0 0.0
    %2129 = vmatmul.mubr.f32.gmra.mrb[0].mxu0 %v1899
    %v2130 = vpop.f32.mrb[0].mxu0
    %v2131 = vadd.f32 %v1912, %v2130
    %v2132 = vpop.f32.mrb[0].mxu0
    %v2133 = vadd.f32 %v1916, %v2132
    %2134 = vdwg.mxu0
    %2135 = vst [vmem:[#allocation2] sm:$0xff] %v1988
    %2136 = vst [vmem:[#allocation2 + $0x8] sm:$0xff] %v1990
    %2137 = vst [vmem:[#allocation2 + $0x10] sm:$0xff] %v2095
    %2138 = vst [vmem:[#allocation2 + $0x18] sm:$0xff] %v2097
    %2139 = vst [vmem:[#allocation2 + $0x20] sm:$0xff] %v1994
    %2140 = vst [vmem:[#allocation2 + $0x28] sm:$0xff] %v1996
    %2141 = vst [vmem:[#allocation2 + $0x30] sm:$0xff] %v2101
    %2142 = vst [vmem:[#allocation2 + $0x38] sm:$0xff] %v2103
    %2143 = vst [vmem:[#allocation2 + $0x40] sm:$0xff] %v2000
    %2144 = vst [vmem:[#allocation2 + $0x48] sm:$0xff] %v2002
    %2145 = vst [vmem:[#allocation2 + $0x50] sm:$0xff] %v2107
    %2146 = vst [vmem:[#allocation2 + $0x58] sm:$0xff] %v2109
    %2147 = vst [vmem:[#allocation2 + $0x60] sm:$0xff] %v2006
    %2148 = vst [vmem:[#allocation2 + $0x68] sm:$0xff] %v2008
    %2149 = vst [vmem:[#allocation2 + $0x70] sm:$0xff] %v2113
    %2150 = vst [vmem:[#allocation2 + $0x78] sm:$0xff] %v2115
    %2151 = vst [vmem:[#allocation2 + $0x80] sm:$0xff] %v2012
    %2152 = vst [vmem:[#allocation2 + $0x88] sm:$0xff] %v2014
    %2153 = vst [vmem:[#allocation2 + $0x90] sm:$0xff] %v2119
    %2154 = vst [vmem:[#allocation2 + $0x98] sm:$0xff] %v2121
    %2155 = vst [vmem:[#allocation2 + $0xa0] sm:$0xff] %v2018
    %2156 = vst [vmem:[#allocation2 + $0xa8] sm:$0xff] %v2020
    %2157 = vst [vmem:[#allocation2 + $0xb0] sm:$0xff] %v2125
    %2158 = vst [vmem:[#allocation2 + $0xb8] sm:$0xff] %v2127
    %2159 = vst [vmem:[#allocation2 + $0xc0] sm:$0xff] %v2024
    %2160 = vst [vmem:[#allocation2 + $0xc8] sm:$0xff] %v2026
    %2161 = vst [vmem:[#allocation2 + $0xd0] sm:$0xff] %v2131
    %2162 = vst [vmem:[#allocation2 + $0xd8] sm:$0xff] %v2133
    %v2163 = vld [vmem:[#allocation2] sm:$0xff]
    %v2164 = vld [vmem:[#allocation2 + $0x8] sm:$0xff]
    %v2165 = vld [vmem:[#allocation2 + $0x10] sm:$0xff]
    %v2166 = vld [vmem:[#allocation2 + $0x18] sm:$0xff]
    %2167 = vmatprep.subr.mxu0 %v1829
    %2168 = vmatpush1.msra.mxu0 %v1828
    %2169 = vmatprep.subr.mxu0 %v1833
    %2170 = vmatpush1.msra.mxu0 %v1832
    %2171 = vmatprep.subr.mxu0 %v1837
    %2172 = vmatpush1.msra.mxu0 %v1836
    %2173 = vmatprep.subr.mxu0 %v1841
    %2174 = vmatpush1.msra.mxu0 %v1840
    %2175 = vmatprep.subr.mxu0 %v1845
    %2176 = vmatpush1.msra.mxu0 %v1844
    %2177 = vmatprep.subr.mxu0 %v1849
    %2178 = vmatpush1.msra.mxu0 %v1848
    %2179 = vmatprep.subr.mxu0 %v1853
    %2180 = vmatpush1.msra.mxu0 %v1852
    %2181 = vmatprep.subr.mxu0 %v1857
    %2182 = vmatpush1.msra.mxu0 %v1856
    %2183 = vmatprep.subr.mxu0 %v1861
    %2184 = vmatpush1.msra.mxu0 %v1860
    %2185 = vmatprep.subr.mxu0 %v1865
    %2186 = vmatpush1.msra.mxu0 %v1864
    %2187 = vmatprep.subr.mxu0 %v1869
    %2188 = vmatpush1.msra.mxu0 %v1868
    %2189 = vmatprep.subr.mxu0 %v1873
    %2190 = vmatpush1.msra.mxu0 %v1872
    %2191 = vmatprep.subr.mxu0 %v1877
    %2192 = vmatpush1.msra.mxu0 %v1876
    %2193 = vmatprep.subr.mxu0 %v1881
    %2194 = vmatpush1.msra.mxu0 %v1880
    %2195 = vmatprep.subr.mxu0 %v1885
    %2196 = vmatpush1.msra.mxu0 %v1884
    %2197 = vmatprep.subr.mxu0 %v1889
    %2198 = vmatpush1.msra.mxu0 %v1888
    %2199 = vmatprep.subr.mxu0 0.0
    %2200 = vmatpush1.msra.mxu0 0.0
    %2201 = vmatprep.subr.mxu0 0.0
    %2202 = vmatpush1.msra.mxu0 0.0
    %2203 = vmatprep.subr.mxu0 0.0
    %2204 = vmatpush1.msra.mxu0 0.0
    %2205 = vmatprep.subr.mxu0 0.0
    %2206 = vmatpush1.msra.mxu0 0.0
    %2207 = vmatprep.subr.mxu0 0.0
    %2208 = vmatpush1.msra.mxu0 0.0
    %2209 = vmatprep.subr.mxu0 0.0
    %2210 = vmatpush1.msra.mxu0 0.0
    %2211 = vmatprep.subr.mxu0 0.0
    %2212 = vmatpush1.msra.mxu0 0.0
    %2213 = vmatprep.subr.mxu0 0.0
    %2214 = vmatpush1.msra.mxu0 0.0
    %2215 = vmatprep.subr.mxu0 0.0
    %2216 = vmatpush1.msra.mxu0 0.0
    %2217 = vmatprep.subr.mxu0 0.0
    %2218 = vmatpush1.msra.mxu0 0.0
    %2219 = vmatprep.subr.mxu0 0.0
    %2220 = vmatpush1.msra.mxu0 0.0
    %2221 = vmatprep.subr.mxu0 0.0
    %2222 = vmatpush1.msra.mxu0 0.0
    %2223 = vmatprep.subr.mxu0 0.0
    %2224 = vmatpush1.msra.mxu0 0.0
    %2225 = vmatprep.subr.mxu0 0.0
    %2226 = vmatpush1.msra.mxu0 0.0
    %2227 = vmatprep.subr.mxu0 0.0
    %2228 = vmatpush1.msra.mxu0 0.0
    %2229 = vmatprep.subr.mxu0 0.0
    %2230 = vmatpush1.msra.mxu0 0.0
    %2231 = vmatprep.mubr.f32.mxu0 0.0
    %2232 = vmatmul.mubr.f32.gmra.mrb[0].mxu0 0.0
    %v2233 = vpop.f32.mrb[0].mxu0
    %v2234 = vadd.f32 0.0, %v2233
    %v2235 = vpop.f32.mrb[0].mxu0
    %v2236 = vadd.f32 0.0, %v2235
    %2237 = vdwg.mxu0
    %2238 = vmatprep.subr.mxu0 %v1831
    %2239 = vmatpush1.msra.mxu0 %v1830
    %2240 = vmatprep.subr.mxu0 %v1835
    %2241 = vmatpush1.msra.mxu0 %v1834
    %2242 = vmatprep.subr.mxu0 %v1839
    %2243 = vmatpush1.msra.mxu0 %v1838
    %2244 = vmatprep.subr.mxu0 %v1843
    %2245 = vmatpush1.msra.mxu0 %v1842
    %2246 = vmatprep.subr.mxu0 %v1847
    %2247 = vmatpush1.msra.mxu0 %v1846
    %2248 = vmatprep.subr.mxu0 %v1851
    %2249 = vmatpush1.msra.mxu0 %v1850
    %2250 = vmatprep.subr.mxu0 %v1855
    %2251 = vmatpush1.msra.mxu0 %v1854
    %2252 = vmatprep.subr.mxu0 %v1859
    %2253 = vmatpush1.msra.mxu0 %v1858
    %2254 = vmatprep.subr.mxu0 %v1863
    %2255 = vmatpush1.msra.mxu0 %v1862
    %2256 = vmatprep.subr.mxu0 %v1867
    %2257 = vmatpush1.msra.mxu0 %v1866
    %2258 = vmatprep.subr.mxu0 %v1871
    %2259 = vmatpush1.msra.mxu0 %v1870
    %2260 = vmatprep.subr.mxu0 %v1875
    %2261 = vmatpush1.msra.mxu0 %v1874
    %2262 = vmatprep.subr.mxu0 %v1879
    %2263 = vmatpush1.msra.mxu0 %v1878
    %2264 = vmatprep.subr.mxu0 %v1883
    %2265 = vmatpush1.msra.mxu0 %v1882
    %2266 = vmatprep.subr.mxu0 %v1887
    %2267 = vmatpush1.msra.mxu0 %v1886
    %2268 = vmatprep.subr.mxu0 %v1891
    %2269 = vmatpush1.msra.mxu0 %v1890
    %2270 = vmatprep.subr.mxu0 0.0
    %2271 = vmatpush1.msra.mxu0 0.0
    %2272 = vmatprep.subr.mxu0 0.0
    %2273 = vmatpush1.msra.mxu0 0.0
    %2274 = vmatprep.subr.mxu0 0.0
    %2275 = vmatpush1.msra.mxu0 0.0
    %2276 = vmatprep.subr.mxu0 0.0
    %2277 = vmatpush1.msra.mxu0 0.0
    %2278 = vmatprep.subr.mxu0 0.0
    %2279 = vmatpush1.msra.mxu0 0.0
    %2280 = vmatprep.subr.mxu0 0.0
    %2281 = vmatpush1.msra.mxu0 0.0
    %2282 = vmatprep.subr.mxu0 0.0
    %2283 = vmatpush1.msra.mxu0 0.0
    %2284 = vmatprep.subr.mxu0 0.0
    %2285 = vmatpush1.msra.mxu0 0.0
    %2286 = vmatprep.subr.mxu0 0.0
    %2287 = vmatpush1.msra.mxu0 0.0
    %2288 = vmatprep.subr.mxu0 0.0
    %2289 = vmatpush1.msra.mxu0 0.0
    %2290 = vmatprep.subr.mxu0 0.0
    %2291 = vmatpush1.msra.mxu0 0.0
    %2292 = vmatprep.subr.mxu0 0.0
    %2293 = vmatpush1.msra.mxu0 0.0
    %2294 = vmatprep.subr.mxu0 0.0
    %2295 = vmatpush1.msra.mxu0 0.0
    %2296 = vmatprep.subr.mxu0 0.0
    %2297 = vmatpush1.msra.mxu0 0.0
    %2298 = vmatprep.subr.mxu0 0.0
    %2299 = vmatpush1.msra.mxu0 0.0
    %2300 = vmatprep.subr.mxu0 0.0
    %2301 = vmatpush1.msra.mxu0 0.0
    %2302 = vmatprep.mubr.f32.mxu0 0.0
    %2303 = vmatmul.mubr.f32.gmra.mrb[0].mxu0 0.0
    %v2304 = vpop.f32.mrb[0].mxu0
    %v2305 = vadd.f32 0.0, %v2304
    %v2306 = vpop.f32.mrb[0].mxu0
    %v2307 = vadd.f32 0.0, %v2306
    %2308 = vdwg.mxu0
    %v2309 = vadd.f32 %v2163, %v2234
    %v2310 = vadd.f32 %v2164, %v2236
    %v2311 = vadd.f32 %v2165, %v2305
    %v2312 = vadd.f32 %v2166, %v2307
    %v2313 = vxor.u32 %v2309, 2147483648
    %v2314 = vxor.u32 %v2310, 2147483648
    %v2315 = vxor.u32 %v2311, 2147483648
    %v2316 = vmul.f32 %v2313, 1.442695
    %v2317 = vpow.pop %v2316
    %v2318 = vmul.f32 %v2314, 1.442695
    %v2319 = vpow.pop %v2318
    %v2320 = vmul.f32 %v2315, 1.442695
    %v2321 = vpow.pop %v2320
    %v2322 = vadd.f32 %v2317, 1.0
    %v2323 = vadd.f32 %v2319, 1.0
    %v2324 = vadd.f32 %v2321, 1.0
    %v2325 = vrcp.pop %v2322
    %v2326 = vmul.f32 1.0, %v2325
    %v2327 = vrcp.pop %v2323
    %v2328 = vmul.f32 1.0, %v2327
    %v2329 = vrcp.pop %v2324
    %v2330 = vmul.f32 1.0, %v2329
    %v2331 = vtanh.pop %v2312
    %v2332 = vmul.f32 %v2328, 0.0
    %v2333 = vmul.f32 %v2326, %v2331
    %v2334 = vadd.f32 %v2332, %v2333
    %v2335 = vtanh.pop %v2334
    %v2336 = vmul.f32 %v2330, %v2335
    %2337 = vst [vmem:[#allocation4] sm:$0xff] %v2336
    %v2338 = vld [vmem:[#allocation2 + $0x20] sm:$0xff]
    %v2339 = vld [vmem:[#allocation2 + $0x28] sm:$0xff]
    %v2340 = vld [vmem:[#allocation2 + $0x30] sm:$0xff]
    %v2341 = vld [vmem:[#allocation2 + $0x38] sm:$0xff]
    %2342 = vmatprep.subr.mxu0 %v1829
    %2343 = vmatpush1.msra.mxu0 %v1828
    %2344 = vmatprep.subr.mxu0 %v1833
    %2345 = vmatpush1.msra.mxu0 %v1832
    %2346 = vmatprep.subr.mxu0 %v1837
    %2347 = vmatpush1.msra.mxu0 %v1836
    %2348 = vmatprep.subr.mxu0 %v1841
    %2349 = vmatpush1.msra.mxu0 %v1840
    %2350 = vmatprep.subr.mxu0 %v1845
    %2351 = vmatpush1.msra.mxu0 %v1844
    %2352 = vmatprep.subr.mxu0 %v1849
    %2353 = vmatpush1.msra.mxu0 %v1848
    %2354 = vmatprep.subr.mxu0 %v1853
    %2355 = vmatpush1.msra.mxu0 %v1852
    %2356 = vmatprep.subr.mxu0 %v1857
    %2357 = vmatpush1.msra.mxu0 %v1856
    %2358 = vmatprep.subr.mxu0 %v1861
    %2359 = vmatpush1.msra.mxu0 %v1860
    %2360 = vmatprep.subr.mxu0 %v1865
    %2361 = vmatpush1.msra.mxu0 %v1864
    %2362 = vmatprep.subr.mxu0 %v1869
    %2363 = vmatpush1.msra.mxu0 %v1868
    %2364 = vmatprep.subr.mxu0 %v1873
    %2365 = vmatpush1.msra.mxu0 %v1872
    %2366 = vmatprep.subr.mxu0 %v1877
    %2367 = vmatpush1.msra.mxu0 %v1876
    %2368 = vmatprep.subr.mxu0 %v1881
    %2369 = vmatpush1.msra.mxu0 %v1880
    %2370 = vmatprep.subr.mxu0 %v1885
    %2371 = vmatpush1.msra.mxu0 %v1884
    %2372 = vmatprep.subr.mxu0 %v1889
    %2373 = vmatpush1.msra.mxu0 %v1888
    %2374 = vmatprep.subr.mxu0 0.0
    %2375 = vmatpush1.msra.mxu0 0.0
    %2376 = vmatprep.subr.mxu0 0.0
    %2377 = vmatpush1.msra.mxu0 0.0
    %2378 = vmatprep.subr.mxu0 0.0
    %2379 = vmatpush1.msra.mxu0 0.0
    %2380 = vmatprep.subr.mxu0 0.0
    %2381 = vmatpush1.msra.mxu0 0.0
    %2382 = vmatprep.subr.mxu0 0.0
    %2383 = vmatpush1.msra.mxu0 0.0
    %2384 = vmatprep.subr.mxu0 0.0
    %2385 = vmatpush1.msra.mxu0 0.0
    %2386 = vmatprep.subr.mxu0 0.0
    %2387 = vmatpush1.msra.mxu0 0.0
    %2388 = vmatprep.subr.mxu0 0.0
    %2389 = vmatpush1.msra.mxu0 0.0
    %2390 = vmatprep.subr.mxu0 0.0
    %2391 = vmatpush1.msra.mxu0 0.0
    %2392 = vmatprep.subr.mxu0 0.0
    %2393 = vmatpush1.msra.mxu0 0.0
    %2394 = vmatprep.subr.mxu0 0.0
    %2395 = vmatpush1.msra.mxu0 0.0
    %2396 = vmatprep.subr.mxu0 0.0
    %2397 = vmatpush1.msra.mxu0 0.0
    %2398 = vmatprep.subr.mxu0 0.0
    %2399 = vmatpush1.msra.mxu0 0.0
    %2400 = vmatprep.subr.mxu0 0.0
    %2401 = vmatpush1.msra.mxu0 0.0
    %2402 = vmatprep.subr.mxu0 0.0
    %2403 = vmatpush1.msra.mxu0 0.0
    %2404 = vmatprep.subr.mxu0 0.0
    %2405 = vmatpush1.msra.mxu0 0.0
    %2406 = vmatprep.mubr.f32.mxu0 0.0
    %2407 = vmatmul.mubr.f32.gmra.mrb[0].mxu0 %v2336
    %v2408 = vpop.f32.mrb[0].mxu0
    %v2409 = vadd.f32 0.0, %v2408
    %v2410 = vpop.f32.mrb[0].mxu0
    %v2411 = vadd.f32 0.0, %v2410
    %2412 = vdwg.mxu0
    %2413 = vmatprep.subr.mxu0 %v1831
    %2414 = vmatpush1.msra.mxu0 %v1830
    %2415 = vmatprep.subr.mxu0 %v1835
    %2416 = vmatpush1.msra.mxu0 %v1834
    %2417 = vmatprep.subr.mxu0 %v1839
    %2418 = vmatpush1.msra.mxu0 %v1838
    %2419 = vmatprep.subr.mxu0 %v1843
    %2420 = vmatpush1.msra.mxu0 %v1842
    %2421 = vmatprep.subr.mxu0 %v1847
    %2422 = vmatpush1.msra.mxu0 %v1846
    %2423 = vmatprep.subr.mxu0 %v1851
    %2424 = vmatpush1.msra.mxu0 %v1850
    %2425 = vmatprep.subr.mxu0 %v1855
    %2426 = vmatpush1.msra.mxu0 %v1854
    %2427 = vmatprep.subr.mxu0 %v1859
    %2428 = vmatpush1.msra.mxu0 %v1858
    %2429 = vmatprep.subr.mxu0 %v1863
    %2430 = vmatpush1.msra.mxu0 %v1862
    %2431 = vmatprep.subr.mxu0 %v1867
    %2432 = vmatpush1.msra.mxu0 %v1866
    %2433 = vmatprep.subr.mxu0 %v1871
    %2434 = vmatpush1.msra.mxu0 %v1870
    %2435 = vmatprep.subr.mxu0 %v1875
    %2436 = vmatpush1.msra.mxu0 %v1874
    %2437 = vmatprep.subr.mxu0 %v1879
    %2438 = vmatpush1.msra.mxu0 %v1878
    %2439 = vmatprep.subr.mxu0 %v1883
    %2440 = vmatpush1.msra.mxu0 %v1882
    %2441 = vmatprep.subr.mxu0 %v1887
    %2442 = vmatpush1.msra.mxu0 %v1886
    %2443 = vmatprep.subr.mxu0 %v1891
    %2444 = vmatpush1.msra.mxu0 %v1890
    %2445 = vmatprep.subr.mxu0 0.0
    %2446 = vmatpush1.msra.mxu0 0.0
    %2447 = vmatprep.subr.mxu0 0.0
    %2448 = vmatpush1.msra.mxu0 0.0
    %2449 = vmatprep.subr.mxu0 0.0
    %2450 = vmatpush1.msra.mxu0 0.0
    %2451 = vmatprep.subr.mxu0 0.0
    %2452 = vmatpush1.msra.mxu0 0.0
    %2453 = vmatprep.subr.mxu0 0.0
    %2454 = vmatpush1.msra.mxu0 0.0
    %2455 = vmatprep.subr.mxu0 0.0
    %2456 = vmatpush1.msra.mxu0 0.0
    %2457 = vmatprep.subr.mxu0 0.0
    %2458 = vmatpush1.msra.mxu0 0.0
    %2459 = vmatprep.subr.mxu0 0.0
    %2460 = vmatpush1.msra.mxu0 0.0
    %2461 = vmatprep.subr.mxu0 0.0
    %2462 = vmatpush1.msra.mxu0 0.0
    %2463 = vmatprep.subr.mxu0 0.0
    %2464 = vmatpush1.msra.mxu0 0.0
    %2465 = vmatprep.subr.mxu0 0.0
    %2466 = vmatpush1.msra.mxu0 0.0
    %2467 = vmatprep.subr.mxu0 0.0
    %2468 = vmatpush1.msra.mxu0 0.0
    %2469 = vmatprep.subr.mxu0 0.0
    %2470 = vmatpush1.msra.mxu0 0.0
    %2471 = vmatprep.subr.mxu0 0.0
    %2472 = vmatpush1.msra.mxu0 0.0
    %2473 = vmatprep.subr.mxu0 0.0
    %2474 = vmatpush1.msra.mxu0 0.0
    %2475 = vmatprep.subr.mxu0 0.0
    %2476 = vmatpush1.msra.mxu0 0.0
    %2477 = vmatprep.mubr.f32.mxu0 0.0
    %2478 = vmatmul.mubr.f32.gmra.mrb[0].mxu0 %v2336
    %v2479 = vpop.f32.mrb[0].mxu0
    %v2480 = vadd.f32 0.0, %v2479
    %v2481 = vpop.f32.mrb[0].mxu0
    %v2482 = vadd.f32 0.0, %v2481
    %2483 = vdwg.mxu0
    %v2484 = vadd.f32 %v2338, %v2409
    %v2485 = vadd.f32 %v2339, %v2411
    %v2486 = vadd.f32 %v2340, %v2480
    %v2487 = vadd.f32 %v2341, %v2482
    %v2488 = vxor.u32 %v2484, 2147483648
    %v2489 = vxor.u32 %v2485, 2147483648
    %v2490 = vxor.u32 %v2486, 2147483648
    %v2491 = vmul.f32 %v2488, 1.442695
    %v2492 = vpow.pop %v2491
    %v2493 = vmul.f32 %v2489, 1.442695
    %v2494 = vpow.pop %v2493
    %v2495 = vmul.f32 %v2490, 1.442695
    %v2496 = vpow.pop %v2495
    %v2497 = vadd.f32 %v2492, 1.0
    %v2498 = vadd.f32 %v2494, 1.0
    %v2499 = vadd.f32 %v2496, 1.0
    %v2500 = vrcp.pop %v2497
    %v2501 = vmul.f32 1.0, %v2500
    %v2502 = vrcp.pop %v2498
    %v2503 = vmul.f32 1.0, %v2502
    %v2504 = vrcp.pop %v2499
    %v2505 = vmul.f32 1.0, %v2504
    %v2506 = vtanh.pop %v2487
    %v2507 = vmul.f32 %v2503, %v2334
    %v2508 = vmul.f32 %v2501, %v2506
    %v2509 = vadd.f32 %v2507, %v2508
    %v2510 = vtanh.pop %v2509
    %v2511 = vmul.f32 %v2505, %v2510
    %2512 = vst [vmem:[#allocation4 + $0x8] sm:$0xff] %v2511
    %v2513 = vld [vmem:[#allocation2 + $0x40] sm:$0xff]
    %v2514 = vld [vmem:[#allocation2 + $0x48] sm:$0xff]
    %v2515 = vld [vmem:[#allocation2 + $0x50] sm:$0xff]
    %v2516 = vld [vmem:[#allocation2 + $0x58] sm:$0xff]
    %2517 = vmatprep.subr.mxu0 %v1829
    %2518 = vmatpush1.msra.mxu0 %v1828
    %2519 = vmatprep.subr.mxu0 %v1833
    %2520 = vmatpush1.msra.mxu0 %v1832
    %2521 = vmatprep.subr.mxu0 %v1837
    %2522 = vmatpush1.msra.mxu0 %v1836
    %2523 = vmatprep.subr.mxu0 %v1841
    %2524 = vmatpush1.msra.mxu0 %v1840
    %2525 = vmatprep.subr.mxu0 %v1845
    %2526 = vmatpush1.msra.mxu0 %v1844
    %2527 = vmatprep.subr.mxu0 %v1849
    %2528 = vmatpush1.msra.mxu0 %v1848
    %2529 = vmatprep.subr.mxu0 %v1853
    %2530 = vmatpush1.msra.mxu0 %v1852
    %2531 = vmatprep.subr.mxu0 %v1857
    %2532 = vmatpush1.msra.mxu0 %v1856
    %2533 = vmatprep.subr.mxu0 %v1861
    %2534 = vmatpush1.msra.mxu0 %v1860
    %2535 = vmatprep.subr.mxu0 %v1865
    %2536 = vmatpush1.msra.mxu0 %v1864
    %2537 = vmatprep.subr.mxu0 %v1869
    %2538 = vmatpush1.msra.mxu0 %v1868
    %2539 = vmatprep.subr.mxu0 %v1873
    %2540 = vmatpush1.msra.mxu0 %v1872
    %2541 = vmatprep.subr.mxu0 %v1877
    %2542 = vmatpush1.msra.mxu0 %v1876
    %2543 = vmatprep.subr.mxu0 %v1881
    %2544 = vmatpush1.msra.mxu0 %v1880
    %2545 = vmatprep.subr.mxu0 %v1885
    %2546 = vmatpush1.msra.mxu0 %v1884
    %2547 = vmatprep.subr.mxu0 %v1889
    %2548 = vmatpush1.msra.mxu0 %v1888
    %2549 = vmatprep.subr.mxu0 0.0
    %2550 = vmatpush1.msra.mxu0 0.0
    %2551 = vmatprep.subr.mxu0 0.0
    %2552 = vmatpush1.msra.mxu0 0.0
    %2553 = vmatprep.subr.mxu0 0.0
    %2554 = vmatpush1.msra.mxu0 0.0
    %2555 = vmatprep.subr.mxu0 0.0
    %2556 = vmatpush1.msra.mxu0 0.0
    %2557 = vmatprep.subr.mxu0 0.0
    %2558 = vmatpush1.msra.mxu0 0.0
    %2559 = vmatprep.subr.mxu0 0.0
    %2560 = vmatpush1.msra.mxu0 0.0
    %2561 = vmatprep.subr.mxu0 0.0
    %2562 = vmatpush1.msra.mxu0 0.0
    %2563 = vmatprep.subr.mxu0 0.0
    %2564 = vmatpush1.msra.mxu0 0.0
    %2565 = vmatprep.subr.mxu0 0.0
    %2566 = vmatpush1.msra.mxu0 0.0
    %2567 = vmatprep.subr.mxu0 0.0
    %2568 = vmatpush1.msra.mxu0 0.0
    %2569 = vmatprep.subr.mxu0 0.0
    %2570 = vmatpush1.msra.mxu0 0.0
    %2571 = vmatprep.subr.mxu0 0.0
    %2572 = vmatpush1.msra.mxu0 0.0
    %2573 = vmatprep.subr.mxu0 0.0
    %2574 = vmatpush1.msra.mxu0 0.0
    %2575 = vmatprep.subr.mxu0 0.0
    %2576 = vmatpush1.msra.mxu0 0.0
    %2577 = vmatprep.subr.mxu0 0.0
    %2578 = vmatpush1.msra.mxu0 0.0
    %2579 = vmatprep.subr.mxu0 0.0
    %2580 = vmatpush1.msra.mxu0 0.0
    %2581 = vmatprep.mubr.f32.mxu0 0.0
    %2582 = vmatmul.mubr.f32.gmra.mrb[0].mxu0 %v2511
    %v2583 = vpop.f32.mrb[0].mxu0
    %v2584 = vadd.f32 0.0, %v2583
    %v2585 = vpop.f32.mrb[0].mxu0
    %v2586 = vadd.f32 0.0, %v2585
    %2587 = vdwg.mxu0
    %2588 = vmatprep.subr.mxu0 %v1831
    %2589 = vmatpush1.msra.mxu0 %v1830
    %2590 = vmatprep.subr.mxu0 %v1835
    %2591 = vmatpush1.msra.mxu0 %v1834
    %2592 = vmatprep.subr.mxu0 %v1839
    %2593 = vmatpush1.msra.mxu0 %v1838
    %2594 = vmatprep.subr.mxu0 %v1843
    %2595 = vmatpush1.msra.mxu0 %v1842
    %2596 = vmatprep.subr.mxu0 %v1847
    %2597 = vmatpush1.msra.mxu0 %v1846
    %2598 = vmatprep.subr.mxu0 %v1851
    %2599 = vmatpush1.msra.mxu0 %v1850
    %2600 = vmatprep.subr.mxu0 %v1855
    %2601 = vmatpush1.msra.mxu0 %v1854
    %2602 = vmatprep.subr.mxu0 %v1859
    %2603 = vmatpush1.msra.mxu0 %v1858
    %2604 = vmatprep.subr.mxu0 %v1863
    %2605 = vmatpush1.msra.mxu0 %v1862
    %2606 = vmatprep.subr.mxu0 %v1867
    %2607 = vmatpush1.msra.mxu0 %v1866
    %2608 = vmatprep.subr.mxu0 %v1871
    %2609 = vmatpush1.msra.mxu0 %v1870
    %2610 = vmatprep.subr.mxu0 %v1875
    %2611 = vmatpush1.msra.mxu0 %v1874
    %2612 = vmatprep.subr.mxu0 %v1879
    %2613 = vmatpush1.msra.mxu0 %v1878
    %2614 = vmatprep.subr.mxu0 %v1883
    %2615 = vmatpush1.msra.mxu0 %v1882
    %2616 = vmatprep.subr.mxu0 %v1887
    %2617 = vmatpush1.msra.mxu0 %v1886
    %2618 = vmatprep.subr.mxu0 %v1891
    %2619 = vmatpush1.msra.mxu0 %v1890
    %2620 = vmatprep.subr.mxu0 0.0
    %2621 = vmatpush1.msra.mxu0 0.0
    %2622 = vmatprep.subr.mxu0 0.0
    %2623 = vmatpush1.msra.mxu0 0.0
    %2624 = vmatprep.subr.mxu0 0.0
    %2625 = vmatpush1.msra.mxu0 0.0
    %2626 = vmatprep.subr.mxu0 0.0
    %2627 = vmatpush1.msra.mxu0 0.0
    %2628 = vmatprep.subr.mxu0 0.0
    %2629 = vmatpush1.msra.mxu0 0.0
    %2630 = vmatprep.subr.mxu0 0.0
    %2631 = vmatpush1.msra.mxu0 0.0
    %2632 = vmatprep.subr.mxu0 0.0
    %2633 = vmatpush1.msra.mxu0 0.0
    %2634 = vmatprep.subr.mxu0 0.0
    %2635 = vmatpush1.msra.mxu0 0.0
    %2636 = vmatprep.subr.mxu0 0.0
    %2637 = vmatpush1.msra.mxu0 0.0
    %2638 = vmatprep.subr.mxu0 0.0
    %2639 = vmatpush1.msra.mxu0 0.0
    %2640 = vmatprep.subr.mxu0 0.0
    %2641 = vmatpush1.msra.mxu0 0.0
    %2642 = vmatprep.subr.mxu0 0.0
    %2643 = vmatpush1.msra.mxu0 0.0
    %2644 = vmatprep.subr.mxu0 0.0
    %2645 = vmatpush1.msra.mxu0 0.0
    %2646 = vmatprep.subr.mxu0 0.0
    %2647 = vmatpush1.msra.mxu0 0.0
    %2648 = vmatprep.subr.mxu0 0.0
    %2649 = vmatpush1.msra.mxu0 0.0
    %2650 = vmatprep.subr.mxu0 0.0
    %2651 = vmatpush1.msra.mxu0 0.0
    %2652 = vmatprep.mubr.f32.mxu0 0.0
    %2653 = vmatmul.mubr.f32.gmra.mrb[0].mxu0 %v2511
    %v2654 = vpop.f32.mrb[0].mxu0
    %v2655 = vadd.f32 0.0, %v2654
    %v2656 = vpop.f32.mrb[0].mxu0
    %v2657 = vadd.f32 0.0, %v2656
    %2658 = vdwg.mxu0
    %v2659 = vadd.f32 %v2513, %v2584
    %v2660 = vadd.f32 %v2514, %v2586
    %v2661 = vadd.f32 %v2515, %v2655
    %v2662 = vadd.f32 %v2516, %v2657
    %v2663 = vxor.u32 %v2659, 2147483648
    %v2664 = vxor.u32 %v2660, 2147483648
    %v2665 = vxor.u32 %v2661, 2147483648
    %v2666 = vmul.f32 %v2663, 1.442695
    %v2667 = vpow.pop %v2666
    %v2668 = vmul.f32 %v2664, 1.442695
    %v2669 = vpow.pop %v2668
    %v2670 = vmul.f32 %v2665, 1.442695
    %v2671 = vpow.pop %v2670
    %v2672 = vadd.f32 %v2667, 1.0
    %v2673 = vadd.f32 %v2669, 1.0
    %v2674 = vadd.f32 %v2671, 1.0
    %v2675 = vrcp.pop %v2672
    %v2676 = vmul.f32 1.0, %v2675
    %v2677 = vrcp.pop %v2673
    %v2678 = vmul.f32 1.0, %v2677
    %v2679 = vrcp.pop %v2674
    %v2680 = vmul.f32 1.0, %v2679
    %v2681 = vtanh.pop %v2662
    %v2682 = vmul.f32 %v2678, %v2509
    %v2683 = vmul.f32 %v2676, %v2681
    %v2684 = vadd.f32 %v2682, %v2683
    %v2685 = vtanh.pop %v2684
    %v2686 = vmul.f32 %v2680, %v2685
    %2687 = vst [vmem:[#allocation4 + $0x10] sm:$0xff] %v2686
    %v2688 = vld [vmem:[#allocation2 + $0x60] sm:$0xff]
    %v2689 = vld [vmem:[#allocation2 + $0x68] sm:$0xff]
    %v2690 = vld [vmem:[#allocation2 + $0x70] sm:$0xff]
    %v2691 = vld [vmem:[#allocation2 + $0x78] sm:$0xff]
    %2692 = vmatprep.subr.mxu0 %v1829
    %2693 = vmatpush1.msra.mxu0 %v1828
    %2694 = vmatprep.subr.mxu0 %v1833
    %2695 = vmatpush1.msra.mxu0 %v1832
    %2696 = vmatprep.subr.mxu0 %v1837
    %2697 = vmatpush1.msra.mxu0 %v1836
    %2698 = vmatprep.subr.mxu0 %v1841
    %2699 = vmatpush1.msra.mxu0 %v1840
    %2700 = vmatprep.subr.mxu0 %v1845
    %2701 = vmatpush1.msra.mxu0 %v1844
    %2702 = vmatprep.subr.mxu0 %v1849
    %2703 = vmatpush1.msra.mxu0 %v1848
    %2704 = vmatprep.subr.mxu0 %v1853
    %2705 = vmatpush1.msra.mxu0 %v1852
    %2706 = vmatprep.subr.mxu0 %v1857
    %2707 = vmatpush1.msra.mxu0 %v1856
    %2708 = vmatprep.subr.mxu0 %v1861
    %2709 = vmatpush1.msra.mxu0 %v1860
    %2710 = vmatprep.subr.mxu0 %v1865
    %2711 = vmatpush1.msra.mxu0 %v1864
    %2712 = vmatprep.subr.mxu0 %v1869
    %2713 = vmatpush1.msra.mxu0 %v1868
    %2714 = vmatprep.subr.mxu0 %v1873
    %2715 = vmatpush1.msra.mxu0 %v1872
    %2716 = vmatprep.subr.mxu0 %v1877
    %2717 = vmatpush1.msra.mxu0 %v1876
    %2718 = vmatprep.subr.mxu0 %v1881
    %2719 = vmatpush1.msra.mxu0 %v1880
    %2720 = vmatprep.subr.mxu0 %v1885
    %2721 = vmatpush1.msra.mxu0 %v1884
    %2722 = vmatprep.subr.mxu0 %v1889
    %2723 = vmatpush1.msra.mxu0 %v1888
    %2724 = vmatprep.subr.mxu0 0.0
    %2725 = vmatpush1.msra.mxu0 0.0
    %2726 = vmatprep.subr.mxu0 0.0
    %2727 = vmatpush1.msra.mxu0 0.0
    %2728 = vmatprep.subr.mxu0 0.0
    %2729 = vmatpush1.msra.mxu0 0.0
    %2730 = vmatprep.subr.mxu0 0.0
    %2731 = vmatpush1.msra.mxu0 0.0
    %2732 = vmatprep.subr.mxu0 0.0
    %2733 = vmatpush1.msra.mxu0 0.0
    %2734 = vmatprep.subr.mxu0 0.0
    %2735 = vmatpush1.msra.mxu0 0.0
    %2736 = vmatprep.subr.mxu0 0.0
    %2737 = vmatpush1.msra.mxu0 0.0
    %2738 = vmatprep.subr.mxu0 0.0
    %2739 = vmatpush1.msra.mxu0 0.0
    %2740 = vmatprep.subr.mxu0 0.0
    %2741 = vmatpush1.msra.mxu0 0.0
    %2742 = vmatprep.subr.mxu0 0.0
    %2743 = vmatpush1.msra.mxu0 0.0
    %2744 = vmatprep.subr.mxu0 0.0
    %2745 = vmatpush1.msra.mxu0 0.0
    %2746 = vmatprep.subr.mxu0 0.0
    %2747 = vmatpush1.msra.mxu0 0.0
    %2748 = vmatprep.subr.mxu0 0.0
    %2749 = vmatpush1.msra.mxu0 0.0
    %2750 = vmatprep.subr.mxu0 0.0
    %2751 = vmatpush1.msra.mxu0 0.0
    %2752 = vmatprep.subr.mxu0 0.0
    %2753 = vmatpush1.msra.mxu0 0.0
    %2754 = vmatprep.subr.mxu0 0.0
    %2755 = vmatpush1.msra.mxu0 0.0
    %2756 = vmatprep.mubr.f32.mxu0 0.0
    %2757 = vmatmul.mubr.f32.gmra.mrb[0].mxu0 %v2686
    %v2758 = vpop.f32.mrb[0].mxu0
    %v2759 = vadd.f32 0.0, %v2758
    %v2760 = vpop.f32.mrb[0].mxu0
    %v2761 = vadd.f32 0.0, %v2760
    %2762 = vdwg.mxu0
    %2763 = vmatprep.subr.mxu0 %v1831
    %2764 = vmatpush1.msra.mxu0 %v1830
    %2765 = vmatprep.subr.mxu0 %v1835
    %2766 = vmatpush1.msra.mxu0 %v1834
    %2767 = vmatprep.subr.mxu0 %v1839
    %2768 = vmatpush1.msra.mxu0 %v1838
    %2769 = vmatprep.subr.mxu0 %v1843
    %2770 = vmatpush1.msra.mxu0 %v1842
    %2771 = vmatprep.subr.mxu0 %v1847
    %2772 = vmatpush1.msra.mxu0 %v1846
    %2773 = vmatprep.subr.mxu0 %v1851
    %2774 = vmatpush1.msra.mxu0 %v1850
    %2775 = vmatprep.subr.mxu0 %v1855
    %2776 = vmatpush1.msra.mxu0 %v1854
    %2777 = vmatprep.subr.mxu0 %v1859
    %2778 = vmatpush1.msra.mxu0 %v1858
    %2779 = vmatprep.subr.mxu0 %v1863
    %2780 = vmatpush1.msra.mxu0 %v1862
    %2781 = vmatprep.subr.mxu0 %v1867
    %2782 = vmatpush1.msra.mxu0 %v1866
    %2783 = vmatprep.subr.mxu0 %v1871
    %2784 = vmatpush1.msra.mxu0 %v1870
    %2785 = vmatprep.subr.mxu0 %v1875
    %2786 = vmatpush1.msra.mxu0 %v1874
    %2787 = vmatprep.subr.mxu0 %v1879
    %2788 = vmatpush1.msra.mxu0 %v1878
    %2789 = vmatprep.subr.mxu0 %v1883
    %2790 = vmatpush1.msra.mxu0 %v1882
    %2791 = vmatprep.subr.mxu0 %v1887
    %2792 = vmatpush1.msra.mxu0 %v1886
    %2793 = vmatprep.subr.mxu0 %v1891
    %2794 = vmatpush1.msra.mxu0 %v1890
    %2795 = vmatprep.subr.mxu0 0.0
    %2796 = vmatpush1.msra.mxu0 0.0
    %2797 = vmatprep.subr.mxu0 0.0
    %2798 = vmatpush1.msra.mxu0 0.0
    %2799 = vmatprep.subr.mxu0 0.0
    %2800 = vmatpush1.msra.mxu0 0.0
    %2801 = vmatprep.subr.mxu0 0.0
    %2802 = vmatpush1.msra.mxu0 0.0
    %2803 = vmatprep.subr.mxu0 0.0
    %2804 = vmatpush1.msra.mxu0 0.0
    %2805 = vmatprep.subr.mxu0 0.0
    %2806 = vmatpush1.msra.mxu0 0.0
    %2807 = vmatprep.subr.mxu0 0.0
    %2808 = vmatpush1.msra.mxu0 0.0
    %2809 = vmatprep.subr.mxu0 0.0
    %2810 = vmatpush1.msra.mxu0 0.0
    %2811 = vmatprep.subr.mxu0 0.0
    %2812 = vmatpush1.msra.mxu0 0.0
    %2813 = vmatprep.subr.mxu0 0.0
    %2814 = vmatpush1.msra.mxu0 0.0
    %2815 = vmatprep.subr.mxu0 0.0
    %2816 = vmatpush1.msra.mxu0 0.0
    %2817 = vmatprep.subr.mxu0 0.0
    %2818 = vmatpush1.msra.mxu0 0.0
    %2819 = vmatprep.subr.mxu0 0.0
    %2820 = vmatpush1.msra.mxu0 0.0
    %2821 = vmatprep.subr.mxu0 0.0
    %2822 = vmatpush1.msra.mxu0 0.0
    %2823 = vmatprep.subr.mxu0 0.0
    %2824 = vmatpush1.msra.mxu0 0.0
    %2825 = vmatprep.subr.mxu0 0.0
    %2826 = vmatpush1.msra.mxu0 0.0
    %2827 = vmatprep.mubr.f32.mxu0 0.0
    %2828 = vmatmul.mubr.f32.gmra.mrb[0].mxu0 %v2686
    %v2829 = vpop.f32.mrb[0].mxu0
    %v2830 = vadd.f32 0.0, %v2829
    %v2831 = vpop.f32.mrb[0].mxu0
    %v2832 = vadd.f32 0.0, %v2831
    %2833 = vdwg.mxu0
    %v2834 = vadd.f32 %v2688, %v2759
    %v2835 = vadd.f32 %v2689, %v2761
    %v2836 = vadd.f32 %v2690, %v2830
    %v2837 = vadd.f32 %v2691, %v2832
    %v2838 = vxor.u32 %v2834, 2147483648
    %v2839 = vxor.u32 %v2835, 2147483648
    %v2840 = vxor.u32 %v2836, 2147483648
    %v2841 = vmul.f32 %v2838, 1.442695
    %v2842 = vpow.pop %v2841
    %v2843 = vmul.f32 %v2839, 1.442695
    %v2844 = vpow.pop %v2843
    %v2845 = vmul.f32 %v2840, 1.442695
    %v2846 = vpow.pop %v2845
    %v2847 = vadd.f32 %v2842, 1.0
    %v2848 = vadd.f32 %v2844, 1.0
    %v2849 = vadd.f32 %v2846, 1.0
    %v2850 = vrcp.pop %v2847
    %v2851 = vmul.f32 1.0, %v2850
    %v2852 = vrcp.pop %v2848
    %v2853 = vmul.f32 1.0, %v2852
    %v2854 = vrcp.pop %v2849
    %v2855 = vmul.f32 1.0, %v2854
    %v2856 = vtanh.pop %v2837
    %v2857 = vmul.f32 %v2853, %v2684
    %v2858 = vmul.f32 %v2851, %v2856
    %v2859 = vadd.f32 %v2857, %v2858
    %v2860 = vtanh.pop %v2859
    %v2861 = vmul.f32 %v2855, %v2860
    %2862 = vst [vmem:[#allocation4 + $0x18] sm:$0xff] %v2861
    %v2863 = vld [vmem:[#allocation2 + $0x80] sm:$0xff]
    %v2864 = vld [vmem:[#allocation2 + $0x88] sm:$0xff]
    %v2865 = vld [vmem:[#allocation2 + $0x90] sm:$0xff]
    %v2866 = vld [vmem:[#allocation2 + $0x98] sm:$0xff]
    %2867 = vmatprep.subr.mxu0 %v1829
    %2868 = vmatpush1.msra.mxu0 %v1828
    %2869 = vmatprep.subr.mxu0 %v1833
    %2870 = vmatpush1.msra.mxu0 %v1832
    %2871 = vmatprep.subr.mxu0 %v1837
    %2872 = vmatpush1.msra.mxu0 %v1836
    %2873 = vmatprep.subr.mxu0 %v1841
    %2874 = vmatpush1.msra.mxu0 %v1840
    %2875 = vmatprep.subr.mxu0 %v1845
    %2876 = vmatpush1.msra.mxu0 %v1844
    %2877 = vmatprep.subr.mxu0 %v1849
    %2878 = vmatpush1.msra.mxu0 %v1848
    %2879 = vmatprep.subr.mxu0 %v1853
    %2880 = vmatpush1.msra.mxu0 %v1852
    %2881 = vmatprep.subr.mxu0 %v1857
    %2882 = vmatpush1.msra.mxu0 %v1856
    %2883 = vmatprep.subr.mxu0 %v1861
    %2884 = vmatpush1.msra.mxu0 %v1860
    %2885 = vmatprep.subr.mxu0 %v1865
    %2886 = vmatpush1.msra.mxu0 %v1864
    %2887 = vmatprep.subr.mxu0 %v1869
    %2888 = vmatpush1.msra.mxu0 %v1868
    %2889 = vmatprep.subr.mxu0 %v1873
    %2890 = vmatpush1.msra.mxu0 %v1872
    %2891 = vmatprep.subr.mxu0 %v1877
    %2892 = vmatpush1.msra.mxu0 %v1876
    %2893 = vmatprep.subr.mxu0 %v1881
    %2894 = vmatpush1.msra.mxu0 %v1880
    %2895 = vmatprep.subr.mxu0 %v1885
    %2896 = vmatpush1.msra.mxu0 %v1884
    %2897 = vmatprep.subr.mxu0 %v1889
    %2898 = vmatpush1.msra.mxu0 %v1888
    %2899 = vmatprep.subr.mxu0 0.0
    %2900 = vmatpush1.msra.mxu0 0.0
    %2901 = vmatprep.subr.mxu0 0.0
    %2902 = vmatpush1.msra.mxu0 0.0
    %2903 = vmatprep.subr.mxu0 0.0
    %2904 = vmatpush1.msra.mxu0 0.0
    %2905 = vmatprep.subr.mxu0 0.0
    %2906 = vmatpush1.msra.mxu0 0.0
    %2907 = vmatprep.subr.mxu0 0.0
    %2908 = vmatpush1.msra.mxu0 0.0
    %2909 = vmatprep.subr.mxu0 0.0
    %2910 = vmatpush1.msra.mxu0 0.0
    %2911 = vmatprep.subr.mxu0 0.0
    %2912 = vmatpush1.msra.mxu0 0.0
    %2913 = vmatprep.subr.mxu0 0.0
    %2914 = vmatpush1.msra.mxu0 0.0
    %2915 = vmatprep.subr.mxu0 0.0
    %2916 = vmatpush1.msra.mxu0 0.0
    %2917 = vmatprep.subr.mxu0 0.0
    %2918 = vmatpush1.msra.mxu0 0.0
    %2919 = vmatprep.subr.mxu0 0.0
    %2920 = vmatpush1.msra.mxu0 0.0
    %2921 = vmatprep.subr.mxu0 0.0
    %2922 = vmatpush1.msra.mxu0 0.0
    %2923 = vmatprep.subr.mxu0 0.0
    %2924 = vmatpush1.msra.mxu0 0.0
    %2925 = vmatprep.subr.mxu0 0.0
    %2926 = vmatpush1.msra.mxu0 0.0
    %2927 = vmatprep.subr.mxu0 0.0
    %2928 = vmatpush1.msra.mxu0 0.0
    %2929 = vmatprep.subr.mxu0 0.0
    %2930 = vmatpush1.msra.mxu0 0.0
    %2931 = vmatprep.mubr.f32.mxu0 0.0
    %2932 = vmatmul.mubr.f32.gmra.mrb[0].mxu0 %v2861
    %v2933 = vpop.f32.mrb[0].mxu0
    %v2934 = vadd.f32 0.0, %v2933
    %v2935 = vpop.f32.mrb[0].mxu0
    %v2936 = vadd.f32 0.0, %v2935
    %2937 = vdwg.mxu0
    %2938 = vmatprep.subr.mxu0 %v1831
    %2939 = vmatpush1.msra.mxu0 %v1830
    %2940 = vmatprep.subr.mxu0 %v1835
    %2941 = vmatpush1.msra.mxu0 %v1834
    %2942 = vmatprep.subr.mxu0 %v1839
    %2943 = vmatpush1.msra.mxu0 %v1838
    %2944 = vmatprep.subr.mxu0 %v1843
    %2945 = vmatpush1.msra.mxu0 %v1842
    %2946 = vmatprep.subr.mxu0 %v1847
    %2947 = vmatpush1.msra.mxu0 %v1846
    %2948 = vmatprep.subr.mxu0 %v1851
    %2949 = vmatpush1.msra.mxu0 %v1850
    %2950 = vmatprep.subr.mxu0 %v1855
    %2951 = vmatpush1.msra.mxu0 %v1854
    %2952 = vmatprep.subr.mxu0 %v1859
    %2953 = vmatpush1.msra.mxu0 %v1858
    %2954 = vmatprep.subr.mxu0 %v1863
    %2955 = vmatpush1.msra.mxu0 %v1862
    %2956 = vmatprep.subr.mxu0 %v1867
    %2957 = vmatpush1.msra.mxu0 %v1866
    %2958 = vmatprep.subr.mxu0 %v1871
    %2959 = vmatpush1.msra.mxu0 %v1870
    %2960 = vmatprep.subr.mxu0 %v1875
    %2961 = vmatpush1.msra.mxu0 %v1874
    %2962 = vmatprep.subr.mxu0 %v1879
    %2963 = vmatpush1.msra.mxu0 %v1878
    %2964 = vmatprep.subr.mxu0 %v1883
    %2965 = vmatpush1.msra.mxu0 %v1882
    %2966 = vmatprep.subr.mxu0 %v1887
    %2967 = vmatpush1.msra.mxu0 %v1886
    %2968 = vmatprep.subr.mxu0 %v1891
    %2969 = vmatpush1.msra.mxu0 %v1890
    %2970 = vmatprep.subr.mxu0 0.0
    %2971 = vmatpush1.msra.mxu0 0.0
    %2972 = vmatprep.subr.mxu0 0.0
    %2973 = vmatpush1.msra.mxu0 0.0
    %2974 = vmatprep.subr.mxu0 0.0
    %2975 = vmatpush1.msra.mxu0 0.0
    %2976 = vmatprep.subr.mxu0 0.0
    %2977 = vmatpush1.msra.mxu0 0.0
    %2978 = vmatprep.subr.mxu0 0.0
    %2979 = vmatpush1.msra.mxu0 0.0
    %2980 = vmatprep.subr.mxu0 0.0
    %2981 = vmatpush1.msra.mxu0 0.0
    %2982 = vmatprep.subr.mxu0 0.0
    %2983 = vmatpush1.msra.mxu0 0.0
    %2984 = vmatprep.subr.mxu0 0.0
    %2985 = vmatpush1.msra.mxu0 0.0
    %2986 = vmatprep.subr.mxu0 0.0
    %2987 = vmatpush1.msra.mxu0 0.0
    %2988 = vmatprep.subr.mxu0 0.0
    %2989 = vmatpush1.msra.mxu0 0.0
    %2990 = vmatprep.subr.mxu0 0.0
    %2991 = vmatpush1.msra.mxu0 0.0
    %2992 = vmatprep.subr.mxu0 0.0
    %2993 = vmatpush1.msra.mxu0 0.0
    %2994 = vmatprep.subr.mxu0 0.0
    %2995 = vmatpush1.msra.mxu0 0.0
    %2996 = vmatprep.subr.mxu0 0.0
    %2997 = vmatpush1.msra.mxu0 0.0
    %2998 = vmatprep.subr.mxu0 0.0
    %2999 = vmatpush1.msra.mxu0 0.0
    %3000 = vmatprep.subr.mxu0 0.0
    %3001 = vmatpush1.msra.mxu0 0.0
    %3002 = vmatprep.mubr.f32.mxu0 0.0
    %3003 = vmatmul.mubr.f32.gmra.mrb[0].mxu0 %v2861
    %v3004 = vpop.f32.mrb[0].mxu0
    %v3005 = vadd.f32 0.0, %v3004
    %v3006 = vpop.f32.mrb[0].mxu0
    %v3007 = vadd.f32 0.0, %v3006
    %3008 = vdwg.mxu0
    %v3009 = vadd.f32 %v2863, %v2934
    %v3010 = vadd.f32 %v2864, %v2936
    %v3011 = vadd.f32 %v2865, %v3005
    %v3012 = vadd.f32 %v2866, %v3007
    %v3013 = vxor.u32 %v3009, 2147483648
    %v3014 = vxor.u32 %v3010, 2147483648
    %v3015 = vxor.u32 %v3011, 2147483648
    %v3016 = vmul.f32 %v3013, 1.442695
    %v3017 = vpow.pop %v3016
    %v3018 = vmul.f32 %v3014, 1.442695
    %v3019 = vpow.pop %v3018
    %v3020 = vmul.f32 %v3015, 1.442695
    %v3021 = vpow.pop %v3020
    %v3022 = vadd.f32 %v3017, 1.0
    %v3023 = vadd.f32 %v3019, 1.0
    %v3024 = vadd.f32 %v3021, 1.0
    %v3025 = vrcp.pop %v3022
    %v3026 = vmul.f32 1.0, %v3025
    %v3027 = vrcp.pop %v3023
    %v3028 = vmul.f32 1.0, %v3027
    %v3029 = vrcp.pop %v3024
    %v3030 = vmul.f32 1.0, %v3029
    %v3031 = vtanh.pop %v3012
    %v3032 = vmul.f32 %v3028, %v2859
    %v3033 = vmul.f32 %v3026, %v3031
    %v3034 = vadd.f32 %v3032, %v3033
    %v3035 = vtanh.pop %v3034
    %v3036 = vmul.f32 %v3030, %v3035
    %3037 = vst [vmem:[#allocation4 + $0x20] sm:$0xff] %v3036
    %v3038 = vld [vmem:[#allocation2 + $0xa0] sm:$0xff]
    %v3039 = vld [vmem:[#allocation2 + $0xa8] sm:$0xff]
    %v3040 = vld [vmem:[#allocation2 + $0xb0] sm:$0xff]
    %v3041 = vld [vmem:[#allocation2 + $0xb8] sm:$0xff]
    %3042 = vmatprep.subr.mxu0 %v1829
    %3043 = vmatpush1.msra.mxu0 %v1828
    %3044 = vmatprep.subr.mxu0 %v1833
    %3045 = vmatpush1.msra.mxu0 %v1832
    %3046 = vmatprep.subr.mxu0 %v1837
    %3047 = vmatpush1.msra.mxu0 %v1836
    %3048 = vmatprep.subr.mxu0 %v1841
    %3049 = vmatpush1.msra.mxu0 %v1840
    %3050 = vmatprep.subr.mxu0 %v1845
    %3051 = vmatpush1.msra.mxu0 %v1844
    %3052 = vmatprep.subr.mxu0 %v1849
    %3053 = vmatpush1.msra.mxu0 %v1848
    %3054 = vmatprep.subr.mxu0 %v1853
    %3055 = vmatpush1.msra.mxu0 %v1852
    %3056 = vmatprep.subr.mxu0 %v1857
    %3057 = vmatpush1.msra.mxu0 %v1856
    %3058 = vmatprep.subr.mxu0 %v1861
    %3059 = vmatpush1.msra.mxu0 %v1860
    %3060 = vmatprep.subr.mxu0 %v1865
    %3061 = vmatpush1.msra.mxu0 %v1864
    %3062 = vmatprep.subr.mxu0 %v1869
    %3063 = vmatpush1.msra.mxu0 %v1868
    %3064 = vmatprep.subr.mxu0 %v1873
    %3065 = vmatpush1.msra.mxu0 %v1872
    %3066 = vmatprep.subr.mxu0 %v1877
    %3067 = vmatpush1.msra.mxu0 %v1876
    %3068 = vmatprep.subr.mxu0 %v1881
    %3069 = vmatpush1.msra.mxu0 %v1880
    %3070 = vmatprep.subr.mxu0 %v1885
    %3071 = vmatpush1.msra.mxu0 %v1884
    %3072 = vmatprep.subr.mxu0 %v1889
    %3073 = vmatpush1.msra.mxu0 %v1888
    %3074 = vmatprep.subr.mxu0 0.0
    %3075 = vmatpush1.msra.mxu0 0.0
    %3076 = vmatprep.subr.mxu0 0.0
    %3077 = vmatpush1.msra.mxu0 0.0
    %3078 = vmatprep.subr.mxu0 0.0
    %3079 = vmatpush1.msra.mxu0 0.0
    %3080 = vmatprep.subr.mxu0 0.0
    %3081 = vmatpush1.msra.mxu0 0.0
    %3082 = vmatprep.subr.mxu0 0.0
    %3083 = vmatpush1.msra.mxu0 0.0
    %3084 = vmatprep.subr.mxu0 0.0
    %3085 = vmatpush1.msra.mxu0 0.0
    %3086 = vmatprep.subr.mxu0 0.0
    %3087 = vmatpush1.msra.mxu0 0.0
    %3088 = vmatprep.subr.mxu0 0.0
    %3089 = vmatpush1.msra.mxu0 0.0
    %3090 = vmatprep.subr.mxu0 0.0
    %3091 = vmatpush1.msra.mxu0 0.0
    %3092 = vmatprep.subr.mxu0 0.0
    %3093 = vmatpush1.msra.mxu0 0.0
    %3094 = vmatprep.subr.mxu0 0.0
    %3095 = vmatpush1.msra.mxu0 0.0
    %3096 = vmatprep.subr.mxu0 0.0
    %3097 = vmatpush1.msra.mxu0 0.0
    %3098 = vmatprep.subr.mxu0 0.0
    %3099 = vmatpush1.msra.mxu0 0.0
    %3100 = vmatprep.subr.mxu0 0.0
    %3101 = vmatpush1.msra.mxu0 0.0
    %3102 = vmatprep.subr.mxu0 0.0
    %3103 = vmatpush1.msra.mxu0 0.0
    %3104 = vmatprep.subr.mxu0 0.0
    %3105 = vmatpush1.msra.mxu0 0.0
    %3106 = vmatprep.mubr.f32.mxu0 0.0
    %3107 = vmatmul.mubr.f32.gmra.mrb[0].mxu0 %v3036
    %v3108 = vpop.f32.mrb[0].mxu0
    %v3109 = vadd.f32 0.0, %v3108
    %v3110 = vpop.f32.mrb[0].mxu0
    %v3111 = vadd.f32 0.0, %v3110
    %3112 = vdwg.mxu0
    %3113 = vmatprep.subr.mxu0 %v1831
    %3114 = vmatpush1.msra.mxu0 %v1830
    %3115 = vmatprep.subr.mxu0 %v1835
    %3116 = vmatpush1.msra.mxu0 %v1834
    %3117 = vmatprep.subr.mxu0 %v1839
    %3118 = vmatpush1.msra.mxu0 %v1838
    %3119 = vmatprep.subr.mxu0 %v1843
    %3120 = vmatpush1.msra.mxu0 %v1842
    %3121 = vmatprep.subr.mxu0 %v1847
    %3122 = vmatpush1.msra.mxu0 %v1846
    %3123 = vmatprep.subr.mxu0 %v1851
    %3124 = vmatpush1.msra.mxu0 %v1850
    %3125 = vmatprep.subr.mxu0 %v1855
    %3126 = vmatpush1.msra.mxu0 %v1854
    %3127 = vmatprep.subr.mxu0 %v1859
    %3128 = vmatpush1.msra.mxu0 %v1858
    %3129 = vmatprep.subr.mxu0 %v1863
    %3130 = vmatpush1.msra.mxu0 %v1862
    %3131 = vmatprep.subr.mxu0 %v1867
    %3132 = vmatpush1.msra.mxu0 %v1866
    %3133 = vmatprep.subr.mxu0 %v1871
    %3134 = vmatpush1.msra.mxu0 %v1870
    %3135 = vmatprep.subr.mxu0 %v1875
    %3136 = vmatpush1.msra.mxu0 %v1874
    %3137 = vmatprep.subr.mxu0 %v1879
    %3138 = vmatpush1.msra.mxu0 %v1878
    %3139 = vmatprep.subr.mxu0 %v1883
    %3140 = vmatpush1.msra.mxu0 %v1882
    %3141 = vmatprep.subr.mxu0 %v1887
    %3142 = vmatpush1.msra.mxu0 %v1886
    %3143 = vmatprep.subr.mxu0 %v1891
    %3144 = vmatpush1.msra.mxu0 %v1890
    %3145 = vmatprep.subr.mxu0 0.0
    %3146 = vmatpush1.msra.mxu0 0.0
    %3147 = vmatprep.subr.mxu0 0.0
    %3148 = vmatpush1.msra.mxu0 0.0
    %3149 = vmatprep.subr.mxu0 0.0
    %3150 = vmatpush1.msra.mxu0 0.0
    %3151 = vmatprep.subr.mxu0 0.0
    %3152 = vmatpush1.msra.mxu0 0.0
    %3153 = vmatprep.subr.mxu0 0.0
    %3154 = vmatpush1.msra.mxu0 0.0
    %3155 = vmatprep.subr.mxu0 0.0
    %3156 = vmatpush1.msra.mxu0 0.0
    %3157 = vmatprep.subr.mxu0 0.0
    %3158 = vmatpush1.msra.mxu0 0.0
    %3159 = vmatprep.subr.mxu0 0.0
    %3160 = vmatpush1.msra.mxu0 0.0
    %3161 = vmatprep.subr.mxu0 0.0
    %3162 = vmatpush1.msra.mxu0 0.0
    %3163 = vmatprep.subr.mxu0 0.0
    %3164 = vmatpush1.msra.mxu0 0.0
    %3165 = vmatprep.subr.mxu0 0.0
    %3166 = vmatpush1.msra.mxu0 0.0
    %3167 = vmatprep.subr.mxu0 0.0
    %3168 = vmatpush1.msra.mxu0 0.0
    %3169 = vmatprep.subr.mxu0 0.0
    %3170 = vmatpush1.msra.mxu0 0.0
    %3171 = vmatprep.subr.mxu0 0.0
    %3172 = vmatpush1.msra.mxu0 0.0
    %3173 = vmatprep.subr.mxu0 0.0
    %3174 = vmatpush1.msra.mxu0 0.0
    %3175 = vmatprep.subr.mxu0 0.0
    %3176 = vmatpush1.msra.mxu0 0.0
    %3177 = vmatprep.mubr.f32.mxu0 0.0
    %3178 = vmatmul.mubr.f32.gmra.mrb[0].mxu0 %v3036
    %v3179 = vpop.f32.mrb[0].mxu0
    %v3180 = vadd.f32 0.0, %v3179
    %v3181 = vpop.f32.mrb[0].mxu0
    %v3182 = vadd.f32 0.0, %v3181
    %3183 = vdwg.mxu0
    %v3184 = vadd.f32 %v3038, %v3109
    %v3185 = vadd.f32 %v3039, %v3111
    %v3186 = vadd.f32 %v3040, %v3180
    %v3187 = vadd.f32 %v3041, %v3182
    %v3188 = vxor.u32 %v3184, 2147483648
    %v3189 = vxor.u32 %v3185, 2147483648
    %v3190 = vxor.u32 %v3186, 2147483648
    %v3191 = vmul.f32 %v3188, 1.442695
    %v3192 = vpow.pop %v3191
    %v3193 = vmul.f32 %v3189, 1.442695
    %v3194 = vpow.pop %v3193
    %v3195 = vmul.f32 %v3190, 1.442695
    %v3196 = vpow.pop %v3195
    %v3197 = vadd.f32 %v3192, 1.0
    %v3198 = vadd.f32 %v3194, 1.0
    %v3199 = vadd.f32 %v3196, 1.0
    %v3200 = vrcp.pop %v3197
    %v3201 = vmul.f32 1.0, %v3200
    %v3202 = vrcp.pop %v3198
    %v3203 = vmul.f32 1.0, %v3202
    %v3204 = vrcp.pop %v3199
    %v3205 = vmul.f32 1.0, %v3204
    %v3206 = vtanh.pop %v3187
    %v3207 = vmul.f32 %v3203, %v3034
    %v3208 = vmul.f32 %v3201, %v3206
    %v3209 = vadd.f32 %v3207, %v3208
    %v3210 = vtanh.pop %v3209
    %v3211 = vmul.f32 %v3205, %v3210
    %3212 = vst [vmem:[#allocation4 + $0x28] sm:$0xff] %v3211
    %v3213 = vld [vmem:[#allocation2 + $0xc0] sm:$0xff]
    %v3214 = vld [vmem:[#allocation2 + $0xc8] sm:$0xff]
    %v3215 = vld [vmem:[#allocation2 + $0xd0] sm:$0xff]
    %v3216 = vld [vmem:[#allocation2 + $0xd8] sm:$0xff]
    %3217 = vmatprep.subr.mxu0 %v1829
    %3218 = vmatpush1.msra.mxu0 %v1828
    %3219 = vmatprep.subr.mxu0 %v1833
    %3220 = vmatpush1.msra.mxu0 %v1832
    %3221 = vmatprep.subr.mxu0 %v1837
    %3222 = vmatpush1.msra.mxu0 %v1836
    %3223 = vmatprep.subr.mxu0 %v1841
    %3224 = vmatpush1.msra.mxu0 %v1840
    %3225 = vmatprep.subr.mxu0 %v1845
    %3226 = vmatpush1.msra.mxu0 %v1844
    %3227 = vmatprep.subr.mxu0 %v1849
    %3228 = vmatpush1.msra.mxu0 %v1848
    %3229 = vmatprep.subr.mxu0 %v1853
    %3230 = vmatpush1.msra.mxu0 %v1852
    %3231 = vmatprep.subr.mxu0 %v1857
    %3232 = vmatpush1.msra.mxu0 %v1856
    %3233 = vmatprep.subr.mxu0 %v1861
    %3234 = vmatpush1.msra.mxu0 %v1860
    %3235 = vmatprep.subr.mxu0 %v1865
    %3236 = vmatpush1.msra.mxu0 %v1864
    %3237 = vmatprep.subr.mxu0 %v1869
    %3238 = vmatpush1.msra.mxu0 %v1868
    %3239 = vmatprep.subr.mxu0 %v1873
    %3240 = vmatpush1.msra.mxu0 %v1872
    %3241 = vmatprep.subr.mxu0 %v1877
    %3242 = vmatpush1.msra.mxu0 %v1876
    %3243 = vmatprep.subr.mxu0 %v1881
    %3244 = vmatpush1.msra.mxu0 %v1880
    %3245 = vmatprep.subr.mxu0 %v1885
    %3246 = vmatpush1.msra.mxu0 %v1884
    %3247 = vmatprep.subr.mxu0 %v1889
    %3248 = vmatpush1.msra.mxu0 %v1888
    %3249 = vmatprep.subr.mxu0 0.0
    %3250 = vmatpush1.msra.mxu0 0.0
    %3251 = vmatprep.subr.mxu0 0.0
    %3252 = vmatpush1.msra.mxu0 0.0
    %3253 = vmatprep.subr.mxu0 0.0
    %3254 = vmatpush1.msra.mxu0 0.0
    %3255 = vmatprep.subr.mxu0 0.0
    %3256 = vmatpush1.msra.mxu0 0.0
    %3257 = vmatprep.subr.mxu0 0.0
    %3258 = vmatpush1.msra.mxu0 0.0
    %3259 = vmatprep.subr.mxu0 0.0
    %3260 = vmatpush1.msra.mxu0 0.0
    %3261 = vmatprep.subr.mxu0 0.0
    %3262 = vmatpush1.msra.mxu0 0.0
    %3263 = vmatprep.subr.mxu0 0.0
    %3264 = vmatpush1.msra.mxu0 0.0
    %3265 = vmatprep.subr.mxu0 0.0
    %3266 = vmatpush1.msra.mxu0 0.0
    %3267 = vmatprep.subr.mxu0 0.0
    %3268 = vmatpush1.msra.mxu0 0.0
    %3269 = vmatprep.subr.mxu0 0.0
    %3270 = vmatpush1.msra.mxu0 0.0
    %3271 = vmatprep.subr.mxu0 0.0
    %3272 = vmatpush1.msra.mxu0 0.0
    %3273 = vmatprep.subr.mxu0 0.0
    %3274 = vmatpush1.msra.mxu0 0.0
    %3275 = vmatprep.subr.mxu0 0.0
    %3276 = vmatpush1.msra.mxu0 0.0
    %3277 = vmatprep.subr.mxu0 0.0
    %3278 = vmatpush1.msra.mxu0 0.0
    %3279 = vmatprep.subr.mxu0 0.0
    %3280 = vmatpush1.msra.mxu0 0.0
    %3281 = vmatprep.mubr.f32.mxu0 0.0
    %3282 = vmatmul.mubr.f32.gmra.mrb[0].mxu0 %v3211
    %v3283 = vpop.f32.mrb[0].mxu0
    %v3284 = vadd.f32 0.0, %v3283
    %v3285 = vpop.f32.mrb[0].mxu0
    %v3286 = vadd.f32 0.0, %v3285
    %3287 = vdwg.mxu0
    %3288 = vmatprep.subr.mxu0 %v1831
    %3289 = vmatpush1.msra.mxu0 %v1830
    %3290 = vmatprep.subr.mxu0 %v1835
    %3291 = vmatpush1.msra.mxu0 %v1834
    %3292 = vmatprep.subr.mxu0 %v1839
    %3293 = vmatpush1.msra.mxu0 %v1838
    %3294 = vmatprep.subr.mxu0 %v1843
    %3295 = vmatpush1.msra.mxu0 %v1842
    %3296 = vmatprep.subr.mxu0 %v1847
    %3297 = vmatpush1.msra.mxu0 %v1846
    %3298 = vmatprep.subr.mxu0 %v1851
    %3299 = vmatpush1.msra.mxu0 %v1850
    %3300 = vmatprep.subr.mxu0 %v1855
    %3301 = vmatpush1.msra.mxu0 %v1854
    %3302 = vmatprep.subr.mxu0 %v1859
    %3303 = vmatpush1.msra.mxu0 %v1858
    %3304 = vmatprep.subr.mxu0 %v1863
    %3305 = vmatpush1.msra.mxu0 %v1862
    %3306 = vmatprep.subr.mxu0 %v1867
    %3307 = vmatpush1.msra.mxu0 %v1866
    %3308 = vmatprep.subr.mxu0 %v1871
    %3309 = vmatpush1.msra.mxu0 %v1870
    %3310 = vmatprep.subr.mxu0 %v1875
    %3311 = vmatpush1.msra.mxu0 %v1874
    %3312 = vmatprep.subr.mxu0 %v1879
    %3313 = vmatpush1.msra.mxu0 %v1878
    %3314 = vmatprep.subr.mxu0 %v1883
    %3315 = vmatpush1.msra.mxu0 %v1882
    %3316 = vmatprep.subr.mxu0 %v1887
    %3317 = vmatpush1.msra.mxu0 %v1886
    %3318 = vmatprep.subr.mxu0 %v1891
    %3319 = vmatpush1.msra.mxu0 %v1890
    %3320 = vmatprep.subr.mxu0 0.0
    %3321 = vmatpush1.msra.mxu0 0.0
    %3322 = vmatprep.subr.mxu0 0.0
    %3323 = vmatpush1.msra.mxu0 0.0
    %3324 = vmatprep.subr.mxu0 0.0
    %3325 = vmatpush1.msra.mxu0 0.0
    %3326 = vmatprep.subr.mxu0 0.0
    %3327 = vmatpush1.msra.mxu0 0.0
    %3328 = vmatprep.subr.mxu0 0.0
    %3329 = vmatpush1.msra.mxu0 0.0
    %3330 = vmatprep.subr.mxu0 0.0
    %3331 = vmatpush1.msra.mxu0 0.0
    %3332 = vmatprep.subr.mxu0 0.0
    %3333 = vmatpush1.msra.mxu0 0.0
    %3334 = vmatprep.subr.mxu0 0.0
    %3335 = vmatpush1.msra.mxu0 0.0
    %3336 = vmatprep.subr.mxu0 0.0
    %3337 = vmatpush1.msra.mxu0 0.0
    %3338 = vmatprep.subr.mxu0 0.0
    %3339 = vmatpush1.msra.mxu0 0.0
    %3340 = vmatprep.subr.mxu0 0.0
    %3341 = vmatpush1.msra.mxu0 0.0
    %3342 = vmatprep.subr.mxu0 0.0
    %3343 = vmatpush1.msra.mxu0 0.0
    %3344 = vmatprep.subr.mxu0 0.0
    %3345 = vmatpush1.msra.mxu0 0.0
    %3346 = vmatprep.subr.mxu0 0.0
    %3347 = vmatpush1.msra.mxu0 0.0
    %3348 = vmatprep.subr.mxu0 0.0
    %3349 = vmatpush1.msra.mxu0 0.0
    %3350 = vmatprep.subr.mxu0 0.0
    %3351 = vmatpush1.msra.mxu0 0.0
    %3352 = vmatprep.mubr.f32.mxu0 0.0
    %3353 = vmatmul.mubr.f32.gmra.mrb[0].mxu0 %v3211
    %v3354 = vpop.f32.mrb[0].mxu0
    %v3355 = vadd.f32 0.0, %v3354
    %v3356 = vpop.f32.mrb[0].mxu0
    %v3357 = vadd.f32 0.0, %v3356
    %3358 = vdwg.mxu0
    %v3359 = vadd.f32 %v3213, %v3284
    %v3360 = vadd.f32 %v3214, %v3286
    %v3361 = vadd.f32 %v3215, %v3355
    %v3362 = vadd.f32 %v3216, %v3357
    %v3363 = vxor.u32 %v3359, 2147483648
    %v3364 = vxor.u32 %v3360, 2147483648
    %v3365 = vxor.u32 %v3361, 2147483648
    %v3366 = vmul.f32 %v3363, 1.442695
    %v3367 = vpow.pop %v3366
    %v3368 = vmul.f32 %v3364, 1.442695
    %v3369 = vpow.pop %v3368
    %v3370 = vmul.f32 %v3365, 1.442695
    %v3371 = vpow.pop %v3370
    %v3372 = vadd.f32 %v3367, 1.0
    %v3373 = vadd.f32 %v3369, 1.0
    %v3374 = vadd.f32 %v3371, 1.0
    %v3375 = vrcp.pop %v3372
    %v3376 = vmul.f32 1.0, %v3375
    %v3377 = vrcp.pop %v3373
    %v3378 = vmul.f32 1.0, %v3377
    %v3379 = vrcp.pop %v3374
    %v3380 = vmul.f32 1.0, %v3379
    %v3381 = vtanh.pop %v3362
    %v3382 = vmul.f32 %v3378, %v3209
    %v3383 = vmul.f32 %v3376, %v3381
    %v3384 = vadd.f32 %v3382, %v3383
    %v3385 = vtanh.pop %v3384
    %v3386 = vmul.f32 %v3380, %v3385
    %3387 = vst [vmem:[#allocation4 + $0x30] sm:$0xff] %v3386
    %v3388 = vlaneseq
    %v3389 = vand.u32 %v3388, 127
    %vm3390 = vcmp.lt.s32.totalorder %v3389, 32
    %v3391 = vld [vmem:[#allocation4] sm:$0xff]
    %v3392 = vld [vmem:[#allocation4 + $0x28] sm:$0xff]
    %v3393 = vsel %vm3390, %v3391, %v3392
    %3394 = vst [vmem:[#allocation5] sm:$0xff] %v3393
    %v3395 = vld [vmem:[#allocation4 + $0x8] sm:$0xff]
    %v3396 = vld [vmem:[#allocation4 + $0x20] sm:$0xff]
    %v3397 = vsel %vm3390, %v3395, %v3396
    %3398 = vst [vmem:[#allocation5 + $0x8] sm:$0xff] %v3397
    %v3399 = vld [vmem:[#allocation4 + $0x10] sm:$0xff]
    %v3400 = vld [vmem:[#allocation4 + $0x18] sm:$0xff]
    %v3401 = vsel %vm3390, %v3399, %v3400
    %3402 = vst [vmem:[#allocation5 + $0x10] sm:$0xff] %v3401
    %v3403 = vld [vmem:[#allocation4 + $0x18] sm:$0xff]
    %v3404 = vld [vmem:[#allocation4 + $0x10] sm:$0xff]
    %v3405 = vsel %vm3390, %v3403, %v3404
    %3406 = vst [vmem:[#allocation5 + $0x18] sm:$0xff] %v3405
    %v3407 = vld [vmem:[#allocation4 + $0x20] sm:$0xff]
    %v3408 = vld [vmem:[#allocation4 + $0x8] sm:$0xff]
    %v3409 = vsel %vm3390, %v3407, %v3408
    %3410 = vst [vmem:[#allocation5 + $0x20] sm:$0xff] %v3409
    %v3411 = vld [vmem:[#allocation4 + $0x28] sm:$0xff]
    %v3412 = vld [vmem:[#allocation4] sm:$0xff]
    %v3413 = vsel %vm3390, %v3411, %v3412
    %3414 = vst [vmem:[#allocation5 + $0x28] sm:$0xff] %v3413
    %v3415 = vld [vmem:[#allocation5] sm:$0xff]
    %v3416 = vld [vmem:[#allocation5 + $0x8] sm:$0xff]
    %v3417 = vld [vmem:[#allocation5 + $0x10] sm:$0xff]
    %v3418 = vld [vmem:[#allocation5 + $0x18] sm:$0xff]
    %v3419 = vld [vmem:[#allocation5 + $0x20] sm:$0xff]
    %v3420 = vld [vmem:[#allocation5 + $0x28] sm:$0xff]
    %v3421 = vld [vmem:[#allocation14] sm:$0xff]
    %v3422 = vld [vmem:[#allocation14 + $0x8] sm:$0xff]
    %v3423 = vld [vmem:[#allocation14 + $0x10] sm:$0xff]
    %v3424 = vld [vmem:[#allocation14 + $0x18] sm:$0xff]
    %v3425 = vld [vmem:[#allocation14 + $0x20] sm:$0xff]
    %v3426 = vld [vmem:[#allocation14 + $0x28] sm:$0xff]
    %v3427 = vld [vmem:[#allocation14 + $0x30] sm:$0xff]
    %v3428 = vld [vmem:[#allocation14 + $0x38] sm:$0xff]
    %v3429 = vld [vmem:[#allocation14 + $0x40] sm:$0xff]
    %v3430 = vld [vmem:[#allocation14 + $0x48] sm:$0xff]
    %v3431 = vld [vmem:[#allocation14 + $0x50] sm:$0xff]
    %v3432 = vld [vmem:[#allocation14 + $0x58] sm:$0xff]
    %v3433 = vld [vmem:[#allocation14 + $0x60] sm:$0xff]
    %v3434 = vld [vmem:[#allocation14 + $0x68] sm:$0xff]
    %v3435 = vld [vmem:[#allocation14 + $0x70] sm:$0xff]
    %v3436 = vld [vmem:[#allocation14 + $0x78] sm:$0xff]
    %v3437 = vld [vmem:[%s8] sm:$0x1]
    %v3439 = vlaneseq
    %v3440 = vshrl.u32 %v3439, 7
    %v3441 = vsub.s32 0, %v3440
    %v3442 = vrot.slane %v3437, %v3441
    %3444 = vmatprep.subr.mxu0 0.0
    %3445 = vmatpush1.msra.mxu0 %v3421
    %3446 = vmatprep.subr.mxu0 0.0
    %3447 = vmatpush1.msra.mxu0 %v3422
    %3448 = vmatprep.subr.mxu0 0.0
    %3449 = vmatpush1.msra.mxu0 %v3423
    %3450 = vmatprep.subr.mxu0 0.0
    %3451 = vmatpush1.msra.mxu0 %v3424
    %3452 = vmatprep.subr.mxu0 0.0
    %3453 = vmatpush1.msra.mxu0 %v3425
    %3454 = vmatprep.subr.mxu0 0.0
    %3455 = vmatpush1.msra.mxu0 %v3426
    %3456 = vmatprep.subr.mxu0 0.0
    %3457 = vmatpush1.msra.mxu0 %v3427
    %3458 = vmatprep.subr.mxu0 0.0
    %3459 = vmatpush1.msra.mxu0 %v3428
    %3460 = vmatprep.subr.mxu0 0.0
    %3461 = vmatpush1.msra.mxu0 %v3429
    %3462 = vmatprep.subr.mxu0 0.0
    %3463 = vmatpush1.msra.mxu0 %v3430
    %3464 = vmatprep.subr.mxu0 0.0
    %3465 = vmatpush1.msra.mxu0 %v3431
    %3466 = vmatprep.subr.mxu0 0.0
    %3467 = vmatpush1.msra.mxu0 %v3432
    %3468 = vmatprep.subr.mxu0 0.0
    %3469 = vmatpush1.msra.mxu0 %v3433
    %3470 = vmatprep.subr.mxu0 0.0
    %3471 = vmatpush1.msra.mxu0 %v3434
    %3472 = vmatprep.subr.mxu0 0.0
    %3473 = vmatpush1.msra.mxu0 %v3435
    %3474 = vmatprep.subr.mxu0 0.0
    %3475 = vmatpush1.msra.mxu0 %v3436
    %3476 = vmatprep.subr.mxu0 0.0
    %3477 = vmatpush1.msra.mxu0 0.0
    %3478 = vmatprep.subr.mxu0 0.0
    %3479 = vmatpush1.msra.mxu0 0.0
    %3480 = vmatprep.subr.mxu0 0.0
    %3481 = vmatpush1.msra.mxu0 0.0
    %3482 = vmatprep.subr.mxu0 0.0
    %3483 = vmatpush1.msra.mxu0 0.0
    %3484 = vmatprep.subr.mxu0 0.0
    %3485 = vmatpush1.msra.mxu0 0.0
    %3486 = vmatprep.subr.mxu0 0.0
    %3487 = vmatpush1.msra.mxu0 0.0
    %3488 = vmatprep.subr.mxu0 0.0
    %3489 = vmatpush1.msra.mxu0 0.0
    %3490 = vmatprep.subr.mxu0 0.0
    %3491 = vmatpush1.msra.mxu0 0.0
    %3492 = vmatprep.subr.mxu0 0.0
    %3493 = vmatpush1.msra.mxu0 0.0
    %3494 = vmatprep.subr.mxu0 0.0
    %3495 = vmatpush1.msra.mxu0 0.0
    %3496 = vmatprep.subr.mxu0 0.0
    %3497 = vmatpush1.msra.mxu0 0.0
    %3498 = vmatprep.subr.mxu0 0.0
    %3499 = vmatpush1.msra.mxu0 0.0
    %3500 = vmatprep.subr.mxu0 0.0
    %3501 = vmatpush1.msra.mxu0 0.0
    %3502 = vmatprep.subr.mxu0 0.0
    %3503 = vmatpush1.msra.mxu0 0.0
    %3504 = vmatprep.subr.mxu0 0.0
    %3505 = vmatpush1.msra.mxu0 0.0
    %3506 = vmatprep.subr.mxu0 0.0
    %3507 = vmatpush1.msra.mxu0 0.0
    %3508 = vmatprep.mubr.f32.mxu0 0.0
    %3509 = vmatmul.mubr.f32.gmra.mrb[0].mxu0 %v3415
    %v3510 = vpop.f32.mrb[0].mxu0
    %v3511 = vadd.f32 %v3442, %v3510
    %v3512 = vpop.f32.mrb[0].mxu0
    %3513 = vmatprep.mubr.f32.mxu0 0.0
    %3514 = vmatmul.mubr.f32.gmra.mrb[0].mxu0 %v3416
    %v3515 = vpop.f32.mrb[0].mxu0
    %v3516 = vadd.f32 %v3442, %v3515
    %v3517 = vpop.f32.mrb[0].mxu0
    %3518 = vmatprep.mubr.f32.mxu0 0.0
    %3519 = vmatmul.mubr.f32.gmra.mrb[0].mxu0 %v3417
    %v3520 = vpop.f32.mrb[0].mxu0
    %v3521 = vadd.f32 %v3442, %v3520
    %v3522 = vpop.f32.mrb[0].mxu0
    %3523 = vmatprep.mubr.f32.mxu0 0.0
    %3524 = vmatmul.mubr.f32.gmra.mrb[0].mxu0 %v3418
    %v3525 = vpop.f32.mrb[0].mxu0
    %v3526 = vadd.f32 %v3442, %v3525
    %v3527 = vpop.f32.mrb[0].mxu0
    %3528 = vmatprep.mubr.f32.mxu0 0.0
    %3529 = vmatmul.mubr.f32.gmra.mrb[0].mxu0 %v3419
    %v3530 = vpop.f32.mrb[0].mxu0
    %v3531 = vadd.f32 %v3442, %v3530
    %v3532 = vpop.f32.mrb[0].mxu0
    %3533 = vmatprep.mubr.f32.mxu0 0.0
    %3534 = vmatmul.mubr.f32.gmra.mrb[0].mxu0 %v3420
    %v3535 = vpop.f32.mrb[0].mxu0
    %v3536 = vadd.f32 %v3442, %v3535
    %v3537 = vpop.f32.mrb[0].mxu0
    %3538 = vdwg.mxu0
    %v3539 = vmax.f32 %v3511, 0.0
    %v3540 = vmax.f32 %v3516, 0.0
    %v3541 = vmax.f32 %v3521, 0.0
    %v3542 = vmax.f32 %v3526, 0.0
    %v3543 = vmax.f32 %v3531, 0.0
    %v3544 = vmax.f32 %v3536, 0.0
    %v3545 = vld [vmem:[#allocation15] sm:$0xff]
    %v3546 = vld [vmem:[#allocation15 + $0x8] sm:$0xff]
    %v3547 = vld [vmem:[#allocation15 + $0x10] sm:$0xff]
    %v3548 = vld [vmem:[#allocation15 + $0x18] sm:$0xff]
    %v3549 = vld [vmem:[#allocation15 + $0x20] sm:$0xff]
    %v3550 = vld [vmem:[#allocation15 + $0x28] sm:$0xff]
    %v3551 = vld [vmem:[#allocation15 + $0x30] sm:$0xff]
    %v3552 = vld [vmem:[#allocation15 + $0x38] sm:$0xff]
    %v3553 = vld [vmem:[#allocation15 + $0x40] sm:$0xff]
    %v3554 = vld [vmem:[#allocation15 + $0x48] sm:$0xff]
    %v3555 = vld [vmem:[#allocation15 + $0x50] sm:$0xff]
    %v3556 = vld [vmem:[#allocation15 + $0x58] sm:$0xff]
    %v3557 = vld [vmem:[#allocation15 + $0x60] sm:$0xff]
    %v3558 = vld [vmem:[#allocation15 + $0x68] sm:$0xff]
    %v3559 = vld [vmem:[#allocation15 + $0x70] sm:$0xff]
    %v3560 = vld [vmem:[#allocation15 + $0x78] sm:$0xff]
    %v3561 = vld [vmem:[%s10] sm:$0x1]
    %v3563 = vlaneseq
    %v3564 = vshrl.u32 %v3563, 7
    %v3565 = vsub.s32 0, %v3564
    %v3566 = vrot.slane %v3561, %v3565
    %3568 = vmatprep.subr.mxu0 0.0
    %3569 = vmatpush1.msra.mxu0 %v3545
    %3570 = vmatprep.subr.mxu0 0.0
    %3571 = vmatpush1.msra.mxu0 %v3546
    %3572 = vmatprep.subr.mxu0 0.0
    %3573 = vmatpush1.msra.mxu0 %v3547
    %3574 = vmatprep.subr.mxu0 0.0
    %3575 = vmatpush1.msra.mxu0 %v3548
    %3576 = vmatprep.subr.mxu0 0.0
    %3577 = vmatpush1.msra.mxu0 %v3549
    %3578 = vmatprep.subr.mxu0 0.0
    %3579 = vmatpush1.msra.mxu0 %v3550
    %3580 = vmatprep.subr.mxu0 0.0
    %3581 = vmatpush1.msra.mxu0 %v3551
    %3582 = vmatprep.subr.mxu0 0.0
    %3583 = vmatpush1.msra.mxu0 %v3552
    %3584 = vmatprep.subr.mxu0 0.0
    %3585 = vmatpush1.msra.mxu0 %v3553
    %3586 = vmatprep.subr.mxu0 0.0
    %3587 = vmatpush1.msra.mxu0 %v3554
    %3588 = vmatprep.subr.mxu0 0.0
    %3589 = vmatpush1.msra.mxu0 %v3555
    %3590 = vmatprep.subr.mxu0 0.0
    %3591 = vmatpush1.msra.mxu0 %v3556
    %3592 = vmatprep.subr.mxu0 0.0
    %3593 = vmatpush1.msra.mxu0 %v3557
    %3594 = vmatprep.subr.mxu0 0.0
    %3595 = vmatpush1.msra.mxu0 %v3558
    %3596 = vmatprep.subr.mxu0 0.0
    %3597 = vmatpush1.msra.mxu0 %v3559
    %3598 = vmatprep.subr.mxu0 0.0
    %3599 = vmatpush1.msra.mxu0 %v3560
    %3600 = vmatprep.subr.mxu0 0.0
    %3601 = vmatpush1.msra.mxu0 0.0
    %3602 = vmatprep.subr.mxu0 0.0
    %3603 = vmatpush1.msra.mxu0 0.0
    %3604 = vmatprep.subr.mxu0 0.0
    %3605 = vmatpush1.msra.mxu0 0.0
    %3606 = vmatprep.subr.mxu0 0.0
    %3607 = vmatpush1.msra.mxu0 0.0
    %3608 = vmatprep.subr.mxu0 0.0
    %3609 = vmatpush1.msra.mxu0 0.0
    %3610 = vmatprep.subr.mxu0 0.0
    %3611 = vmatpush1.msra.mxu0 0.0
    %3612 = vmatprep.subr.mxu0 0.0
    %3613 = vmatpush1.msra.mxu0 0.0
    %3614 = vmatprep.subr.mxu0 0.0
    %3615 = vmatpush1.msra.mxu0 0.0
    %3616 = vmatprep.subr.mxu0 0.0
    %3617 = vmatpush1.msra.mxu0 0.0
    %3618 = vmatprep.subr.mxu0 0.0
    %3619 = vmatpush1.msra.mxu0 0.0
    %3620 = vmatprep.subr.mxu0 0.0
    %3621 = vmatpush1.msra.mxu0 0.0
    %3622 = vmatprep.subr.mxu0 0.0
    %3623 = vmatpush1.msra.mxu0 0.0
    %3624 = vmatprep.subr.mxu0 0.0
    %3625 = vmatpush1.msra.mxu0 0.0
    %3626 = vmatprep.subr.mxu0 0.0
    %3627 = vmatpush1.msra.mxu0 0.0
    %3628 = vmatprep.subr.mxu0 0.0
    %3629 = vmatpush1.msra.mxu0 0.0
    %3630 = vmatprep.subr.mxu0 0.0
    %3631 = vmatpush1.msra.mxu0 0.0
    %3632 = vmatprep.mubr.f32.mxu0 0.0
    %3633 = vmatmul.mubr.f32.gmra.mrb[0].mxu0 %v3539
    %v3634 = vpop.f32.mrb[0].mxu0
    %v3635 = vadd.f32 %v3566, %v3634
    %v3636 = vpop.f32.mrb[0].mxu0
    %3637 = vmatprep.mubr.f32.mxu0 0.0
    %3638 = vmatmul.mubr.f32.gmra.mrb[0].mxu0 %v3540
    %v3639 = vpop.f32.mrb[0].mxu0
    %v3640 = vadd.f32 %v3566, %v3639
    %v3641 = vpop.f32.mrb[0].mxu0
    %3642 = vmatprep.mubr.f32.mxu0 0.0
    %3643 = vmatmul.mubr.f32.gmra.mrb[0].mxu0 %v3541
    %v3644 = vpop.f32.mrb[0].mxu0
    %v3645 = vadd.f32 %v3566, %v3644
    %v3646 = vpop.f32.mrb[0].mxu0
    %3647 = vmatprep.mubr.f32.mxu0 0.0
    %3648 = vmatmul.mubr.f32.gmra.mrb[0].mxu0 %v3542
    %v3649 = vpop.f32.mrb[0].mxu0
    %v3650 = vadd.f32 %v3566, %v3649
    %v3651 = vpop.f32.mrb[0].mxu0
    %3652 = vmatprep.mubr.f32.mxu0 0.0
    %3653 = vmatmul.mubr.f32.gmra.mrb[0].mxu0 %v3543
    %v3654 = vpop.f32.mrb[0].mxu0
    %v3655 = vadd.f32 %v3566, %v3654
    %v3656 = vpop.f32.mrb[0].mxu0
    %3657 = vmatprep.mubr.f32.mxu0 0.0
    %3658 = vmatmul.mubr.f32.gmra.mrb[0].mxu0 %v3544
    %v3659 = vpop.f32.mrb[0].mxu0
    %v3660 = vadd.f32 %v3566, %v3659
    %v3661 = vpop.f32.mrb[0].mxu0
    %3662 = vdwg.mxu0
    %v3663 = vld [vmem:[#allocation17] sm:$0xff]
    %v3664 = vld [vmem:[#allocation17 + $0x8] sm:$0xff]
    %v3665 = vld [vmem:[#allocation17 + $0x10] sm:$0xff]
    %v3666 = vld [vmem:[#allocation17 + $0x18] sm:$0xff]
    %v3667 = vld [vmem:[#allocation17 + $0x20] sm:$0xff]
    %v3668 = vld [vmem:[#allocation17 + $0x28] sm:$0xff]
    %v3669 = vld [vmem:[#allocation17 + $0x30] sm:$0xff]
    %v3670 = vld [vmem:[#allocation17 + $0x38] sm:$0xff]
    %v3671 = vld [vmem:[#allocation17 + $0x40] sm:$0xff]
    %v3672 = vld [vmem:[#allocation17 + $0x48] sm:$0xff]
    %v3673 = vld [vmem:[#allocation17 + $0x50] sm:$0xff]
    %v3674 = vld [vmem:[#allocation17 + $0x58] sm:$0xff]
    %v3675 = vld [vmem:[#allocation17 + $0x60] sm:$0xff]
    %v3676 = vld [vmem:[#allocation17 + $0x68] sm:$0xff]
    %v3677 = vld [vmem:[#allocation17 + $0x70] sm:$0xff]
    %v3678 = vld [vmem:[#allocation17 + $0x78] sm:$0xff]
    %3679 = vmatprep.subr.mxu0 0.0
    %3680 = vmatpush1.msra.mxu0 %v3663
    %3681 = vmatprep.subr.mxu0 0.0
    %3682 = vmatpush1.msra.mxu0 %v3664
    %3683 = vmatprep.subr.mxu0 0.0
    %3684 = vmatpush1.msra.mxu0 %v3665
    %3685 = vmatprep.subr.mxu0 0.0
    %3686 = vmatpush1.msra.mxu0 %v3666
    %3687 = vmatprep.subr.mxu0 0.0
    %3688 = vmatpush1.msra.mxu0 %v3667
    %3689 = vmatprep.subr.mxu0 0.0
    %3690 = vmatpush1.msra.mxu0 %v3668
    %3691 = vmatprep.subr.mxu0 0.0
    %3692 = vmatpush1.msra.mxu0 %v3669
    %3693 = vmatprep.subr.mxu0 0.0
    %3694 = vmatpush1.msra.mxu0 %v3670
    %3695 = vmatprep.subr.mxu0 0.0
    %3696 = vmatpush1.msra.mxu0 %v3671
    %3697 = vmatprep.subr.mxu0 0.0
    %3698 = vmatpush1.msra.mxu0 %v3672
    %3699 = vmatprep.subr.mxu0 0.0
    %3700 = vmatpush1.msra.mxu0 %v3673
    %3701 = vmatprep.subr.mxu0 0.0
    %3702 = vmatpush1.msra.mxu0 %v3674
    %3703 = vmatprep.subr.mxu0 0.0
    %3704 = vmatpush1.msra.mxu0 %v3675
    %3705 = vmatprep.subr.mxu0 0.0
    %3706 = vmatpush1.msra.mxu0 %v3676
    %3707 = vmatprep.subr.mxu0 0.0
    %3708 = vmatpush1.msra.mxu0 %v3677
    %3709 = vmatprep.subr.mxu0 0.0
    %3710 = vmatpush1.msra.mxu0 %v3678
    %3711 = vmatprep.subr.mxu0 0.0
    %3712 = vmatpush1.msra.mxu0 0.0
    %3713 = vmatprep.subr.mxu0 0.0
    %3714 = vmatpush1.msra.mxu0 0.0
    %3715 = vmatprep.subr.mxu0 0.0
    %3716 = vmatpush1.msra.mxu0 0.0
    %3717 = vmatprep.subr.mxu0 0.0
    %3718 = vmatpush1.msra.mxu0 0.0
    %3719 = vmatprep.subr.mxu0 0.0
    %3720 = vmatpush1.msra.mxu0 0.0
    %3721 = vmatprep.subr.mxu0 0.0
    %3722 = vmatpush1.msra.mxu0 0.0
    %3723 = vmatprep.subr.mxu0 0.0
    %3724 = vmatpush1.msra.mxu0 0.0
    %3725 = vmatprep.subr.mxu0 0.0
    %3726 = vmatpush1.msra.mxu0 0.0
    %3727 = vmatprep.subr.mxu0 0.0
    %3728 = vmatpush1.msra.mxu0 0.0
    %3729 = vmatprep.subr.mxu0 0.0
    %3730 = vmatpush1.msra.mxu0 0.0
    %3731 = vmatprep.subr.mxu0 0.0
    %3732 = vmatpush1.msra.mxu0 0.0
    %3733 = vmatprep.subr.mxu0 0.0
    %3734 = vmatpush1.msra.mxu0 0.0
    %3735 = vmatprep.subr.mxu0 0.0
    %3736 = vmatpush1.msra.mxu0 0.0
    %3737 = vmatprep.subr.mxu0 0.0
    %3738 = vmatpush1.msra.mxu0 0.0
    %3739 = vmatprep.subr.mxu0 0.0
    %3740 = vmatpush1.msra.mxu0 0.0
    %3741 = vmatprep.subr.mxu0 0.0
    %3742 = vmatpush1.msra.mxu0 0.0
    %3743 = vmatprep.mubr.f32.mxu0 0.0
    %3744 = vmatmul.mubr.f32.gmra.mrb[0].mxu0 %v3635
    %v3745 = vpop.f32.mrb[0].mxu0
    %v3746 = vadd.f32 0.0, %v3745
    %v3747 = vpop.f32.mrb[0].mxu0
    %3748 = vmatprep.mubr.f32.mxu0 0.0
    %3749 = vmatmul.mubr.f32.gmra.mrb[0].mxu0 %v3640
    %v3750 = vpop.f32.mrb[0].mxu0
    %v3751 = vadd.f32 0.0, %v3750
    %v3752 = vpop.f32.mrb[0].mxu0
    %3753 = vmatprep.mubr.f32.mxu0 0.0
    %3754 = vmatmul.mubr.f32.gmra.mrb[0].mxu0 %v3645
    %v3755 = vpop.f32.mrb[0].mxu0
    %v3756 = vadd.f32 0.0, %v3755
    %v3757 = vpop.f32.mrb[0].mxu0
    %3758 = vmatprep.mubr.f32.mxu0 0.0
    %3759 = vmatmul.mubr.f32.gmra.mrb[0].mxu0 %v3650
    %v3760 = vpop.f32.mrb[0].mxu0
    %v3761 = vadd.f32 0.0, %v3760
    %v3762 = vpop.f32.mrb[0].mxu0
    %3763 = vmatprep.mubr.f32.mxu0 0.0
    %3764 = vmatmul.mubr.f32.gmra.mrb[0].mxu0 %v3655
    %v3765 = vpop.f32.mrb[0].mxu0
    %v3766 = vadd.f32 0.0, %v3765
    %v3767 = vpop.f32.mrb[0].mxu0
    %3768 = vmatprep.mubr.f32.mxu0 0.0
    %3769 = vmatmul.mubr.f32.gmra.mrb[0].mxu0 %v3660
    %v3770 = vpop.f32.mrb[0].mxu0
    %v3771 = vadd.f32 0.0, %v3770
    %v3772 = vpop.f32.mrb[0].mxu0
    %3773 = vdwg.mxu0
    %v3774 = vld [vmem:[%s12] sm:$0xff]
    %v3775 = vld [vmem:[%s12 + $0x8] sm:$0xff]
    %v3776 = vld [vmem:[%s12 + $0x10] sm:$0xff]
    %v3777 = vld [vmem:[%s12 + $0x18] sm:$0xff]
    %v3778 = vld [vmem:[%s12 + $0x20] sm:$0xff]
    %v3779 = vld [vmem:[%s12 + $0x28] sm:$0xff]
    %3780 = vset.pattern.permute.xlu0 0
    %3781 = vperm.xlu0 %3780, %v3774
    %v3782 = vpop.permute.xlu0 %3781
    %3783 = vset.pattern.permute.xlu0 0
    %3784 = vperm.xlu0 %3783, %v3775
    %v3785 = vpop.permute.xlu0 %3784
    %3786 = vset.pattern.permute.xlu0 0
    %3787 = vperm.xlu0 %3786, %v3776
    %v3788 = vpop.permute.xlu0 %3787
    %3789 = vset.pattern.permute.xlu0 0
    %3790 = vperm.xlu0 %3789, %v3777
    %v3791 = vpop.permute.xlu0 %3790
    %3792 = vset.pattern.permute.xlu0 0
    %3793 = vperm.xlu0 %3792, %v3778
    %v3794 = vpop.permute.xlu0 %3793
    %3795 = vset.pattern.permute.xlu0 0
    %3796 = vperm.xlu0 %3795, %v3779
    %v3797 = vpop.permute.xlu0 %3796
    %vm3798 = vcmp.eq.s32.totalorder %v3389, %v3782
    %vm3799 = vcmp.eq.s32.totalorder %v3389, %v3785
    %vm3800 = vcmp.eq.s32.totalorder %v3389, %v3788
    %vm3801 = vcmp.eq.s32.totalorder %v3389, %v3791
    %vm3802 = vcmp.eq.s32.totalorder %v3389, %v3794
    %vm3803 = vcmp.eq.s32.totalorder %v3389, %v3797
    %v3804 = vsel %vm3798, 1, 0
    %v3805 = vsel %vm3799, 1, 0
    %v3806 = vsel %vm3800, 1, 0
    %v3807 = vsel %vm3801, 1, 0
    %v3808 = vsel %vm3802, 1, 0
    %v3809 = vsel %vm3803, 1, 0
    %v3810 = vcvt.s32.f32 %v3804
    %v3811 = vcvt.s32.f32 %v3805
    %v3812 = vcvt.s32.f32 %v3806
    %v3813 = vcvt.s32.f32 %v3807
    %v3814 = vcvt.s32.f32 %v3808
    %v3815 = vcvt.s32.f32 %v3809
    %3816 = vset.pattern.permute.xlu0 1
    %3817 = vperm.xlu0 %3816, %v3774
    %v3818 = vpop.permute.xlu0 %3817
    %3819 = vset.pattern.permute.xlu0 1
    %3820 = vperm.xlu0 %3819, %v3775
    %v3821 = vpop.permute.xlu0 %3820
    %3822 = vset.pattern.permute.xlu0 1
    %3823 = vperm.xlu0 %3822, %v3776
    %v3824 = vpop.permute.xlu0 %3823
    %3825 = vset.pattern.permute.xlu0 1
    %3826 = vperm.xlu0 %3825, %v3777
    %v3827 = vpop.permute.xlu0 %3826
    %3828 = vset.pattern.permute.xlu0 1
    %3829 = vperm.xlu0 %3828, %v3778
    %v3830 = vpop.permute.xlu0 %3829
    %3831 = vset.pattern.permute.xlu0 1
    %3832 = vperm.xlu0 %3831, %v3779
    %v3833 = vpop.permute.xlu0 %3832
    %vm3834 = vcmp.eq.s32.totalorder %v3389, %v3818
    %vm3835 = vcmp.eq.s32.totalorder %v3389, %v3821
    %vm3836 = vcmp.eq.s32.totalorder %v3389, %v3824
    %vm3837 = vcmp.eq.s32.totalorder %v3389, %v3827
    %vm3838 = vcmp.eq.s32.totalorder %v3389, %v3830
    %vm3839 = vcmp.eq.s32.totalorder %v3389, %v3833
    %v3840 = vsel %vm3834, 1, 0
    %v3841 = vsel %vm3835, 1, 0
    %v3842 = vsel %vm3836, 1, 0
    %v3843 = vsel %vm3837, 1, 0
    %v3844 = vsel %vm3838, 1, 0
    %v3845 = vsel %vm3839, 1, 0
    %v3846 = vcvt.s32.f32 %v3840
    %v3847 = vcvt.s32.f32 %v3841
    %v3848 = vcvt.s32.f32 %v3842
    %v3849 = vcvt.s32.f32 %v3843
    %v3850 = vcvt.s32.f32 %v3844
    %v3851 = vcvt.s32.f32 %v3845
    %3852 = vset.pattern.permute.xlu0 2
    %3853 = vperm.xlu0 %3852, %v3774
    %v3854 = vpop.permute.xlu0 %3853
    %3855 = vset.pattern.permute.xlu0 2
    %3856 = vperm.xlu0 %3855, %v3775
    %v3857 = vpop.permute.xlu0 %3856
    %3858 = vset.pattern.permute.xlu0 2
    %3859 = vperm.xlu0 %3858, %v3776
    %v3860 = vpop.permute.xlu0 %3859
    %3861 = vset.pattern.permute.xlu0 2
    %3862 = vperm.xlu0 %3861, %v3777
    %v3863 = vpop.permute.xlu0 %3862
    %3864 = vset.pattern.permute.xlu0 2
    %3865 = vperm.xlu0 %3864, %v3778
    %v3866 = vpop.permute.xlu0 %3865
    %3867 = vset.pattern.permute.xlu0 2
    %3868 = vperm.xlu0 %3867, %v3779
    %v3869 = vpop.permute.xlu0 %3868
    %vm3870 = vcmp.eq.s32.totalorder %v3389, %v3854
    %vm3871 = vcmp.eq.s32.totalorder %v3389, %v3857
    %vm3872 = vcmp.eq.s32.totalorder %v3389, %v3860
    %vm3873 = vcmp.eq.s32.totalorder %v3389, %v3863
    %vm3874 = vcmp.eq.s32.totalorder %v3389, %v3866
    %vm3875 = vcmp.eq.s32.totalorder %v3389, %v3869
    %v3876 = vsel %vm3870, 1, 0
    %v3877 = vsel %vm3871, 1, 0
    %v3878 = vsel %vm3872, 1, 0
    %v3879 = vsel %vm3873, 1, 0
    %v3880 = vsel %vm3874, 1, 0
    %v3881 = vsel %vm3875, 1, 0
    %v3882 = vcvt.s32.f32 %v3876
    %v3883 = vcvt.s32.f32 %v3877
    %v3884 = vcvt.s32.f32 %v3878
    %v3885 = vcvt.s32.f32 %v3879
    %v3886 = vcvt.s32.f32 %v3880
    %v3887 = vcvt.s32.f32 %v3881
    %v3888 = vadd.f32 %v3846, %v3882
    %v3889 = vadd.f32 %v3847, %v3883
    %v3890 = vadd.f32 %v3848, %v3884
    %v3891 = vadd.f32 %v3849, %v3885
    %v3892 = vadd.f32 %v3850, %v3886
    %v3893 = vadd.f32 %v3851, %v3887
    %3894 = vset.pattern.permute.xlu0 3
    %3895 = vperm.xlu0 %3894, %v3774
    %v3896 = vpop.permute.xlu0 %3895
    %3897 = vset.pattern.permute.xlu0 3
    %3898 = vperm.xlu0 %3897, %v3775
    %v3899 = vpop.permute.xlu0 %3898
    %3900 = vset.pattern.permute.xlu0 3
    %3901 = vperm.xlu0 %3900, %v3776
    %v3902 = vpop.permute.xlu0 %3901
    %3903 = vset.pattern.permute.xlu0 3
    %3904 = vperm.xlu0 %3903, %v3777
    %v3905 = vpop.permute.xlu0 %3904
    %3906 = vset.pattern.permute.xlu0 3
    %3907 = vperm.xlu0 %3906, %v3778
    %v3908 = vpop.permute.xlu0 %3907
    %3909 = vset.pattern.permute.xlu0 3
    %3910 = vperm.xlu0 %3909, %v3779
    %v3911 = vpop.permute.xlu0 %3910
    %vm3912 = vcmp.eq.s32.totalorder %v3389, %v3896
    %vm3913 = vcmp.eq.s32.totalorder %v3389, %v3899
    %vm3914 = vcmp.eq.s32.totalorder %v3389, %v3902
    %vm3915 = vcmp.eq.s32.totalorder %v3389, %v3905
    %vm3916 = vcmp.eq.s32.totalorder %v3389, %v3908
    %vm3917 = vcmp.eq.s32.totalorder %v3389, %v3911
    %v3918 = vsel %vm3912, 1, 0
    %v3919 = vsel %vm3913, 1, 0
    %v3920 = vsel %vm3914, 1, 0
    %v3921 = vsel %vm3915, 1, 0
    %v3922 = vsel %vm3916, 1, 0
    %v3923 = vsel %vm3917, 1, 0
    %v3924 = vcvt.s32.f32 %v3918
    %v3925 = vcvt.s32.f32 %v3919
    %v3926 = vcvt.s32.f32 %v3920
    %v3927 = vcvt.s32.f32 %v3921
    %v3928 = vcvt.s32.f32 %v3922
    %v3929 = vcvt.s32.f32 %v3923
    %v3930 = vadd.f32 %v3888, %v3924
    %v3931 = vadd.f32 %v3889, %v3925
    %v3932 = vadd.f32 %v3890, %v3926
    %v3933 = vadd.f32 %v3891, %v3927
    %v3934 = vadd.f32 %v3892, %v3928
    %v3935 = vadd.f32 %v3893, %v3929
    %3936 = vset.pattern.permute.xlu0 4
    %3937 = vperm.xlu0 %3936, %v3774
    %v3938 = vpop.permute.xlu0 %3937
    %3939 = vset.pattern.permute.xlu0 4
    %3940 = vperm.xlu0 %3939, %v3775
    %v3941 = vpop.permute.xlu0 %3940
    %3942 = vset.pattern.permute.xlu0 4
    %3943 = vperm.xlu0 %3942, %v3776
    %v3944 = vpop.permute.xlu0 %3943
    %3945 = vset.pattern.permute.xlu0 4
    %3946 = vperm.xlu0 %3945, %v3777
    %v3947 = vpop.permute.xlu0 %3946
    %3948 = vset.pattern.permute.xlu0 4
    %3949 = vperm.xlu0 %3948, %v3778
    %v3950 = vpop.permute.xlu0 %3949
    %3951 = vset.pattern.permute.xlu0 4
    %3952 = vperm.xlu0 %3951, %v3779
    %v3953 = vpop.permute.xlu0 %3952
    %vm3954 = vcmp.eq.s32.totalorder %v3389, %v3938
    %vm3955 = vcmp.eq.s32.totalorder %v3389, %v3941
    %vm3956 = vcmp.eq.s32.totalorder %v3389, %v3944
    %vm3957 = vcmp.eq.s32.totalorder %v3389, %v3947
    %vm3958 = vcmp.eq.s32.totalorder %v3389, %v3950
    %vm3959 = vcmp.eq.s32.totalorder %v3389, %v3953
    %v3960 = vsel %vm3954, 1, 0
    %v3961 = vsel %vm3955, 1, 0
    %v3962 = vsel %vm3956, 1, 0
    %v3963 = vsel %vm3957, 1, 0
    %v3964 = vsel %vm3958, 1, 0
    %v3965 = vsel %vm3959, 1, 0
    %v3966 = vcvt.s32.f32 %v3960
    %v3967 = vcvt.s32.f32 %v3961
    %v3968 = vcvt.s32.f32 %v3962
    %v3969 = vcvt.s32.f32 %v3963
    %v3970 = vcvt.s32.f32 %v3964
    %v3971 = vcvt.s32.f32 %v3965
    %v3972 = vadd.f32 %v3930, %v3966
    %v3973 = vadd.f32 %v3931, %v3967
    %v3974 = vadd.f32 %v3932, %v3968
    %v3975 = vadd.f32 %v3933, %v3969
    %v3976 = vadd.f32 %v3934, %v3970
    %v3977 = vadd.f32 %v3935, %v3971
    %3978 = vset.pattern.permute.xlu0 5
    %3979 = vperm.xlu0 %3978, %v3774
    %v3980 = vpop.permute.xlu0 %3979
    %3981 = vset.pattern.permute.xlu0 5
    %3982 = vperm.xlu0 %3981, %v3775
    %v3983 = vpop.permute.xlu0 %3982
    %3984 = vset.pattern.permute.xlu0 5
    %3985 = vperm.xlu0 %3984, %v3776
    %v3986 = vpop.permute.xlu0 %3985
    %3987 = vset.pattern.permute.xlu0 5
    %3988 = vperm.xlu0 %3987, %v3777
    %v3989 = vpop.permute.xlu0 %3988
    %3990 = vset.pattern.permute.xlu0 5
    %3991 = vperm.xlu0 %3990, %v3778
    %v3992 = vpop.permute.xlu0 %3991
    %3993 = vset.pattern.permute.xlu0 5
    %3994 = vperm.xlu0 %3993, %v3779
    %v3995 = vpop.permute.xlu0 %3994
    %vm3996 = vcmp.eq.s32.totalorder %v3389, %v3980
    %vm3997 = vcmp.eq.s32.totalorder %v3389, %v3983
    %vm3998 = vcmp.eq.s32.totalorder %v3389, %v3986
    %vm3999 = vcmp.eq.s32.totalorder %v3389, %v3989
    %vm4000 = vcmp.eq.s32.totalorder %v3389, %v3992
    %vm4001 = vcmp.eq.s32.totalorder %v3389, %v3995
    %v4002 = vsel %vm3996, 1, 0
    %v4003 = vsel %vm3997, 1, 0
    %v4004 = vsel %vm3998, 1, 0
    %v4005 = vsel %vm3999, 1, 0
    %v4006 = vsel %vm4000, 1, 0
    %v4007 = vsel %vm4001, 1, 0
    %v4008 = vcvt.s32.f32 %v4002
    %v4009 = vcvt.s32.f32 %v4003
    %v4010 = vcvt.s32.f32 %v4004
    %v4011 = vcvt.s32.f32 %v4005
    %v4012 = vcvt.s32.f32 %v4006
    %v4013 = vcvt.s32.f32 %v4007
    %v4014 = vadd.f32 %v3972, %v4008
    %v4015 = vadd.f32 %v3973, %v4009
    %v4016 = vadd.f32 %v3974, %v4010
    %v4017 = vadd.f32 %v3975, %v4011
    %v4018 = vadd.f32 %v3976, %v4012
    %v4019 = vadd.f32 %v3977, %v4013
    %4020 = vset.pattern.permute.xlu0 6
    %4021 = vperm.xlu0 %4020, %v3774
    %v4022 = vpop.permute.xlu0 %4021
    %4023 = vset.pattern.permute.xlu0 6
    %4024 = vperm.xlu0 %4023, %v3775
    %v4025 = vpop.permute.xlu0 %4024
    %4026 = vset.pattern.permute.xlu0 6
    %4027 = vperm.xlu0 %4026, %v3776
    %v4028 = vpop.permute.xlu0 %4027
    %4029 = vset.pattern.permute.xlu0 6
    %4030 = vperm.xlu0 %4029, %v3777
    %v4031 = vpop.permute.xlu0 %4030
    %4032 = vset.pattern.permute.xlu0 6
    %4033 = vperm.xlu0 %4032, %v3778
    %v4034 = vpop.permute.xlu0 %4033
    %4035 = vset.pattern.permute.xlu0 6
    %4036 = vperm.xlu0 %4035, %v3779
    %v4037 = vpop.permute.xlu0 %4036
    %vm4038 = vcmp.eq.s32.totalorder %v3389, %v4022
    %vm4039 = vcmp.eq.s32.totalorder %v3389, %v4025
    %vm4040 = vcmp.eq.s32.totalorder %v3389, %v4028
    %vm4041 = vcmp.eq.s32.totalorder %v3389, %v4031
    %vm4042 = vcmp.eq.s32.totalorder %v3389, %v4034
    %vm4043 = vcmp.eq.s32.totalorder %v3389, %v4037
    %v4044 = vsel %vm4038, 1, 0
    %v4045 = vsel %vm4039, 1, 0
    %v4046 = vsel %vm4040, 1, 0
    %v4047 = vsel %vm4041, 1, 0
    %v4048 = vsel %vm4042, 1, 0
    %v4049 = vsel %vm4043, 1, 0
    %v4050 = vcvt.s32.f32 %v4044
    %v4051 = vcvt.s32.f32 %v4045
    %v4052 = vcvt.s32.f32 %v4046
    %v4053 = vcvt.s32.f32 %v4047
    %v4054 = vcvt.s32.f32 %v4048
    %v4055 = vcvt.s32.f32 %v4049
    %v4056 = vadd.f32 %v4014, %v4050
    %v4057 = vadd.f32 %v4015, %v4051
    %v4058 = vadd.f32 %v4016, %v4052
    %v4059 = vadd.f32 %v4017, %v4053
    %v4060 = vadd.f32 %v4018, %v4054
    %v4061 = vadd.f32 %v4019, %v4055
    %4062 = vset.pattern.permute.xlu0 7
    %4063 = vperm.xlu0 %4062, %v3774
    %v4064 = vpop.permute.xlu0 %4063
    %4065 = vset.pattern.permute.xlu0 7
    %4066 = vperm.xlu0 %4065, %v3775
    %v4067 = vpop.permute.xlu0 %4066
    %4068 = vset.pattern.permute.xlu0 7
    %4069 = vperm.xlu0 %4068, %v3776
    %v4070 = vpop.permute.xlu0 %4069
    %4071 = vset.pattern.permute.xlu0 7
    %4072 = vperm.xlu0 %4071, %v3777
    %v4073 = vpop.permute.xlu0 %4072
    %4074 = vset.pattern.permute.xlu0 7
    %4075 = vperm.xlu0 %4074, %v3778
    %v4076 = vpop.permute.xlu0 %4075
    %4077 = vset.pattern.permute.xlu0 7
    %4078 = vperm.xlu0 %4077, %v3779
    %v4079 = vpop.permute.xlu0 %4078
    %vm4080 = vcmp.eq.s32.totalorder %v3389, %v4064
    %vm4081 = vcmp.eq.s32.totalorder %v3389, %v4067
    %vm4082 = vcmp.eq.s32.totalorder %v3389, %v4070
    %vm4083 = vcmp.eq.s32.totalorder %v3389, %v4073
    %vm4084 = vcmp.eq.s32.totalorder %v3389, %v4076
    %vm4085 = vcmp.eq.s32.totalorder %v3389, %v4079
    %v4086 = vsel %vm4080, 1, 0
    %v4087 = vsel %vm4081, 1, 0
    %v4088 = vsel %vm4082, 1, 0
    %v4089 = vsel %vm4083, 1, 0
    %v4090 = vsel %vm4084, 1, 0
    %v4091 = vsel %vm4085, 1, 0
    %v4092 = vcvt.s32.f32 %v4086
    %v4093 = vcvt.s32.f32 %v4087
    %v4094 = vcvt.s32.f32 %v4088
    %v4095 = vcvt.s32.f32 %v4089
    %v4096 = vcvt.s32.f32 %v4090
    %v4097 = vcvt.s32.f32 %v4091
    %v4098 = vadd.f32 %v4056, %v4092
    %v4099 = vadd.f32 %v4057, %v4093
    %v4100 = vadd.f32 %v4058, %v4094
    %v4101 = vadd.f32 %v4059, %v4095
    %v4102 = vadd.f32 %v4060, %v4096
    %v4103 = vadd.f32 %v4061, %v4097
    %4104 = vset.pattern.permute.xlu0 8
    %4105 = vperm.xlu0 %4104, %v3774
    %v4106 = vpop.permute.xlu0 %4105
    %4107 = vset.pattern.permute.xlu0 8
    %4108 = vperm.xlu0 %4107, %v3775
    %v4109 = vpop.permute.xlu0 %4108
    %4110 = vset.pattern.permute.xlu0 8
    %4111 = vperm.xlu0 %4110, %v3776
    %v4112 = vpop.permute.xlu0 %4111
    %4113 = vset.pattern.permute.xlu0 8
    %4114 = vperm.xlu0 %4113, %v3777
    %v4115 = vpop.permute.xlu0 %4114
    %4116 = vset.pattern.permute.xlu0 8
    %4117 = vperm.xlu0 %4116, %v3778
    %v4118 = vpop.permute.xlu0 %4117
    %4119 = vset.pattern.permute.xlu0 8
    %4120 = vperm.xlu0 %4119, %v3779
    %v4121 = vpop.permute.xlu0 %4120
    %vm4122 = vcmp.eq.s32.totalorder %v3389, %v4106
    %vm4123 = vcmp.eq.s32.totalorder %v3389, %v4109
    %vm4124 = vcmp.eq.s32.totalorder %v3389, %v4112
    %vm4125 = vcmp.eq.s32.totalorder %v3389, %v4115
    %vm4126 = vcmp.eq.s32.totalorder %v3389, %v4118
    %vm4127 = vcmp.eq.s32.totalorder %v3389, %v4121
    %v4128 = vsel %vm4122, 1, 0
    %v4129 = vsel %vm4123, 1, 0
    %v4130 = vsel %vm4124, 1, 0
    %v4131 = vsel %vm4125, 1, 0
    %v4132 = vsel %vm4126, 1, 0
    %v4133 = vsel %vm4127, 1, 0
    %v4134 = vcvt.s32.f32 %v4128
    %v4135 = vcvt.s32.f32 %v4129
    %v4136 = vcvt.s32.f32 %v4130
    %v4137 = vcvt.s32.f32 %v4131
    %v4138 = vcvt.s32.f32 %v4132
    %v4139 = vcvt.s32.f32 %v4133
    %v4140 = vadd.f32 %v4098, %v4134
    %v4141 = vadd.f32 %v4099, %v4135
    %v4142 = vadd.f32 %v4100, %v4136
    %v4143 = vadd.f32 %v4101, %v4137
    %v4144 = vadd.f32 %v4102, %v4138
    %v4145 = vadd.f32 %v4103, %v4139
    %4146 = vset.pattern.permute.xlu0 9
    %4147 = vperm.xlu0 %4146, %v3774
    %v4148 = vpop.permute.xlu0 %4147
    %4149 = vset.pattern.permute.xlu0 9
    %4150 = vperm.xlu0 %4149, %v3775
    %v4151 = vpop.permute.xlu0 %4150
    %4152 = vset.pattern.permute.xlu0 9
    %4153 = vperm.xlu0 %4152, %v3776
    %v4154 = vpop.permute.xlu0 %4153
    %4155 = vset.pattern.permute.xlu0 9
    %4156 = vperm.xlu0 %4155, %v3777
    %v4157 = vpop.permute.xlu0 %4156
    %4158 = vset.pattern.permute.xlu0 9
    %4159 = vperm.xlu0 %4158, %v3778
    %v4160 = vpop.permute.xlu0 %4159
    %4161 = vset.pattern.permute.xlu0 9
    %4162 = vperm.xlu0 %4161, %v3779
    %v4163 = vpop.permute.xlu0 %4162
    %vm4164 = vcmp.eq.s32.totalorder %v3389, %v4148
    %vm4165 = vcmp.eq.s32.totalorder %v3389, %v4151
    %vm4166 = vcmp.eq.s32.totalorder %v3389, %v4154
    %vm4167 = vcmp.eq.s32.totalorder %v3389, %v4157
    %vm4168 = vcmp.eq.s32.totalorder %v3389, %v4160
    %vm4169 = vcmp.eq.s32.totalorder %v3389, %v4163
    %v4170 = vsel %vm4164, 1, 0
    %v4171 = vsel %vm4165, 1, 0
    %v4172 = vsel %vm4166, 1, 0
    %v4173 = vsel %vm4167, 1, 0
    %v4174 = vsel %vm4168, 1, 0
    %v4175 = vsel %vm4169, 1, 0
    %v4176 = vcvt.s32.f32 %v4170
    %v4177 = vcvt.s32.f32 %v4171
    %v4178 = vcvt.s32.f32 %v4172
    %v4179 = vcvt.s32.f32 %v4173
    %v4180 = vcvt.s32.f32 %v4174
    %v4181 = vcvt.s32.f32 %v4175
    %v4182 = vadd.f32 %v4140, %v4176
    %v4183 = vadd.f32 %v4141, %v4177
    %v4184 = vadd.f32 %v4142, %v4178
    %v4185 = vadd.f32 %v4143, %v4179
    %v4186 = vadd.f32 %v4144, %v4180
    %v4187 = vadd.f32 %v4145, %v4181
    %4188 = vset.pattern.permute.xlu0 10
    %4189 = vperm.xlu0 %4188, %v3774
    %v4190 = vpop.permute.xlu0 %4189
    %4191 = vset.pattern.permute.xlu0 10
    %4192 = vperm.xlu0 %4191, %v3775
    %v4193 = vpop.permute.xlu0 %4192
    %4194 = vset.pattern.permute.xlu0 10
    %4195 = vperm.xlu0 %4194, %v3776
    %v4196 = vpop.permute.xlu0 %4195
    %4197 = vset.pattern.permute.xlu0 10
    %4198 = vperm.xlu0 %4197, %v3777
    %v4199 = vpop.permute.xlu0 %4198
    %4200 = vset.pattern.permute.xlu0 10
    %4201 = vperm.xlu0 %4200, %v3778
    %v4202 = vpop.permute.xlu0 %4201
    %4203 = vset.pattern.permute.xlu0 10
    %4204 = vperm.xlu0 %4203, %v3779
    %v4205 = vpop.permute.xlu0 %4204
    %vm4206 = vcmp.eq.s32.totalorder %v3389, %v4190
    %vm4207 = vcmp.eq.s32.totalorder %v3389, %v4193
    %vm4208 = vcmp.eq.s32.totalorder %v3389, %v4196
    %vm4209 = vcmp.eq.s32.totalorder %v3389, %v4199
    %vm4210 = vcmp.eq.s32.totalorder %v3389, %v4202
    %vm4211 = vcmp.eq.s32.totalorder %v3389, %v4205
    %v4212 = vsel %vm4206, 1, 0
    %v4213 = vsel %vm4207, 1, 0
    %v4214 = vsel %vm4208, 1, 0
    %v4215 = vsel %vm4209, 1, 0
    %v4216 = vsel %vm4210, 1, 0
    %v4217 = vsel %vm4211, 1, 0
    %v4218 = vcvt.s32.f32 %v4212
    %v4219 = vcvt.s32.f32 %v4213
    %v4220 = vcvt.s32.f32 %v4214
    %v4221 = vcvt.s32.f32 %v4215
    %v4222 = vcvt.s32.f32 %v4216
    %v4223 = vcvt.s32.f32 %v4217
    %v4224 = vadd.f32 %v4182, %v4218
    %v4225 = vadd.f32 %v4183, %v4219
    %v4226 = vadd.f32 %v4184, %v4220
    %v4227 = vadd.f32 %v4185, %v4221
    %v4228 = vadd.f32 %v4186, %v4222
    %v4229 = vadd.f32 %v4187, %v4223
    %v4230 = vsub.f32 0.0, %v3746
    %v4231 = vsub.f32 0.0, %v3751
    %v4232 = vsub.f32 0.0, %v3756
    %v4233 = vsub.f32 0.0, %v3761
    %v4234 = vsub.f32 0.0, %v3766
    %v4235 = vsub.f32 0.0, %v3771
    %v4236 = vmax.f32 %v4230, 0.0
    %v4237 = vmax.f32 %v4231, 0.0
    %v4238 = vmax.f32 %v4232, 0.0
    %v4239 = vmax.f32 %v4233, 0.0
    %v4240 = vmax.f32 %v4234, 0.0
    %v4241 = vmax.f32 %v4235, 0.0
    %vm4242 = vcmp.ne.f32.partialorder %v4230, %v4230
    %vm4243 = vcmp.ne.f32.partialorder %v4231, %v4231
    %vm4244 = vcmp.ne.f32.partialorder %v4232, %v4232
    %vm4245 = vcmp.ne.f32.partialorder %v4233, %v4233
    %vm4246 = vcmp.ne.f32.partialorder %v4234, %v4234
    %vm4247 = vcmp.ne.f32.partialorder %v4235, %v4235
    %v4248 = vadd.f32 %v4230, 0.0
    %v4249 = vadd.f32 %v4231, 0.0
    %v4250 = vadd.f32 %v4232, 0.0
    %v4251 = vadd.f32 %v4233, 0.0
    %v4252 = vadd.f32 %v4234, 0.0
    %v4253 = vadd.f32 %v4235, 0.0
    %v4254 = vand.u32 2147483647, %v4230
    %v4255 = vand.u32 2147483647, %v4231
    %v4256 = vand.u32 2147483647, %v4232
    %v4257 = vand.u32 2147483647, %v4233
    %v4258 = vand.u32 2147483647, %v4234
    %v4259 = vand.u32 2147483647, %v4235
    %v4260 = vsub.f32 0.0, %v4254
    %v4261 = vsub.f32 0.0, %v4255
    %v4262 = vsub.f32 0.0, %v4256
    %v4263 = vsub.f32 0.0, %v4257
    %v4264 = vsub.f32 0.0, %v4258
    %v4265 = vsub.f32 0.0, %v4259
    %v4266 = vmul.f32 %v4260, 1.442695
    %v4267 = vpow.pop %v4266
    %v4268 = vmul.f32 %v4261, 1.442695
    %v4269 = vpow.pop %v4268
    %v4270 = vmul.f32 %v4262, 1.442695
    %v4271 = vpow.pop %v4270
    %v4272 = vmul.f32 %v4263, 1.442695
    %v4273 = vpow.pop %v4272
    %v4274 = vmul.f32 %v4264, 1.442695
    %v4275 = vpow.pop %v4274
    %v4276 = vmul.f32 %v4265, 1.442695
    %v4277 = vpow.pop %v4276
    %v4278 = vadd.f32 %v4267, 1.0
    %v4279 = vlog2.pop %v4278
    %v4280 = vmul.f32 %v4279, 0.6931472
    %v4281 = vmul.f32 -0.5, %v4267
    %v4282 = vadd.f32 %v4281, 1.0
    %v4283 = vmul.f32 %v4282, %v4267
    %v4284 = vand.u32 2147483647, %v4267
    %vm4285 = vcmp.lt.f32.partialorder %v4284, 0.0004427343
    %v4286 = vsel %vm4285, %v4283, %v4280
    %v4287 = vadd.f32 %v4269, 1.0
    %v4288 = vlog2.pop %v4287
    %v4289 = vmul.f32 %v4288, 0.6931472
    %v4290 = vmul.f32 -0.5, %v4269
    %v4291 = vadd.f32 %v4290, 1.0
    %v4292 = vmul.f32 %v4291, %v4269
    %v4293 = vand.u32 2147483647, %v4269
    %vm4294 = vcmp.lt.f32.partialorder %v4293, 0.0004427343
    %v4295 = vsel %vm4294, %v4292, %v4289
    %v4296 = vadd.f32 %v4271, 1.0
    %v4297 = vlog2.pop %v4296
    %v4298 = vmul.f32 %v4297, 0.6931472
    %v4299 = vmul.f32 -0.5, %v4271
    %v4300 = vadd.f32 %v4299, 1.0
    %v4301 = vmul.f32 %v4300, %v4271
    %v4302 = vand.u32 2147483647, %v4271
    %vm4303 = vcmp.lt.f32.partialorder %v4302, 0.0004427343
    %v4304 = vsel %vm4303, %v4301, %v4298
    %v4305 = vadd.f32 %v4273, 1.0
    %v4306 = vlog2.pop %v4305
    %v4307 = vmul.f32 %v4306, 0.6931472
    %v4308 = vmul.f32 -0.5, %v4273
    %v4309 = vadd.f32 %v4308, 1.0
    %v4310 = vmul.f32 %v4309, %v4273
    %v4311 = vand.u32 2147483647, %v4273
    %vm4312 = vcmp.lt.f32.partialorder %v4311, 0.0004427343
    %v4313 = vsel %vm4312, %v4310, %v4307
    %v4314 = vadd.f32 %v4275, 1.0
    %v4315 = vlog2.pop %v4314
    %v4316 = vmul.f32 %v4315, 0.6931472
    %v4317 = vmul.f32 -0.5, %v4275
    %v4318 = vadd.f32 %v4317, 1.0
    %v4319 = vmul.f32 %v4318, %v4275
    %v4320 = vand.u32 2147483647, %v4275
    %vm4321 = vcmp.lt.f32.partialorder %v4320, 0.0004427343
    %v4322 = vsel %vm4321, %v4319, %v4316
    %v4323 = vadd.f32 %v4277, 1.0
    %v4324 = vlog2.pop %v4323
    %v4325 = vmul.f32 %v4324, 0.6931472
    %v4326 = vmul.f32 -0.5, %v4277
    %v4327 = vadd.f32 %v4326, 1.0
    %v4328 = vmul.f32 %v4327, %v4277
    %v4329 = vand.u32 2147483647, %v4277
    %vm4330 = vcmp.lt.f32.partialorder %v4329, 0.0004427343
    %v4331 = vsel %vm4330, %v4328, %v4325
    %v4332 = vadd.f32 %v4236, %v4286
    %v4333 = vadd.f32 %v4237, %v4295
    %v4334 = vadd.f32 %v4238, %v4304
    %v4335 = vadd.f32 %v4239, %v4313
    %v4336 = vadd.f32 %v4240, %v4322
    %v4337 = vadd.f32 %v4241, %v4331
    %v4338 = vsel %vm4242, %v4248, %v4332
    %v4339 = vsel %vm4243, %v4249, %v4333
    %v4340 = vsel %vm4244, %v4250, %v4334
    %v4341 = vsel %vm4245, %v4251, %v4335
    %v4342 = vsel %vm4246, %v4252, %v4336
    %v4343 = vsel %vm4247, %v4253, %v4337
    %v4344 = vsub.f32 0.0, %v4338
    %v4345 = vsub.f32 0.0, %v4339
    %v4346 = vsub.f32 0.0, %v4340
    %v4347 = vsub.f32 0.0, %v4341
    %v4348 = vsub.f32 0.0, %v4342
    %v4349 = vsub.f32 0.0, %v4343
    %v4350 = vmul.f32 %v4344, %v3810
    %v4351 = vmul.f32 %v4345, %v3811
    %v4352 = vmul.f32 %v4346, %v3812
    %v4353 = vmul.f32 %v4347, %v3813
    %v4354 = vmul.f32 %v4348, %v3814
    %v4355 = vmul.f32 %v4349, %v3815
    %v4356 = vsub.f32 0.0, %v4230
    %v4357 = vsub.f32 0.0, %v4231
    %v4358 = vsub.f32 0.0, %v4232
    %v4359 = vsub.f32 0.0, %v4233
    %v4360 = vsub.f32 0.0, %v4234
    %v4361 = vsub.f32 0.0, %v4235
    %v4362 = vmax.f32 %v4356, 0.0
    %v4363 = vmax.f32 %v4357, 0.0
    %v4364 = vmax.f32 %v4358, 0.0
    %v4365 = vmax.f32 %v4359, 0.0
    %v4366 = vmax.f32 %v4360, 0.0
    %v4367 = vmax.f32 %v4361, 0.0
    %vm4368 = vcmp.ne.f32.partialorder %v4356, %v4356
    %vm4369 = vcmp.ne.f32.partialorder %v4357, %v4357
    %vm4370 = vcmp.ne.f32.partialorder %v4358, %v4358
    %vm4371 = vcmp.ne.f32.partialorder %v4359, %v4359
    %vm4372 = vcmp.ne.f32.partialorder %v4360, %v4360
    %vm4373 = vcmp.ne.f32.partialorder %v4361, %v4361
    %v4374 = vadd.f32 %v4356, 0.0
    %v4375 = vadd.f32 %v4357, 0.0
    %v4376 = vadd.f32 %v4358, 0.0
    %v4377 = vadd.f32 %v4359, 0.0
    %v4378 = vadd.f32 %v4360, 0.0
    %v4379 = vadd.f32 %v4361, 0.0
    %v4380 = vand.u32 2147483647, %v4356
    %v4381 = vand.u32 2147483647, %v4357
    %v4382 = vand.u32 2147483647, %v4358
    %v4383 = vand.u32 2147483647, %v4359
    %v4384 = vand.u32 2147483647, %v4360
    %v4385 = vand.u32 2147483647, %v4361
    %v4386 = vsub.f32 0.0, %v4380
    %v4387 = vsub.f32 0.0, %v4381
    %v4388 = vsub.f32 0.0, %v4382
    %v4389 = vsub.f32 0.0, %v4383
    %v4390 = vsub.f32 0.0, %v4384
    %v4391 = vsub.f32 0.0, %v4385
    %v4392 = vmul.f32 %v4386, 1.442695
    %v4393 = vpow.pop %v4392
    %v4394 = vmul.f32 %v4387, 1.442695
    %v4395 = vpow.pop %v4394
    %v4396 = vmul.f32 %v4388, 1.442695
    %v4397 = vpow.pop %v4396
    %v4398 = vmul.f32 %v4389, 1.442695
    %v4399 = vpow.pop %v4398
    %v4400 = vmul.f32 %v4390, 1.442695
    %v4401 = vpow.pop %v4400
    %v4402 = vmul.f32 %v4391, 1.442695
    %v4403 = vpow.pop %v4402
    %v4404 = vadd.f32 %v4393, 1.0
    %v4405 = vlog2.pop %v4404
    %v4406 = vmul.f32 %v4405, 0.6931472
    %v4407 = vmul.f32 -0.5, %v4393
    %v4408 = vadd.f32 %v4407, 1.0
    %v4409 = vmul.f32 %v4408, %v4393
    %v4410 = vand.u32 2147483647, %v4393
    %vm4411 = vcmp.lt.f32.partialorder %v4410, 0.0004427343
    %v4412 = vsel %vm4411, %v4409, %v4406
    %v4413 = vadd.f32 %v4395, 1.0
    %v4414 = vlog2.pop %v4413
    %v4415 = vmul.f32 %v4414, 0.6931472
    %v4416 = vmul.f32 -0.5, %v4395
    %v4417 = vadd.f32 %v4416, 1.0
    %v4418 = vmul.f32 %v4417, %v4395
    %v4419 = vand.u32 2147483647, %v4395
    %vm4420 = vcmp.lt.f32.partialorder %v4419, 0.0004427343
    %v4421 = vsel %vm4420, %v4418, %v4415
    %v4422 = vadd.f32 %v4397, 1.0
    %v4423 = vlog2.pop %v4422
    %v4424 = vmul.f32 %v4423, 0.6931472
    %v4425 = vmul.f32 -0.5, %v4397
    %v4426 = vadd.f32 %v4425, 1.0
    %v4427 = vmul.f32 %v4426, %v4397
    %v4428 = vand.u32 2147483647, %v4397
    %vm4429 = vcmp.lt.f32.partialorder %v4428, 0.0004427343
    %v4430 = vsel %vm4429, %v4427, %v4424
    %v4431 = vadd.f32 %v4399, 1.0
    %v4432 = vlog2.pop %v4431
    %v4433 = vmul.f32 %v4432, 0.6931472
    %v4434 = vmul.f32 -0.5, %v4399
    %v4435 = vadd.f32 %v4434, 1.0
    %v4436 = vmul.f32 %v4435, %v4399
    %v4437 = vand.u32 2147483647, %v4399
    %vm4438 = vcmp.lt.f32.partialorder %v4437, 0.0004427343
    %v4439 = vsel %vm4438, %v4436, %v4433
    %v4440 = vadd.f32 %v4401, 1.0
    %v4441 = vlog2.pop %v4440
    %v4442 = vmul.f32 %v4441, 0.6931472
    %v4443 = vmul.f32 -0.5, %v4401
    %v4444 = vadd.f32 %v4443, 1.0
    %v4445 = vmul.f32 %v4444, %v4401
    %v4446 = vand.u32 2147483647, %v4401
    %vm4447 = vcmp.lt.f32.partialorder %v4446, 0.0004427343
    %v4448 = vsel %vm4447, %v4445, %v4442
    %v4449 = vadd.f32 %v4403, 1.0
    %v4450 = vlog2.pop %v4449
    %v4451 = vmul.f32 %v4450, 0.6931472
    %v4452 = vmul.f32 -0.5, %v4403
    %v4453 = vadd.f32 %v4452, 1.0
    %v4454 = vmul.f32 %v4453, %v4403
    %v4455 = vand.u32 2147483647, %v4403
    %vm4456 = vcmp.lt.f32.partialorder %v4455, 0.0004427343
    %v4457 = vsel %vm4456, %v4454, %v4451
    %v4458 = vadd.f32 %v4362, %v4412
    %v4459 = vadd.f32 %v4363, %v4421
    %v4460 = vadd.f32 %v4364, %v4430
    %v4461 = vadd.f32 %v4365, %v4439
    %v4462 = vadd.f32 %v4366, %v4448
    %v4463 = vadd.f32 %v4367, %v4457
    %v4464 = vsel %vm4368, %v4374, %v4458
    %v4465 = vsel %vm4369, %v4375, %v4459
    %v4466 = vsel %vm4370, %v4376, %v4460
    %v4467 = vsel %vm4371, %v4377, %v4461
    %v4468 = vsel %vm4372, %v4378, %v4462
    %v4469 = vsel %vm4373, %v4379, %v4463
    %v4470 = vsub.f32 0.0, %v4464
    %v4471 = vsub.f32 0.0, %v4465
    %v4472 = vsub.f32 0.0, %v4466
    %v4473 = vsub.f32 0.0, %v4467
    %v4474 = vsub.f32 0.0, %v4468
    %v4475 = vsub.f32 0.0, %v4469
    %v4476 = vmul.f32 %v4470, %v4224
    %v4477 = vmul.f32 %v4471, %v4225
    %v4478 = vmul.f32 %v4472, %v4226
    %v4479 = vmul.f32 %v4473, %v4227
    %v4480 = vmul.f32 %v4474, %v4228
    %v4481 = vmul.f32 %v4475, %v4229
    %v4482 = vadd.f32 %v4350, %v4476
    %v4483 = vadd.f32 %v4351, %v4477
    %v4484 = vadd.f32 %v4352, %v4478
    %v4485 = vadd.f32 %v4353, %v4479
    %v4486 = vadd.f32 %v4354, %v4480
    %v4487 = vadd.f32 %v4355, %v4481
    %v4488 = vadd.f32 %v4482, %v4483
    %v4489 = vadd.f32 %v4488, %v4484
    %v4490 = vadd.f32 %v4489, %v4485
    %v4491 = vadd.f32 %v4490, %v4486
    %v4492 = vadd.f32 %v4491, %v4487
    %4493 = vadd.xlane.f32.xlu0 %v4492
    %v4494 = vpop.xlane.xlu0 %4493
    %v4495 = vrot.slane %v4494, 4
    %v4496 = vadd.f32 %v4494, %v4495
    %v4497 = vrot.slane %v4496, 2
    %v4498 = vadd.f32 %v4496, %v4497
    %v4499 = vrot.slane %v4498, 1
    %v4500 = vadd.f32 %v4498, %v4499
    %s4501 = vtos %v4500
    %s4502 = ssub.f32 0.0, %s4501
    %v4503 = vstv %s4502
    %vm4504 = vcmask 0
    %4505 = vst.msk [vmem:[#allocation18] sm:$0x1] %vm4504, %v4503
    // Predicated region
    $region82: #{tpu_custom_call.1} parent=1 // pred_check
      _
    $region83: #{tpu_custom_call.1} parent=1 // pred_check_branch
      %4507 = sbr.rel (0) target = $region85
    $region84: #{tpu_custom_call.1} parent=1 // pred_region
      %s4509 = ssub.s32 16, 16
      %4510 = vsyncadd [#allocation8], %s4509
      %s4512 = sshll.u32 [#allocation18], 4
      %s4513 = int_to_ptr.vmem [resolvable:$true] %s4512
      %4515 = dma.vmem_to_hbm [thread:$0]  %s4513, 16, %s13, [#allocation8]
    $region85: #{tpu_custom_call.1} parent=1 // pred_fallthru
      _
    // Predicated region
    $region86: #{tpu_custom_call.1} parent=1 // pred_check
      _
    $region87: #{tpu_custom_call.1} parent=1 // pred_check_branch
      %4517 = sbr.rel (0) target = $region89
    $region88: #{tpu_custom_call.1} parent=1 // pred_region
      %4518 = dma.done [#allocation8], 16
    $region89: #{tpu_custom_call.1} parent=1 // pred_fallthru
      _
    %4519 = vsyncpa [#allocation7], 1
    %4520 = vsyncpa [#allocation10], 1
    %4521 = vsyncpa [#allocation13], 1
    %4522 = vsyncpa [#allocation16], 1
    %4523 = vsyncpa [#allocation8], 1

</llo_original>
